<compile_context>
chip_gen: v6e
topology: v6e:2x2x1
jax: 0.10.0
libtpu: 0.0.40
codegen_flags: <defaults>
</compile_context>

<pallas_src>
import jax
import jax.numpy as jnp
import numpy as np
from jax.experimental import pallas as pl
from jax.experimental.pallas import tpu as pltpu

_EPS = 1e-5  # PyTorch InstanceNorm2d default


def _conv_in_block(x, w_mat, gamma, beta, xp_ref, p_ref, *, relu):
    """One ConvBlock: ReflectionPad(1) -> 3x3 conv -> InstanceNorm(affine) [-> ReLU].

    x:      (H, W, C) f32 value (resident in VMEM/vregs)
    w_mat:  (9*C, Cout) f32 value, rows ordered (kh, kw, cin)
    gamma, beta: (1, Cout) f32 values
    xp_ref: VMEM scratch (H+2, W+2, C)   -- reflection-padded input
    p_ref:  VMEM scratch (H, W, 9*C)     -- im2col patch tensor
    """
    H, W, C = x.shape

    # ---- ReflectionPad2d(1) into VMEM scratch (ref slice stores only) ----
    xp_ref[1:H + 1, 1:W + 1, :] = x
    xp_ref[0:1, 1:W + 1, :] = x[1:2]                 # top row    <- row 1
    xp_ref[H + 1:H + 2, 1:W + 1, :] = x[H - 2:H - 1]  # bottom row <- row H-2
    # columns use the already-written (row-padded) scratch, corners included.
    xp_ref[:, 0:1, :] = xp_ref[:, 2:3, :]            # left col  <- col 1
    xp_ref[:, W + 1:W + 2, :] = xp_ref[:, W - 1:W, :]  # right col <- col W-2

    # ---- im2col: build (H, W, 9C) patch tensor ----
    # Only 3 unaligned (sublane) column-shifted loads; the kh shifts are
    # slices on the free major axis.
    for kw in range(3):
        xw = xp_ref[:, kw:kw + W, :]                 # (H+2, W, C)
        for kh in range(3):
            idx = kh * 3 + kw                        # matches w.reshape(9C, C)
            p_ref[:, :, idx * C:(idx + 1) * C] = xw[kh:kh + H]

    # ---- single MXU contraction, K = 9*C ----
    acc = jax.lax.dot_general(
        p_ref[...], w_mat,
        dimension_numbers=(((2,), (0,)), ((), ())),
        preferred_element_type=jnp.float32)          # (H, W, Cout)

    # Conv bias intentionally omitted: InstanceNorm subtracts the per-channel
    # mean, so a constant per-channel bias cannot affect the output.

    # ---- one-pass InstanceNorm stats + fused affine ----
    inv_n = 1.0 / float(H * W)
    s1 = jnp.sum(acc, axis=(0, 1), keepdims=True)            # (1,1,Cout)
    s2 = jnp.sum(acc * acc, axis=(0, 1), keepdims=True)      # (1,1,Cout)
    mean = s1 * inv_n
    var = jnp.maximum(s2 * inv_n - mean * mean, 0.0)          # biased variance
    scale = gamma * jax.lax.rsqrt(var + _EPS)                 # (1,1,Cout)
    shift = beta - mean * scale
    y = acc * scale + shift
    if relu:
        y = jnp.maximum(y, 0.0)
    return y


def _residual_block_kernel(x_ref, w_ref, aff_ref, out_ref, xp_ref, p_ref):
    """Fused ResidualBlock for one batch element.

    x_ref:   (1, H, W, C)        input image
    w_ref:   (2, 9C, C)          [w1, w2] reshaped im2col weights
    aff_ref: (4, C)              [gamma1, beta1, gamma2, beta2]
    out_ref: (1, H, W*C)         lane-dense output slab
    """
    H, W, C = x_ref.shape[1], x_ref.shape[2], x_ref.shape[3]
    x = x_ref[0].astype(jnp.float32)                          # (H, W, C)

    h = _conv_in_block(x, w_ref[0], aff_ref[0:1, :], aff_ref[1:2, :],
                       xp_ref, p_ref, relu=True)
    y = _conv_in_block(h, w_ref[1], aff_ref[2:3, :], aff_ref[3:4, :],
                       xp_ref, p_ref, relu=False)
    y = y + x                                                 # residual add
    out_ref[0] = y.reshape(H, W * C).astype(out_ref.dtype)


def residual_block_pallas(x_nchw, params):
    """Pallas implementation of ResidualBlock.forward. Input/output NCHW."""
    N, C, H, W = x_nchw.shape
    x = jnp.transpose(x_nchw, (0, 2, 3, 1))                   # -> NHWC

    # Consolidate the small operands: 2 im2col weight matrices, 4 affine rows.
    w_mat = jnp.stack([params["w1"].reshape(9 * C, C),
                       params["w2"].reshape(9 * C, C)], axis=0)   # (2, 9C, C)
    affine = jnp.stack([params["g1"], params["be1"],
                        params["g2"], params["be2"]], axis=0)     # (4, C)
    # (conv biases b1/b2 are not passed: cancelled exactly by InstanceNorm.)

    flops = 2 * 2 * 9 * H * W * C * C * N                    # two 3x3 convs
    bytes_accessed = 4 * (2 * N * H * W * C + 2 * 9 * C * C + 4 * C)

    out_flat = pl.pallas_call(
        _residual_block_kernel,
        out_shape=jax.ShapeDtypeStruct((N, H, W * C), x_nchw.dtype),
        grid_spec=pltpu.PrefetchScalarGridSpec(
            num_scalar_prefetch=0,
            grid=(N,),
            in_specs=[
                pl.BlockSpec((1, H, W, C), lambda n: (n, 0, 0, 0)),
                pl.BlockSpec((2, 9 * C, C), lambda n: (0, 0, 0)),
                pl.BlockSpec((4, C), lambda n: (0, 0)),
            ],
            out_specs=pl.BlockSpec((1, H, W * C), lambda n: (n, 0, 0)),
            scratch_shapes=[
                pltpu.VMEM((H + 2, W + 2, C), jnp.float32),   # reflect-padded
                pltpu.VMEM((H, W, 9 * C), jnp.float32),       # im2col patches
            ],
        ),
        compiler_params=pltpu.CompilerParams(
            dimension_semantics=("parallel",)),
        cost_estimate=pl.CostEstimate(
            flops=flops, transcendentals=2 * N * C,
            bytes_accessed=bytes_accessed),
    )(x, w_mat, affine)

    out = out_flat.reshape(N, H, W, C)
    return jnp.transpose(out, (0, 3, 1, 2))                   # -> NCHW


# ----------------------------- pure-JAX reference -----------------------------
def _conv_block_ref(x_nhwc, w, b, gamma, beta, relu):
    xpad = jnp.pad(x_nhwc, ((0, 0), (1, 1), (1, 1), (0, 0)), mode="reflect")
    y = jax.lax.conv_general_dilated(
        xpad, w, window_strides=(1, 1), padding="VALID",
        dimension_numbers=("NHWC", "HWIO", "NHWC"))
    y = y + b[None, None, None, :]
    mean = jnp.mean(y, axis=(1, 2), keepdims=True)
    var = jnp.mean((y - mean) ** 2, axis=(1, 2), keepdims=True)
    y = (y - mean) * jax.lax.rsqrt(var + _EPS)
    y = y * gamma[None, None, None, :] + beta[None, None, None, :]
    if relu:
        y = jnp.maximum(y, 0.0)
    return y


def residual_block_ref(x_nchw, p):
    x = jnp.transpose(x_nchw, (0, 2, 3, 1))
    h = _conv_block_ref(x, p["w1"], p["b1"], p["g1"], p["be1"], relu=True)
    y = _conv_block_ref(h, p["w2"], p["b2"], p["g2"], p["be2"], relu=False) + x
    return jnp.transpose(y, (0, 3, 1, 2))


# ----------------------------------- main ------------------------------------
if __name__ == "__main__":
    N, C, H, W = 2, 4, 16, 16
    key = jax.random.PRNGKey(0)
    kx, k1, k2, k3, k4, k5, k6, k7, k8 = jax.random.split(key, 9)

    x = jax.random.normal(kx, (N, C, H, W), jnp.float32)

    # Conv weights in HWIO (3,3,Cin,Cout); deterministic synthetic init.
    # Biases are kept in the params/reference to demonstrate that dropping the
    # bias inside the kernel (cancelled by InstanceNorm) preserves the output.
    scale = 1.0 / np.sqrt(C * 9)
    params = {
        "w1": jax.random.normal(k1, (3, 3, C, C), jnp.float32) * scale,
        "b1": jax.random.normal(k2, (C,), jnp.float32) * 0.1,
        "g1": 1.0 + 0.1 * jax.random.normal(k3, (C,), jnp.float32),
        "be1": 0.1 * jax.random.normal(k4, (C,), jnp.float32),
        "w2": jax.random.normal(k5, (3, 3, C, C), jnp.float32) * scale,
        "b2": jax.random.normal(k6, (C,), jnp.float32) * 0.1,
        "g2": 1.0 + 0.1 * jax.random.normal(k7, (C,), jnp.float32),
        "be2": 0.1 * jax.random.normal(k8, (C,), jnp.float32),
    }

    out = jax.jit(residual_block_pallas)(x, params)
    out = jax.block_until_ready(out)

    ref = jax.block_until_ready(residual_block_ref(x, params))
    np.testing.assert_allclose(np.asarray(out), np.asarray(ref),
                               rtol=2e-4, atol=2e-4)
    assert out.shape == (N, C, H, W)
    print("KERNEL_OK")
</pallas_src>

<mosaic_0001>
module attributes {stable_mosaic.version = 11 : i64} {
  func.func @_residual_block_kernel(%arg0: i32, %arg1: memref<1x16x16x4xf32, #tpu.memory_space<vmem>>, %arg2: memref<2x36x4xf32, #tpu.memory_space<vmem>>, %arg3: memref<4x4xf32, #tpu.memory_space<vmem>>, %arg4: memref<1x16x64xf32, #tpu.memory_space<vmem>>, %arg5: memref<18x18x4xf32, #tpu.memory_space<vmem>>, %arg6: memref<16x16x36xf32, #tpu.memory_space<vmem>>) attributes {dimension_semantics = [#tpu.dimension_semantics<parallel>], iteration_bounds = array<i64: 2>, scalar_prefetch = 0 : i64, scratch_operands = 2 : i64, tpu.core_type = #tpu.core_type<tc>, window_params = [{transform_indices = @transform_0, window_bounds = array<i64: 1, 16, 16, 4>}, {pipeline_mode = #tpu.pipeline_mode<synchronous>, transform_indices = @transform_1, window_bounds = array<i64: 2, 36, 4>}, {pipeline_mode = #tpu.pipeline_mode<synchronous>, transform_indices = @transform_2, window_bounds = array<i64: 4, 4>}, {transform_indices = @transform_3, window_bounds = array<i64: 1, 16, 64>}]} {
    %c0 = arith.constant 0 : index
    %c0_0 = arith.constant 0 : index
    %c0_1 = arith.constant 0 : index
    %c0_2 = arith.constant 0 : index
    %0 = vector.load %arg1[%c0, %c0_0, %c0_1, %c0_2] : memref<1x16x16x4xf32, #tpu.memory_space<vmem>>, vector<1x16x16x4xf32>
    %1 = vector.shape_cast %0 : vector<1x16x16x4xf32> to vector<16x16x4xf32>
    %c0_3 = arith.constant 0 : index
    %c0_4 = arith.constant 0 : index
    %c0_5 = arith.constant 0 : index
    %2 = vector.load %arg2[%c0_3, %c0_4, %c0_5] : memref<2x36x4xf32, #tpu.memory_space<vmem>>, vector<1x36x4xf32>
    %3 = vector.shape_cast %2 : vector<1x36x4xf32> to vector<36x4xf32>
    %c0_6 = arith.constant 0 : index
    %c0_7 = arith.constant 0 : index
    %4 = vector.load %arg3[%c0_6, %c0_7] : memref<4x4xf32, #tpu.memory_space<vmem>>, vector<1x4xf32>
    %c1 = arith.constant 1 : index
    %c0_8 = arith.constant 0 : index
    %5 = vector.load %arg3[%c1, %c0_8] : memref<4x4xf32, #tpu.memory_space<vmem>>, vector<1x4xf32>
    %c1_9 = arith.constant 1 : index
    %c1_10 = arith.constant 1 : index
    %c0_11 = arith.constant 0 : index
    %6 = vector.load %arg5[%c1_9, %c1_10, %c0_11] : memref<18x18x4xf32, #tpu.memory_space<vmem>>, vector<16x16x4xf32>
    tpu.vector_store %arg5[%c1_9, %c1_10, %c0_11], %1 {strides = array<i32>} : memref<18x18x4xf32, #tpu.memory_space<vmem>>, vector<16x16x4xf32>,
    %7 = vector.extract_strided_slice %1 {offsets = [1, 0, 0], sizes = [1, 16, 4], strides = [1, 1, 1]} : vector<16x16x4xf32> to vector<1x16x4xf32>
    %c0_12 = arith.constant 0 : index
    %c1_13 = arith.constant 1 : index
    %c0_14 = arith.constant 0 : index
    %8 = vector.load %arg5[%c0_12, %c1_13, %c0_14] : memref<18x18x4xf32, #tpu.memory_space<vmem>>, vector<1x16x4xf32>
    tpu.vector_store %arg5[%c0_12, %c1_13, %c0_14], %7 {strides = array<i32>} : memref<18x18x4xf32, #tpu.memory_space<vmem>>, vector<1x16x4xf32>,
    %9 = vector.extract_strided_slice %1 {offsets = [14, 0, 0], sizes = [1, 16, 4], strides = [1, 1, 1]} : vector<16x16x4xf32> to vector<1x16x4xf32>
    %c17 = arith.constant 17 : index
    %c1_15 = arith.constant 1 : index
    %c0_16 = arith.constant 0 : index
    %10 = vector.load %arg5[%c17, %c1_15, %c0_16] : memref<18x18x4xf32, #tpu.memory_space<vmem>>, vector<1x16x4xf32>
    tpu.vector_store %arg5[%c17, %c1_15, %c0_16], %9 {strides = array<i32>} : memref<18x18x4xf32, #tpu.memory_space<vmem>>, vector<1x16x4xf32>,
    %c0_17 = arith.constant 0 : index
    %c2 = arith.constant 2 : index
    %c0_18 = arith.constant 0 : index
    %11 = vector.load %arg5[%c0_17, %c2, %c0_18] : memref<18x18x4xf32, #tpu.memory_space<vmem>>, vector<18x1x4xf32>
    %c0_19 = arith.constant 0 : index
    %c0_20 = arith.constant 0 : index
    %c0_21 = arith.constant 0 : index
    %12 = vector.load %arg5[%c0_19, %c0_20, %c0_21] : memref<18x18x4xf32, #tpu.memory_space<vmem>>, vector<18x1x4xf32>
    tpu.vector_store %arg5[%c0_19, %c0_20, %c0_21], %11 {strides = array<i32>} : memref<18x18x4xf32, #tpu.memory_space<vmem>>, vector<18x1x4xf32>,
    %c0_22 = arith.constant 0 : index
    %c15 = arith.constant 15 : index
    %c0_23 = arith.constant 0 : index
    %13 = vector.load %arg5[%c0_22, %c15, %c0_23] : memref<18x18x4xf32, #tpu.memory_space<vmem>>, vector<18x1x4xf32>
    %c0_24 = arith.constant 0 : index
    %c17_25 = arith.constant 17 : index
    %c0_26 = arith.constant 0 : index
    %14 = vector.load %arg5[%c0_24, %c17_25, %c0_26] : memref<18x18x4xf32, #tpu.memory_space<vmem>>, vector<18x1x4xf32>
    tpu.vector_store %arg5[%c0_24, %c17_25, %c0_26], %13 {strides = array<i32>} : memref<18x18x4xf32, #tpu.memory_space<vmem>>, vector<18x1x4xf32>,
    %c0_27 = arith.constant 0 : index
    %c0_28 = arith.constant 0 : index
    %c0_29 = arith.constant 0 : index
    %15 = vector.load %arg5[%c0_27, %c0_28, %c0_29] : memref<18x18x4xf32, #tpu.memory_space<vmem>>, vector<18x16x4xf32>
    %16 = vector.extract_strided_slice %15 {offsets = [0, 0, 0], sizes = [16, 16, 4], strides = [1, 1, 1]} : vector<18x16x4xf32> to vector<16x16x4xf32>
    %c0_30 = arith.constant 0 : index
    %c0_31 = arith.constant 0 : index
    %c0_32 = arith.constant 0 : index
    %17 = vector.load %arg6[%c0_30, %c0_31, %c0_32] : memref<16x16x36xf32, #tpu.memory_space<vmem>>, vector<16x16x4xf32>
    tpu.vector_store %arg6[%c0_30, %c0_31, %c0_32], %16 {strides = array<i32>} : memref<16x16x36xf32, #tpu.memory_space<vmem>>, vector<16x16x4xf32>,
    %18 = vector.extract_strided_slice %15 {offsets = [1, 0, 0], sizes = [16, 16, 4], strides = [1, 1, 1]} : vector<18x16x4xf32> to vector<16x16x4xf32>
    %c0_33 = arith.constant 0 : index
    %c0_34 = arith.constant 0 : index
    %c12 = arith.constant 12 : index
    %19 = vector.load %arg6[%c0_33, %c0_34, %c12] : memref<16x16x36xf32, #tpu.memory_space<vmem>>, vector<16x16x4xf32>
    tpu.vector_store %arg6[%c0_33, %c0_34, %c12], %18 {strides = array<i32>} : memref<16x16x36xf32, #tpu.memory_space<vmem>>, vector<16x16x4xf32>,
    %20 = vector.extract_strided_slice %15 {offsets = [2, 0, 0], sizes = [16, 16, 4], strides = [1, 1, 1]} : vector<18x16x4xf32> to vector<16x16x4xf32>
    %c0_35 = arith.constant 0 : index
    %c0_36 = arith.constant 0 : index
    %c24 = arith.constant 24 : index
    %21 = vector.load %arg6[%c0_35, %c0_36, %c24] : memref<16x16x36xf32, #tpu.memory_space<vmem>>, vector<16x16x4xf32>
    tpu.vector_store %arg6[%c0_35, %c0_36, %c24], %20 {strides = array<i32>} : memref<16x16x36xf32, #tpu.memory_space<vmem>>, vector<16x16x4xf32>,
    %c0_37 = arith.constant 0 : index
    %c1_38 = arith.constant 1 : index
    %c0_39 = arith.constant 0 : index
    %22 = vector.load %arg5[%c0_37, %c1_38, %c0_39] : memref<18x18x4xf32, #tpu.memory_space<vmem>>, vector<18x16x4xf32>
    %23 = vector.extract_strided_slice %22 {offsets = [0, 0, 0], sizes = [16, 16, 4], strides = [1, 1, 1]} : vector<18x16x4xf32> to vector<16x16x4xf32>
    %c0_40 = arith.constant 0 : index
    %c0_41 = arith.constant 0 : index
    %c4 = arith.constant 4 : index
    %24 = vector.load %arg6[%c0_40, %c0_41, %c4] : memref<16x16x36xf32, #tpu.memory_space<vmem>>, vector<16x16x4xf32>
    tpu.vector_store %arg6[%c0_40, %c0_41, %c4], %23 {strides = array<i32>} : memref<16x16x36xf32, #tpu.memory_space<vmem>>, vector<16x16x4xf32>,
    %25 = vector.extract_strided_slice %22 {offsets = [1, 0, 0], sizes = [16, 16, 4], strides = [1, 1, 1]} : vector<18x16x4xf32> to vector<16x16x4xf32>
    %c0_42 = arith.constant 0 : index
    %c0_43 = arith.constant 0 : index
    %c16 = arith.constant 16 : index
    %26 = vector.load %arg6[%c0_42, %c0_43, %c16] : memref<16x16x36xf32, #tpu.memory_space<vmem>>, vector<16x16x4xf32>
    tpu.vector_store %arg6[%c0_42, %c0_43, %c16], %25 {strides = array<i32>} : memref<16x16x36xf32, #tpu.memory_space<vmem>>, vector<16x16x4xf32>,
    %27 = vector.extract_strided_slice %22 {offsets = [2, 0, 0], sizes = [16, 16, 4], strides = [1, 1, 1]} : vector<18x16x4xf32> to vector<16x16x4xf32>
    %c0_44 = arith.constant 0 : index
    %c0_45 = arith.constant 0 : index
    %c28 = arith.constant 28 : index
    %28 = vector.load %arg6[%c0_44, %c0_45, %c28] : memref<16x16x36xf32, #tpu.memory_space<vmem>>, vector<16x16x4xf32>
    tpu.vector_store %arg6[%c0_44, %c0_45, %c28], %27 {strides = array<i32>} : memref<16x16x36xf32, #tpu.memory_space<vmem>>, vector<16x16x4xf32>,
    %c0_46 = arith.constant 0 : index
    %c2_47 = arith.constant 2 : index
    %c0_48 = arith.constant 0 : index
    %29 = vector.load %arg5[%c0_46, %c2_47, %c0_48] : memref<18x18x4xf32, #tpu.memory_space<vmem>>, vector<18x16x4xf32>
    %30 = vector.extract_strided_slice %29 {offsets = [0, 0, 0], sizes = [16, 16, 4], strides = [1, 1, 1]} : vector<18x16x4xf32> to vector<16x16x4xf32>
    %c0_49 = arith.constant 0 : index
    %c0_50 = arith.constant 0 : index
    %c8 = arith.constant 8 : index
    %31 = vector.load %arg6[%c0_49, %c0_50, %c8] : memref<16x16x36xf32, #tpu.memory_space<vmem>>, vector<16x16x4xf32>
    tpu.vector_store %arg6[%c0_49, %c0_50, %c8], %30 {strides = array<i32>} : memref<16x16x36xf32, #tpu.memory_space<vmem>>, vector<16x16x4xf32>,
    %32 = vector.extract_strided_slice %29 {offsets = [1, 0, 0], sizes = [16, 16, 4], strides = [1, 1, 1]} : vector<18x16x4xf32> to vector<16x16x4xf32>
    %c0_51 = arith.constant 0 : index
    %c0_52 = arith.constant 0 : index
    %c20 = arith.constant 20 : index
    %33 = vector.load %arg6[%c0_51, %c0_52, %c20] : memref<16x16x36xf32, #tpu.memory_space<vmem>>, vector<16x16x4xf32>
    tpu.vector_store %arg6[%c0_51, %c0_52, %c20], %32 {strides = array<i32>} : memref<16x16x36xf32, #tpu.memory_space<vmem>>, vector<16x16x4xf32>,
    %34 = vector.extract_strided_slice %29 {offsets = [2, 0, 0], sizes = [16, 16, 4], strides = [1, 1, 1]} : vector<18x16x4xf32> to vector<16x16x4xf32>
    %c0_53 = arith.constant 0 : index
    %c0_54 = arith.constant 0 : index
    %c32 = arith.constant 32 : index
    %35 = vector.load %arg6[%c0_53, %c0_54, %c32] : memref<16x16x36xf32, #tpu.memory_space<vmem>>, vector<16x16x4xf32>
    tpu.vector_store %arg6[%c0_53, %c0_54, %c32], %34 {strides = array<i32>} : memref<16x16x36xf32, #tpu.memory_space<vmem>>, vector<16x16x4xf32>,
    %c0_55 = arith.constant 0 : index
    %c0_56 = arith.constant 0 : index
    %c0_57 = arith.constant 0 : index
    %36 = vector.load %arg6[%c0_55, %c0_56, %c0_57] : memref<16x16x36xf32, #tpu.memory_space<vmem>>, vector<16x16x36xf32>
    %cst = arith.constant dense<0.000000e+00> : vector<16x16x4xf32>
    %37 = tpu.matmul %36, %3, %cst {dimension_numbers = #tpu.dot_dimension_numbers<[2], [0], [0, 1], [1], [0, 0, 0, 1, 1, 1], [], []>} : vector<16x16x36xf32>, vector<36x4xf32>, vector<16x16x4xf32> -> vector<16x16x4xf32>
    %cst_58 = arith.constant dense<0.000000e+00> : vector<4xf32>
    %38 = vector.multi_reduction <add>, %37, %cst_58 [0, 1] : vector<16x16x4xf32> to vector<4xf32>
    %39 = vector.shape_cast %38 : vector<4xf32> to vector<1x1x4xf32>
    %40 = arith.mulf %37, %37 : vector<16x16x4xf32>
    %cst_59 = arith.constant dense<0.000000e+00> : vector<4xf32>
    %41 = vector.multi_reduction <add>, %40, %cst_59 [0, 1] : vector<16x16x4xf32> to vector<4xf32>
    %42 = vector.shape_cast %41 : vector<4xf32> to vector<1x1x4xf32>
    %cst_60 = arith.constant 3.906250e-03 : f32
    %43 = vector.broadcast %cst_60 : f32 to vector<1x1x4xf32>
    %44 = arith.mulf %39, %43 : vector<1x1x4xf32>
    %cst_61 = arith.constant 3.906250e-03 : f32
    %45 = vector.broadcast %cst_61 : f32 to vector<1x1x4xf32>
    %46 = arith.mulf %42, %45 : vector<1x1x4xf32>
    %47 = arith.mulf %44, %44 : vector<1x1x4xf32>
    %48 = arith.subf %46, %47 : vector<1x1x4xf32>
    %cst_62 = arith.constant 0.000000e+00 : f32
    %49 = vector.broadcast %cst_62 : f32 to vector<1x1x4xf32>
    %50 = arith.maximumf %48, %49 : vector<1x1x4xf32>
    %cst_63 = arith.constant 9.99999974E-6 : f32
    %51 = vector.broadcast %cst_63 : f32 to vector<1x1x4xf32>
    %52 = arith.addf %50, %51 : vector<1x1x4xf32>
    %53 = math.rsqrt %52 : vector<1x1x4xf32>
    %54 = vector.shape_cast %4 : vector<1x4xf32> to vector<1x1x4xf32>
    %55 = arith.mulf %54, %53 : vector<1x1x4xf32>
    %56 = arith.mulf %44, %55 : vector<1x1x4xf32>
    %57 = vector.shape_cast %5 : vector<1x4xf32> to vector<1x1x4xf32>
    %58 = arith.subf %57, %56 : vector<1x1x4xf32>
    %59 = vector.broadcast %55 : vector<1x1x4xf32> to vector<16x16x4xf32>
    %60 = arith.mulf %37, %59 : vector<16x16x4xf32>
    %61 = vector.broadcast %58 : vector<1x1x4xf32> to vector<16x16x4xf32>
    %62 = arith.addf %60, %61 : vector<16x16x4xf32>
    %cst_64 = arith.constant 0.000000e+00 : f32
    %63 = vector.broadcast %cst_64 : f32 to vector<16x16x4xf32>
    %64 = arith.maximumf %62, %63 : vector<16x16x4xf32>
    %c1_65 = arith.constant 1 : index
    %c0_66 = arith.constant 0 : index
    %c0_67 = arith.constant 0 : index
    %65 = vector.load %arg2[%c1_65, %c0_66, %c0_67] : memref<2x36x4xf32, #tpu.memory_space<vmem>>, vector<1x36x4xf32>
    %66 = vector.shape_cast %65 : vector<1x36x4xf32> to vector<36x4xf32>
    %c2_68 = arith.constant 2 : index
    %c0_69 = arith.constant 0 : index
    %67 = vector.load %arg3[%c2_68, %c0_69] : memref<4x4xf32, #tpu.memory_space<vmem>>, vector<1x4xf32>
    %c3 = arith.constant 3 : index
    %c0_70 = arith.constant 0 : index
    %68 = vector.load %arg3[%c3, %c0_70] : memref<4x4xf32, #tpu.memory_space<vmem>>, vector<1x4xf32>
    %c1_71 = arith.constant 1 : index
    %c1_72 = arith.constant 1 : index
    %c0_73 = arith.constant 0 : index
    %69 = vector.load %arg5[%c1_71, %c1_72, %c0_73] : memref<18x18x4xf32, #tpu.memory_space<vmem>>, vector<16x16x4xf32>
    tpu.vector_store %arg5[%c1_71, %c1_72, %c0_73], %64 {strides = array<i32>} : memref<18x18x4xf32, #tpu.memory_space<vmem>>, vector<16x16x4xf32>,
    %70 = vector.extract_strided_slice %64 {offsets = [1, 0, 0], sizes = [1, 16, 4], strides = [1, 1, 1]} : vector<16x16x4xf32> to vector<1x16x4xf32>
    %c0_74 = arith.constant 0 : index
    %c1_75 = arith.constant 1 : index
    %c0_76 = arith.constant 0 : index
    %71 = vector.load %arg5[%c0_74, %c1_75, %c0_76] : memref<18x18x4xf32, #tpu.memory_space<vmem>>, vector<1x16x4xf32>
    tpu.vector_store %arg5[%c0_74, %c1_75, %c0_76], %70 {strides = array<i32>} : memref<18x18x4xf32, #tpu.memory_space<vmem>>, vector<1x16x4xf32>,
    %72 = vector.extract_strided_slice %64 {offsets = [14, 0, 0], sizes = [1, 16, 4], strides = [1, 1, 1]} : vector<16x16x4xf32> to vector<1x16x4xf32>
    %c17_77 = arith.constant 17 : index
    %c1_78 = arith.constant 1 : index
    %c0_79 = arith.constant 0 : index
    %73 = vector.load %arg5[%c17_77, %c1_78, %c0_79] : memref<18x18x4xf32, #tpu.memory_space<vmem>>, vector<1x16x4xf32>
    tpu.vector_store %arg5[%c17_77, %c1_78, %c0_79], %72 {strides = array<i32>} : memref<18x18x4xf32, #tpu.memory_space<vmem>>, vector<1x16x4xf32>,
    %c0_80 = arith.constant 0 : index
    %c2_81 = arith.constant 2 : index
    %c0_82 = arith.constant 0 : index
    %74 = vector.load %arg5[%c0_80, %c2_81, %c0_82] : memref<18x18x4xf32, #tpu.memory_space<vmem>>, vector<18x1x4xf32>
    %c0_83 = arith.constant 0 : index
    %c0_84 = arith.constant 0 : index
    %c0_85 = arith.constant 0 : index
    %75 = vector.load %arg5[%c0_83, %c0_84, %c0_85] : memref<18x18x4xf32, #tpu.memory_space<vmem>>, vector<18x1x4xf32>
    tpu.vector_store %arg5[%c0_83, %c0_84, %c0_85], %74 {strides = array<i32>} : memref<18x18x4xf32, #tpu.memory_space<vmem>>, vector<18x1x4xf32>,
    %c0_86 = arith.constant 0 : index
    %c15_87 = arith.constant 15 : index
    %c0_88 = arith.constant 0 : index
    %76 = vector.load %arg5[%c0_86, %c15_87, %c0_88] : memref<18x18x4xf32, #tpu.memory_space<vmem>>, vector<18x1x4xf32>
    %c0_89 = arith.constant 0 : index
    %c17_90 = arith.constant 17 : index
    %c0_91 = arith.constant 0 : index
    %77 = vector.load %arg5[%c0_89, %c17_90, %c0_91] : memref<18x18x4xf32, #tpu.memory_space<vmem>>, vector<18x1x4xf32>
    tpu.vector_store %arg5[%c0_89, %c17_90, %c0_91], %76 {strides = array<i32>} : memref<18x18x4xf32, #tpu.memory_space<vmem>>, vector<18x1x4xf32>,
    %c0_92 = arith.constant 0 : index
    %c0_93 = arith.constant 0 : index
    %c0_94 = arith.constant 0 : index
    %78 = vector.load %arg5[%c0_92, %c0_93, %c0_94] : memref<18x18x4xf32, #tpu.memory_space<vmem>>, vector<18x16x4xf32>
    %79 = vector.extract_strided_slice %78 {offsets = [0, 0, 0], sizes = [16, 16, 4], strides = [1, 1, 1]} : vector<18x16x4xf32> to vector<16x16x4xf32>
    %c0_95 = arith.constant 0 : index
    %c0_96 = arith.constant 0 : index
    %c0_97 = arith.constant 0 : index
    %80 = vector.load %arg6[%c0_95, %c0_96, %c0_97] : memref<16x16x36xf32, #tpu.memory_space<vmem>>, vector<16x16x4xf32>
    tpu.vector_store %arg6[%c0_95, %c0_96, %c0_97], %79 {strides = array<i32>} : memref<16x16x36xf32, #tpu.memory_space<vmem>>, vector<16x16x4xf32>,
    %81 = vector.extract_strided_slice %78 {offsets = [1, 0, 0], sizes = [16, 16, 4], strides = [1, 1, 1]} : vector<18x16x4xf32> to vector<16x16x4xf32>
    %c0_98 = arith.constant 0 : index
    %c0_99 = arith.constant 0 : index
    %c12_100 = arith.constant 12 : index
    %82 = vector.load %arg6[%c0_98, %c0_99, %c12_100] : memref<16x16x36xf32, #tpu.memory_space<vmem>>, vector<16x16x4xf32>
    tpu.vector_store %arg6[%c0_98, %c0_99, %c12_100], %81 {strides = array<i32>} : memref<16x16x36xf32, #tpu.memory_space<vmem>>, vector<16x16x4xf32>,
    %83 = vector.extract_strided_slice %78 {offsets = [2, 0, 0], sizes = [16, 16, 4], strides = [1, 1, 1]} : vector<18x16x4xf32> to vector<16x16x4xf32>
    %c0_101 = arith.constant 0 : index
    %c0_102 = arith.constant 0 : index
    %c24_103 = arith.constant 24 : index
    %84 = vector.load %arg6[%c0_101, %c0_102, %c24_103] : memref<16x16x36xf32, #tpu.memory_space<vmem>>, vector<16x16x4xf32>
    tpu.vector_store %arg6[%c0_101, %c0_102, %c24_103], %83 {strides = array<i32>} : memref<16x16x36xf32, #tpu.memory_space<vmem>>, vector<16x16x4xf32>,
    %c0_104 = arith.constant 0 : index
    %c1_105 = arith.constant 1 : index
    %c0_106 = arith.constant 0 : index
    %85 = vector.load %arg5[%c0_104, %c1_105, %c0_106] : memref<18x18x4xf32, #tpu.memory_space<vmem>>, vector<18x16x4xf32>
    %86 = vector.extract_strided_slice %85 {offsets = [0, 0, 0], sizes = [16, 16, 4], strides = [1, 1, 1]} : vector<18x16x4xf32> to vector<16x16x4xf32>
    %c0_107 = arith.constant 0 : index
    %c0_108 = arith.constant 0 : index
    %c4_109 = arith.constant 4 : index
    %87 = vector.load %arg6[%c0_107, %c0_108, %c4_109] : memref<16x16x36xf32, #tpu.memory_space<vmem>>, vector<16x16x4xf32>
    tpu.vector_store %arg6[%c0_107, %c0_108, %c4_109], %86 {strides = array<i32>} : memref<16x16x36xf32, #tpu.memory_space<vmem>>, vector<16x16x4xf32>,
    %88 = vector.extract_strided_slice %85 {offsets = [1, 0, 0], sizes = [16, 16, 4], strides = [1, 1, 1]} : vector<18x16x4xf32> to vector<16x16x4xf32>
    %c0_110 = arith.constant 0 : index
    %c0_111 = arith.constant 0 : index
    %c16_112 = arith.constant 16 : index
    %89 = vector.load %arg6[%c0_110, %c0_111, %c16_112] : memref<16x16x36xf32, #tpu.memory_space<vmem>>, vector<16x16x4xf32>
    tpu.vector_store %arg6[%c0_110, %c0_111, %c16_112], %88 {strides = array<i32>} : memref<16x16x36xf32, #tpu.memory_space<vmem>>, vector<16x16x4xf32>,
    %90 = vector.extract_strided_slice %85 {offsets = [2, 0, 0], sizes = [16, 16, 4], strides = [1, 1, 1]} : vector<18x16x4xf32> to vector<16x16x4xf32>
    %c0_113 = arith.constant 0 : index
    %c0_114 = arith.constant 0 : index
    %c28_115 = arith.constant 28 : index
    %91 = vector.load %arg6[%c0_113, %c0_114, %c28_115] : memref<16x16x36xf32, #tpu.memory_space<vmem>>, vector<16x16x4xf32>
    tpu.vector_store %arg6[%c0_113, %c0_114, %c28_115], %90 {strides = array<i32>} : memref<16x16x36xf32, #tpu.memory_space<vmem>>, vector<16x16x4xf32>,
    %c0_116 = arith.constant 0 : index
    %c2_117 = arith.constant 2 : index
    %c0_118 = arith.constant 0 : index
    %92 = vector.load %arg5[%c0_116, %c2_117, %c0_118] : memref<18x18x4xf32, #tpu.memory_space<vmem>>, vector<18x16x4xf32>
    %93 = vector.extract_strided_slice %92 {offsets = [0, 0, 0], sizes = [16, 16, 4], strides = [1, 1, 1]} : vector<18x16x4xf32> to vector<16x16x4xf32>
    %c0_119 = arith.constant 0 : index
    %c0_120 = arith.constant 0 : index
    %c8_121 = arith.constant 8 : index
    %94 = vector.load %arg6[%c0_119, %c0_120, %c8_121] : memref<16x16x36xf32, #tpu.memory_space<vmem>>, vector<16x16x4xf32>
    tpu.vector_store %arg6[%c0_119, %c0_120, %c8_121], %93 {strides = array<i32>} : memref<16x16x36xf32, #tpu.memory_space<vmem>>, vector<16x16x4xf32>,
    %95 = vector.extract_strided_slice %92 {offsets = [1, 0, 0], sizes = [16, 16, 4], strides = [1, 1, 1]} : vector<18x16x4xf32> to vector<16x16x4xf32>
    %c0_122 = arith.constant 0 : index
    %c0_123 = arith.constant 0 : index
    %c20_124 = arith.constant 20 : index
    %96 = vector.load %arg6[%c0_122, %c0_123, %c20_124] : memref<16x16x36xf32, #tpu.memory_space<vmem>>, vector<16x16x4xf32>
    tpu.vector_store %arg6[%c0_122, %c0_123, %c20_124], %95 {strides = array<i32>} : memref<16x16x36xf32, #tpu.memory_space<vmem>>, vector<16x16x4xf32>,
    %97 = vector.extract_strided_slice %92 {offsets = [2, 0, 0], sizes = [16, 16, 4], strides = [1, 1, 1]} : vector<18x16x4xf32> to vector<16x16x4xf32>
    %c0_125 = arith.constant 0 : index
    %c0_126 = arith.constant 0 : index
    %c32_127 = arith.constant 32 : index
    %98 = vector.load %arg6[%c0_125, %c0_126, %c32_127] : memref<16x16x36xf32, #tpu.memory_space<vmem>>, vector<16x16x4xf32>
    tpu.vector_store %arg6[%c0_125, %c0_126, %c32_127], %97 {strides = array<i32>} : memref<16x16x36xf32, #tpu.memory_space<vmem>>, vector<16x16x4xf32>,
    %c0_128 = arith.constant 0 : index
    %c0_129 = arith.constant 0 : index
    %c0_130 = arith.constant 0 : index
    %99 = vector.load %arg6[%c0_128, %c0_129, %c0_130] : memref<16x16x36xf32, #tpu.memory_space<vmem>>, vector<16x16x36xf32>
    %cst_131 = arith.constant dense<0.000000e+00> : vector<16x16x4xf32>
    %100 = tpu.matmul %99, %66, %cst_131 {dimension_numbers = #tpu.dot_dimension_numbers<[2], [0], [0, 1], [1], [0, 0, 0, 1, 1, 1], [], []>} : vector<16x16x36xf32>, vector<36x4xf32>, vector<16x16x4xf32> -> vector<16x16x4xf32>
    %cst_132 = arith.constant dense<0.000000e+00> : vector<4xf32>
    %101 = vector.multi_reduction <add>, %100, %cst_132 [0, 1] : vector<16x16x4xf32> to vector<4xf32>
    %102 = vector.shape_cast %101 : vector<4xf32> to vector<1x1x4xf32>
    %103 = arith.mulf %100, %100 : vector<16x16x4xf32>
    %cst_133 = arith.constant dense<0.000000e+00> : vector<4xf32>
    %104 = vector.multi_reduction <add>, %103, %cst_133 [0, 1] : vector<16x16x4xf32> to vector<4xf32>
    %105 = vector.shape_cast %104 : vector<4xf32> to vector<1x1x4xf32>
    %cst_134 = arith.constant 3.906250e-03 : f32
    %106 = vector.broadcast %cst_134 : f32 to vector<1x1x4xf32>
    %107 = arith.mulf %102, %106 : vector<1x1x4xf32>
    %cst_135 = arith.constant 3.906250e-03 : f32
    %108 = vector.broadcast %cst_135 : f32 to vector<1x1x4xf32>
    %109 = arith.mulf %105, %108 : vector<1x1x4xf32>
    %110 = arith.mulf %107, %107 : vector<1x1x4xf32>
    %111 = arith.subf %109, %110 : vector<1x1x4xf32>
    %cst_136 = arith.constant 0.000000e+00 : f32
    %112 = vector.broadcast %cst_136 : f32 to vector<1x1x4xf32>
    %113 = arith.maximumf %111, %112 : vector<1x1x4xf32>
    %cst_137 = arith.constant 9.99999974E-6 : f32
    %114 = vector.broadcast %cst_137 : f32 to vector<1x1x4xf32>
    %115 = arith.addf %113, %114 : vector<1x1x4xf32>
    %116 = math.rsqrt %115 : vector<1x1x4xf32>
    %117 = vector.shape_cast %67 : vector<1x4xf32> to vector<1x1x4xf32>
    %118 = arith.mulf %117, %116 : vector<1x1x4xf32>
    %119 = arith.mulf %107, %118 : vector<1x1x4xf32>
    %120 = vector.shape_cast %68 : vector<1x4xf32> to vector<1x1x4xf32>
    %121 = arith.subf %120, %119 : vector<1x1x4xf32>
    %122 = vector.broadcast %118 : vector<1x1x4xf32> to vector<16x16x4xf32>
    %123 = arith.mulf %100, %122 : vector<16x16x4xf32>
    %124 = vector.broadcast %121 : vector<1x1x4xf32> to vector<16x16x4xf32>
    %125 = arith.addf %123, %124 : vector<16x16x4xf32>
    %126 = arith.addf %125, %1 : vector<16x16x4xf32>
    %127 = vector.shape_cast %126 : vector<16x16x4xf32> to vector<16x64xf32>
    %c0_138 = arith.constant 0 : index
    %c0_139 = arith.constant 0 : index
    %c0_140 = arith.constant 0 : index
    %128 = vector.load %arg4[%c0_138, %c0_139, %c0_140] : memref<1x16x64xf32, #tpu.memory_space<vmem>>, vector<1x16x64xf32>
    %129 = vector.shape_cast %128 : vector<1x16x64xf32> to vector<16x64xf32>
    %130 = vector.shape_cast %127 : vector<16x64xf32> to vector<1x16x64xf32>
    tpu.vector_store %arg4[%c0_138, %c0_139, %c0_140], %130 {strides = array<i32>} : memref<1x16x64xf32, #tpu.memory_space<vmem>>, vector<1x16x64xf32>,
    return
  }
  func.func @transform_0(%arg0: i32) -> (i32, i32, i32, i32) {
    %c0_i32 = arith.constant 0 : i32
    %c0_i32_0 = arith.constant 0 : i32
    %c0_i32_1 = arith.constant 0 : i32
    %c0_i32_2 = arith.constant 0 : i32
    return %arg0, %c0_i32, %c0_i32_0, %c0_i32_1 : i32, i32, i32, i32
  }
  func.func @transform_1(%arg0: i32) -> (i32, i32, i32) {
    %c0_i32 = arith.constant 0 : i32
    %c0_i32_0 = arith.constant 0 : i32
    %c0_i32_1 = arith.constant 0 : i32
    %c0_i32_2 = arith.constant 0 : i32
    return %c0_i32, %c0_i32_0, %c0_i32_1 : i32, i32, i32
  }
  func.func @transform_2(%arg0: i32) -> (i32, i32) {
    %c0_i32 = arith.constant 0 : i32
    %c0_i32_0 = arith.constant 0 : i32
    %c0_i32_1 = arith.constant 0 : i32
    return %c0_i32, %c0_i32_0 : i32, i32
  }
  func.func @transform_3(%arg0: i32) -> (i32, i32, i32) {
    %c0_i32 = arith.constant 0 : i32
    %c0_i32_0 = arith.constant 0 : i32
    %c0_i32_1 = arith.constant 0 : i32
    return %arg0, %c0_i32, %c0_i32_0 : i32, i32, i32
  }
}

</mosaic_0001>

<llo_original>
// kernel: residual_block_pallas.1
$region0: #{residual_block_pallas.1}
  #allocation0 [shape = 'u32[]', space=smem, size = 0x4, offset = 0x4, fixed_abs, tag = 'smem constant byte address 0x4 - core index']
  #allocation1 [shape = 'u32[144,128]{1,0:T(1,128)}', space=vmem, size = 0x12000, scoped, tag = 'internal scratch']
  #allocation2 [shape = 'f32[18,18,4]{2,1,0:T(8,128)}', space=vmem, size = 0x36000, scoped, tag = 'scratch operand']
  #allocation3 [shape = 'f32[16,16,36]{2,1,0:T(8,128)}', space=vmem, size = 0x20000, scoped, tag = 'scratch operand']
  %s0 = inlined_call_operand.vmem [shape: f32[2,16,16,4], index: 0, kind: input, shape index: {}]
  %s1 = inlined_call_operand.vmem [shape: f32[2,36,4], index: 1, kind: input, shape index: {}]
  %s2 = inlined_call_operand.vmem [shape: f32[4,4], index: 2, kind: input, shape index: {}]
  %s3 = inlined_call_operand.vmem [shape: f32[2,16,64], index: 3, kind: output, shape index: {}]
  %s4 = sld [smem:[#allocation0]]
  $region45: #{residual_block_pallas.1} parent=0
    _
  %s6 = ssub.s32 1, %s4
  %s7 = scalar_select 0, %s6, %s4
  loop: start=0, step=1, limit=4
  $region2: #{residual_block_pallas.1} parent=0 // loop_pre_header
    _
  $region3: #{residual_block_pallas.1} parent=0 // loop_header
    %s9 = sphi 0, %s13
    %p10 = scmp.ge.s32.totalorder %s9, 4
    %s19 = sphi 0, %s21
    %s22 = sphi 0, %s19
    %s23 = sphi 0, %s22
    %s39 = sphi 0, %s23
    %s43 = sphi 0, %s43
    %s45 = sphi 0, %s43
    %s46 = sphi 0, %s45
    %s60 = sphi 0, %s46
    %s64 = sphi 0, %s64
    %s66 = sphi 0, %s64
    %s67 = sphi 0, %s66
    %s81 = sphi 0, %s67
    %s87 = sphi 0, %s89
    %s90 = sphi 0, %s87
    %s91 = sphi 0, %s90
    %s107 = sphi 0, %s91
  $region4: #{residual_block_pallas.1} parent=0 // loop_header_branch
    %12 = sbr.rel (%p10) target = $region8
  $region5: #{residual_block_pallas.1} parent=0 // loop_body
    %s14 = ssub.s32 %s9, 1
    %s15 = ssub.s32 %s9, 2
    %s16 = sadd.s32 %s9, 1
    %s17 = ssub.s32 %s9, %s16
    %p18 = scmp.eq.s32.totalorder %s17, 0
    %s20 = sadd.s32 %s19, 1
    %s21 = scalar_select %p18, %s19, %s20
    %p24 = pneg %p18
    %p25 = scmp.eq.s32.totalorder %s9, 1
    %p26 = por %p24, %p25
    %p27 = scmp.ne.s32.totalorder %s19, %s22
    %p28 = scmp.eq.s32.totalorder %s9, 0
    %p29 = por %p27, %p28
    %p30 = scmp.ne.s32.totalorder %s19, %s22
    %p31 = scmp.eq.s32.totalorder %s14, 1
    %p32 = por %p30, %p31
    %p33 = scmp.ne.s32.totalorder %s22, %s23
    %p34 = scmp.eq.s32.totalorder %s14, 0
    %p35 = por %p33, %p34
    %p36 = scmp.ne.s32.totalorder %s22, %s23
    %p37 = scmp.eq.s32.totalorder %s15, 1
    %p38 = por %p36, %p37
    %p40 = scmp.ne.s32.totalorder %s23, %s39
    %p41 = scmp.eq.s32.totalorder %s15, 0
    %p42 = por %p40, %p41
    %s44 = sadd.s32 %s43, 1
    %p47 = scmp.eq.s32.totalorder %s9, 1
    %p48 = scmp.ne.s32.totalorder %s43, %s45
    %p49 = scmp.eq.s32.totalorder %s9, 0
    %p50 = por %p48, %p49
    %p51 = scmp.ne.s32.totalorder %s43, %s45
    %p52 = scmp.eq.s32.totalorder %s14, 1
    %p53 = por %p51, %p52
    %p54 = scmp.ne.s32.totalorder %s45, %s46
    %p55 = scmp.eq.s32.totalorder %s14, 0
    %p56 = por %p54, %p55
    %p57 = scmp.ne.s32.totalorder %s45, %s46
    %p58 = scmp.eq.s32.totalorder %s15, 1
    %p59 = por %p57, %p58
    %p61 = scmp.ne.s32.totalorder %s46, %s60
    %p62 = scmp.eq.s32.totalorder %s15, 0
    %p63 = por %p61, %p62
    %s65 = sadd.s32 %s64, 1
    %p68 = scmp.eq.s32.totalorder %s9, 1
    %p69 = scmp.ne.s32.totalorder %s64, %s66
    %p70 = scmp.eq.s32.totalorder %s9, 0
    %p71 = por %p69, %p70
    %p72 = scmp.ne.s32.totalorder %s64, %s66
    %p73 = scmp.eq.s32.totalorder %s14, 1
    %p74 = por %p72, %p73
    %p75 = scmp.ne.s32.totalorder %s66, %s67
    %p76 = scmp.eq.s32.totalorder %s14, 0
    %p77 = por %p75, %p76
    %p78 = scmp.ne.s32.totalorder %s66, %s67
    %p79 = scmp.eq.s32.totalorder %s15, 1
    %p80 = por %p78, %p79
    %p82 = scmp.ne.s32.totalorder %s67, %s81
    %p83 = scmp.eq.s32.totalorder %s15, 0
    %p84 = por %p82, %p83
    %s85 = ssub.s32 %s9, %s16
    %p86 = scmp.eq.s32.totalorder %s85, 0
    %s88 = sadd.s32 %s87, 1
    %s89 = scalar_select %p86, %s87, %s88
    %p92 = pneg %p86
    %p93 = scmp.eq.s32.totalorder %s9, 1
    %p94 = por %p92, %p93
    %p95 = scmp.ne.s32.totalorder %s87, %s90
    %p96 = scmp.eq.s32.totalorder %s9, 0
    %p97 = por %p95, %p96
    %p98 = scmp.ne.s32.totalorder %s87, %s90
    %p99 = scmp.eq.s32.totalorder %s14, 1
    %p100 = por %p98, %p99
    %p101 = scmp.ne.s32.totalorder %s90, %s91
    %p102 = scmp.eq.s32.totalorder %s14, 0
    %p103 = por %p101, %p102
    %p104 = scmp.ne.s32.totalorder %s90, %s91
    %p105 = scmp.eq.s32.totalorder %s15, 1
    %p106 = por %p104, %p105
    %p108 = scmp.ne.s32.totalorder %s91, %s107
    %p109 = scmp.eq.s32.totalorder %s15, 0
    %p110 = por %p108, %p109
    %p111 = scmp.le.s32.totalorder 1, %s9
    %p112 = scmp.lt.s32.totalorder %s9, 3
    %p113 = pnand %p111, %p112
    %p114 = pneg %p113
    // Predicated region
    $region9: #{residual_block_pallas.1} parent=5 // pred_check
      _
    $region10: #{residual_block_pallas.1} parent=5 // pred_check_branch
      %116 = sbr.rel (%p113) target = $region12
    $region11: #{residual_block_pallas.1} parent=5 // pred_region
      %s117 = ssub.s32 %s9, 1
      // Predicated region
      $region13: #{residual_block_pallas.1} parent=11 // pred_check
        %p118 = pneg %p56
      $region14: #{residual_block_pallas.1} parent=11 // pred_check_branch
        %120 = sbr.rel (%p118) target = $region16
      $region15: #{residual_block_pallas.1} parent=11 // pred_region
        _
      $region16: #{residual_block_pallas.1} parent=11 // pred_fallthru
        _
      // Predicated region
      $region17: #{residual_block_pallas.1} parent=11 // pred_check
        %p121 = pneg %p77
      $region18: #{residual_block_pallas.1} parent=11 // pred_check_branch
        %123 = sbr.rel (%p121) target = $region20
      $region19: #{residual_block_pallas.1} parent=11 // pred_region
        _
      $region20: #{residual_block_pallas.1} parent=11 // pred_fallthru
        _
    $region12: #{residual_block_pallas.1} parent=5 // pred_fallthru
      _
    %p124 = scmp.lt.s32.totalorder %s9, 2
    // Predicated region
    $region21: #{residual_block_pallas.1} parent=5 // pred_check
      %p125 = pneg %p124
    $region22: #{residual_block_pallas.1} parent=5 // pred_check_branch
      %127 = sbr.rel (%p125) target = $region24
    $region23: #{residual_block_pallas.1} parent=5 // pred_region
      // Predicated region
      $region25: #{residual_block_pallas.1} parent=23 // pred_check
        %p128 = pneg %p29
      $region26: #{residual_block_pallas.1} parent=23 // pred_check_branch
        %130 = sbr.rel (%p128) target = $region28
      $region27: #{residual_block_pallas.1} parent=23 // pred_region
        %p131 = scmp.lt.s32.totalorder %s9, 1
        %s132 = scalar_select %p131, %s9, 1
        %s133 = smul.addr %s132, 32
        %s134 = smul.addr %s133, 8
        %s135 = scalar_lea.vmem %s0, %s134
      $region28: #{residual_block_pallas.1} parent=23 // pred_fallthru
        _
    $region24: #{residual_block_pallas.1} parent=5 // pred_fallthru
      _
    %p136 = scmp.le.s32.totalorder 1, %s9
    %p137 = scmp.lt.s32.totalorder %s9, 3
    %p138 = pnand %p136, %p137
    %p139 = pneg %p138
    // Predicated region
    $region29: #{residual_block_pallas.1} parent=5 // pred_check
      _
    $region30: #{residual_block_pallas.1} parent=5 // pred_check_branch
      %141 = sbr.rel (%p138) target = $region32
    $region31: #{residual_block_pallas.1} parent=5 // pred_region
      %s142 = ssub.s32 %s9, 1
      %p143 = scmp.lt.s32.totalorder %s14, 1
      %s144 = scalar_select %p143, %s14, 1
      %s145 = smul.addr %s144, 32
      %s146 = smul.addr %s145, 8
      %s147 = scalar_lea.vmem %s0, %s146
      %p148 = pneg %p35
      %p149 = pneg %p32
      %p150 = pneg %p56
      %p151 = pneg %p53
      %p152 = pneg %p77
      %p153 = pneg %p74
      %p154 = pneg %p103
      %p155 = pneg %p100
      %p156 = scmp.lt.s32.totalorder %s14, 1
      %s157 = scalar_select %p156, %s14, 1
      %s158 = smul.addr %s157, 2
      %s159 = smul.addr %s158, 8
      %s160 = scalar_lea.vmem %s3, %s159
      %p161 = scmp.lt.s32.totalorder %s14, 1
      %s162 = scalar_select %p161, %s14, 1
      %s163 = smul.addr %s162, 32
      %s164 = smul.addr %s163, 8
      %s165 = scalar_lea.vmem %s0, %s164
      %p166 = scmp.lt.s32.totalorder %s14, 1
      %s167 = scalar_select %p166, %s14, 1
      %s168 = smul.addr %s167, 2
      %s169 = smul.addr %s168, 8
      %s170 = scalar_lea.vmem %s3, %s169
      %v171 = vld [vmem:[%s165] sm:$0xff]
      %v172 = vld [vmem:[%s165 + $0x8] sm:$0xff]
      %v173 = vld [vmem:[%s165 + $0x10] sm:$0xff]
      %v174 = vld [vmem:[%s165 + $0x18] sm:$0xff]
      %v175 = vld [vmem:[%s165 + $0x20] sm:$0xff]
      %v176 = vld [vmem:[%s165 + $0x28] sm:$0xff]
      %v177 = vld [vmem:[%s165 + $0x30] sm:$0xff]
      %v178 = vld [vmem:[%s165 + $0x38] sm:$0xff]
      %v179 = vld [vmem:[%s165 + $0x40] sm:$0xff]
      %v180 = vld [vmem:[%s165 + $0x48] sm:$0xff]
      %v181 = vld [vmem:[%s165 + $0x50] sm:$0xff]
      %v182 = vld [vmem:[%s165 + $0x58] sm:$0xff]
      %v183 = vld [vmem:[%s165 + $0x60] sm:$0xff]
      %v184 = vld [vmem:[%s165 + $0x68] sm:$0xff]
      %v185 = vld [vmem:[%s165 + $0x70] sm:$0xff]
      %v186 = vld [vmem:[%s165 + $0x78] sm:$0xff]
      %v187 = vld [vmem:[%s165 + $0x80] sm:$0xff]
      %v188 = vld [vmem:[%s165 + $0x88] sm:$0xff]
      %v189 = vld [vmem:[%s165 + $0x90] sm:$0xff]
      %v190 = vld [vmem:[%s165 + $0x98] sm:$0xff]
      %v191 = vld [vmem:[%s165 + $0xa0] sm:$0xff]
      %v192 = vld [vmem:[%s165 + $0xa8] sm:$0xff]
      %v193 = vld [vmem:[%s165 + $0xb0] sm:$0xff]
      %v194 = vld [vmem:[%s165 + $0xb8] sm:$0xff]
      %v195 = vld [vmem:[%s165 + $0xc0] sm:$0xff]
      %v196 = vld [vmem:[%s165 + $0xc8] sm:$0xff]
      %v197 = vld [vmem:[%s165 + $0xd0] sm:$0xff]
      %v198 = vld [vmem:[%s165 + $0xd8] sm:$0xff]
      %v199 = vld [vmem:[%s165 + $0xe0] sm:$0xff]
      %v200 = vld [vmem:[%s165 + $0xe8] sm:$0xff]
      %v201 = vld [vmem:[%s165 + $0xf0] sm:$0xff]
      %v202 = vld [vmem:[%s165 + $0xf8] sm:$0xff]
      %v203 = vld [vmem:[%s1] sm:$0xff]
      %v204 = vld [vmem:[%s1 + $0x8] sm:$0xff]
      %v205 = vld [vmem:[%s1 + $0x10] sm:$0xff]
      %v206 = vld [vmem:[%s1 + $0x18] sm:$0xff]
      %v207 = vld [vmem:[%s1 + $0x20] sm:$0xf]
      %v208 = vld [vmem:[%s2] sm:$0x1]
      %v209 = vld [vmem:[%s2 + $0x1] sm:$0x1]
      %s210 = scalar_lea.vmem [#allocation2], 24
      %vm211 = vcmask 31744
      %212 = vst.msk [vmem:[%s210 + $0x1] sm:$0xff] %vm211, %v171
      %213 = vst.msk [vmem:[%s210 + $0x9] sm:$0xff] %vm211, %v172
      %214 = vst.msk [vmem:[%s210 + $0x19] sm:$0xff] %vm211, %v173
      %215 = vst.msk [vmem:[%s210 + $0x21] sm:$0xff] %vm211, %v174
      %216 = vst.msk [vmem:[%s210 + $0x31] sm:$0xff] %vm211, %v175
      %217 = vst.msk [vmem:[%s210 + $0x39] sm:$0xff] %vm211, %v176
      %218 = vst.msk [vmem:[%s210 + $0x49] sm:$0xff] %vm211, %v177
      %219 = vst.msk [vmem:[%s210 + $0x51] sm:$0xff] %vm211, %v178
      %220 = vst.msk [vmem:[%s210 + $0x61] sm:$0xff] %vm211, %v179
      %221 = vst.msk [vmem:[%s210 + $0x69] sm:$0xff] %vm211, %v180
      %222 = vst.msk [vmem:[%s210 + $0x79] sm:$0xff] %vm211, %v181
      %223 = vst.msk [vmem:[%s210 + $0x81] sm:$0xff] %vm211, %v182
      %224 = vst.msk [vmem:[%s210 + $0x91] sm:$0xff] %vm211, %v183
      %225 = vst.msk [vmem:[%s210 + $0x99] sm:$0xff] %vm211, %v184
      %226 = vst.msk [vmem:[%s210 + $0xa9] sm:$0xff] %vm211, %v185
      %227 = vst.msk [vmem:[%s210 + $0xb1] sm:$0xff] %vm211, %v186
      %228 = vst.msk [vmem:[%s210 + $0xc1] sm:$0xff] %vm211, %v187
      %229 = vst.msk [vmem:[%s210 + $0xc9] sm:$0xff] %vm211, %v188
      %230 = vst.msk [vmem:[%s210 + $0xd9] sm:$0xff] %vm211, %v189
      %231 = vst.msk [vmem:[%s210 + $0xe1] sm:$0xff] %vm211, %v190
      %232 = vst.msk [vmem:[%s210 + $0xf1] sm:$0xff] %vm211, %v191
      %233 = vst.msk [vmem:[%s210 + $0xf9] sm:$0xff] %vm211, %v192
      %234 = vst.msk [vmem:[%s210 + $0x109] sm:$0xff] %vm211, %v193
      %235 = vst.msk [vmem:[%s210 + $0x111] sm:$0xff] %vm211, %v194
      %236 = vst.msk [vmem:[%s210 + $0x121] sm:$0xff] %vm211, %v195
      %237 = vst.msk [vmem:[%s210 + $0x129] sm:$0xff] %vm211, %v196
      %238 = vst.msk [vmem:[%s210 + $0x139] sm:$0xff] %vm211, %v197
      %239 = vst.msk [vmem:[%s210 + $0x141] sm:$0xff] %vm211, %v198
      %240 = vst.msk [vmem:[%s210 + $0x151] sm:$0xff] %vm211, %v199
      %241 = vst.msk [vmem:[%s210 + $0x159] sm:$0xff] %vm211, %v200
      %242 = vst.msk [vmem:[%s210 + $0x169] sm:$0xff] %vm211, %v201
      %243 = vst.msk [vmem:[%s210 + $0x171] sm:$0xff] %vm211, %v202
      %244 = vst.msk [vmem:[#allocation2 + $0x1] sm:$0xff] %vm211, %v173
      %245 = vst.msk [vmem:[#allocation2 + $0x9] sm:$0xff] %vm211, %v174
      %s246 = scalar_lea.vmem [#allocation2], 408
      %247 = vst.msk [vmem:[%s246 + $0x1] sm:$0xff] %vm211, %v199
      %248 = vst.msk [vmem:[%s246 + $0x9] sm:$0xff] %vm211, %v200
      %v249 = vld [vmem:[#allocation2 + $0x2] sm:$0x1]
      %v250 = vld [vmem:[#allocation2 + $0x1a] sm:$0x1]
      %v251 = vld [vmem:[#allocation2 + $0x32] sm:$0x1]
      %v252 = vld [vmem:[#allocation2 + $0x4a] sm:$0x1]
      %v253 = vld [vmem:[#allocation2 + $0x62] sm:$0x1]
      %v254 = vld [vmem:[#allocation2 + $0x7a] sm:$0x1]
      %v255 = vld [vmem:[#allocation2 + $0x92] sm:$0x1]
      %v256 = vld [vmem:[#allocation2 + $0xaa] sm:$0x1]
      %v257 = vld [vmem:[#allocation2 + $0xc2] sm:$0x1]
      %v258 = vld [vmem:[#allocation2 + $0xda] sm:$0x1]
      %v259 = vld [vmem:[#allocation2 + $0xf2] sm:$0x1]
      %v260 = vld [vmem:[#allocation2 + $0x10a] sm:$0x1]
      %v261 = vld [vmem:[#allocation2 + $0x122] sm:$0x1]
      %v262 = vld [vmem:[#allocation2 + $0x13a] sm:$0x1]
      %v263 = vld [vmem:[#allocation2 + $0x152] sm:$0x1]
      %v264 = vld [vmem:[#allocation2 + $0x16a] sm:$0x1]
      %v265 = vld [vmem:[#allocation2 + $0x182] sm:$0x1]
      %v266 = vld [vmem:[#allocation2 + $0x19a] sm:$0x1]
      %vm267 = vcmask 24576
      %268 = vst.msk [vmem:[#allocation2] sm:$0x1] %vm267, %v249
      %269 = vst.msk [vmem:[#allocation2 + $0x18] sm:$0x1] %vm267, %v250
      %270 = vst.msk [vmem:[#allocation2 + $0x30] sm:$0x1] %vm267, %v251
      %271 = vst.msk [vmem:[#allocation2 + $0x48] sm:$0x1] %vm267, %v252
      %272 = vst.msk [vmem:[#allocation2 + $0x60] sm:$0x1] %vm267, %v253
      %273 = vst.msk [vmem:[#allocation2 + $0x78] sm:$0x1] %vm267, %v254
      %274 = vst.msk [vmem:[#allocation2 + $0x90] sm:$0x1] %vm267, %v255
      %275 = vst.msk [vmem:[#allocation2 + $0xa8] sm:$0x1] %vm267, %v256
      %276 = vst.msk [vmem:[#allocation2 + $0xc0] sm:$0x1] %vm267, %v257
      %277 = vst.msk [vmem:[#allocation2 + $0xd8] sm:$0x1] %vm267, %v258
      %278 = vst.msk [vmem:[#allocation2 + $0xf0] sm:$0x1] %vm267, %v259
      %279 = vst.msk [vmem:[#allocation2 + $0x108] sm:$0x1] %vm267, %v260
      %280 = vst.msk [vmem:[#allocation2 + $0x120] sm:$0x1] %vm267, %v261
      %281 = vst.msk [vmem:[#allocation2 + $0x138] sm:$0x1] %vm267, %v262
      %282 = vst.msk [vmem:[#allocation2 + $0x150] sm:$0x1] %vm267, %v263
      %283 = vst.msk [vmem:[#allocation2 + $0x168] sm:$0x1] %vm267, %v264
      %284 = vst.msk [vmem:[#allocation2 + $0x180] sm:$0x1] %vm267, %v265
      %285 = vst.msk [vmem:[#allocation2 + $0x198] sm:$0x1] %vm267, %v266
      %v286 = vld [vmem:[#allocation2 + $0xf] sm:$0x1]
      %v287 = vld [vmem:[#allocation2 + $0x27] sm:$0x1]
      %v288 = vld [vmem:[#allocation2 + $0x3f] sm:$0x1]
      %v289 = vld [vmem:[#allocation2 + $0x57] sm:$0x1]
      %v290 = vld [vmem:[#allocation2 + $0x6f] sm:$0x1]
      %v291 = vld [vmem:[#allocation2 + $0x87] sm:$0x1]
      %v292 = vld [vmem:[#allocation2 + $0x9f] sm:$0x1]
      %v293 = vld [vmem:[#allocation2 + $0xb7] sm:$0x1]
      %v294 = vld [vmem:[#allocation2 + $0xcf] sm:$0x1]
      %v295 = vld [vmem:[#allocation2 + $0xe7] sm:$0x1]
      %v296 = vld [vmem:[#allocation2 + $0xff] sm:$0x1]
      %v297 = vld [vmem:[#allocation2 + $0x117] sm:$0x1]
      %v298 = vld [vmem:[#allocation2 + $0x12f] sm:$0x1]
      %v299 = vld [vmem:[#allocation2 + $0x147] sm:$0x1]
      %v300 = vld [vmem:[#allocation2 + $0x15f] sm:$0x1]
      %v301 = vld [vmem:[#allocation2 + $0x177] sm:$0x1]
      %v302 = vld [vmem:[#allocation2 + $0x18f] sm:$0x1]
      %v303 = vld [vmem:[#allocation2 + $0x1a7] sm:$0x1]
      %304 = vst.msk [vmem:[#allocation2 + $0x11] sm:$0x1] %vm267, %v286
      %305 = vst.msk [vmem:[#allocation2 + $0x29] sm:$0x1] %vm267, %v287
      %306 = vst.msk [vmem:[#allocation2 + $0x41] sm:$0x1] %vm267, %v288
      %307 = vst.msk [vmem:[#allocation2 + $0x59] sm:$0x1] %vm267, %v289
      %308 = vst.msk [vmem:[#allocation2 + $0x71] sm:$0x1] %vm267, %v290
      %309 = vst.msk [vmem:[#allocation2 + $0x89] sm:$0x1] %vm267, %v291
      %310 = vst.msk [vmem:[#allocation2 + $0xa1] sm:$0x1] %vm267, %v292
      %311 = vst.msk [vmem:[#allocation2 + $0xb9] sm:$0x1] %vm267, %v293
      %312 = vst.msk [vmem:[#allocation2 + $0xd1] sm:$0x1] %vm267, %v294
      %313 = vst.msk [vmem:[#allocation2 + $0xe9] sm:$0x1] %vm267, %v295
      %314 = vst.msk [vmem:[#allocation2 + $0x101] sm:$0x1] %vm267, %v296
      %315 = vst.msk [vmem:[#allocation2 + $0x119] sm:$0x1] %vm267, %v297
      %316 = vst.msk [vmem:[#allocation2 + $0x131] sm:$0x1] %vm267, %v298
      %317 = vst.msk [vmem:[#allocation2 + $0x149] sm:$0x1] %vm267, %v299
      %318 = vst.msk [vmem:[#allocation2 + $0x161] sm:$0x1] %vm267, %v300
      %319 = vst.msk [vmem:[#allocation2 + $0x179] sm:$0x1] %vm267, %v301
      %320 = vst.msk [vmem:[#allocation2 + $0x191] sm:$0x1] %vm267, %v302
      %321 = vst.msk [vmem:[#allocation2 + $0x1a9] sm:$0x1] %vm267, %v303
      %v322 = vld [vmem:[#allocation2] sm:$0xff]
      %v323 = vld [vmem:[#allocation2 + $0x8] sm:$0xff]
      %v324 = vld [vmem:[#allocation2 + $0x18] sm:$0xff]
      %v325 = vld [vmem:[#allocation2 + $0x20] sm:$0xff]
      %v326 = vld [vmem:[#allocation2 + $0x30] sm:$0xff]
      %v327 = vld [vmem:[#allocation2 + $0x38] sm:$0xff]
      %v328 = vld [vmem:[#allocation2 + $0x48] sm:$0xff]
      %v329 = vld [vmem:[#allocation2 + $0x50] sm:$0xff]
      %v330 = vld [vmem:[#allocation2 + $0x60] sm:$0xff]
      %v331 = vld [vmem:[#allocation2 + $0x68] sm:$0xff]
      %v332 = vld [vmem:[#allocation2 + $0x78] sm:$0xff]
      %v333 = vld [vmem:[#allocation2 + $0x80] sm:$0xff]
      %v334 = vld [vmem:[#allocation2 + $0x90] sm:$0xff]
      %v335 = vld [vmem:[#allocation2 + $0x98] sm:$0xff]
      %v336 = vld [vmem:[#allocation2 + $0xa8] sm:$0xff]
      %v337 = vld [vmem:[#allocation2 + $0xb0] sm:$0xff]
      %v338 = vld [vmem:[#allocation2 + $0xc0] sm:$0xff]
      %v339 = vld [vmem:[#allocation2 + $0xc8] sm:$0xff]
      %v340 = vld [vmem:[#allocation2 + $0xd8] sm:$0xff]
      %v341 = vld [vmem:[#allocation2 + $0xe0] sm:$0xff]
      %v342 = vld [vmem:[#allocation2 + $0xf0] sm:$0xff]
      %v343 = vld [vmem:[#allocation2 + $0xf8] sm:$0xff]
      %v344 = vld [vmem:[#allocation2 + $0x108] sm:$0xff]
      %v345 = vld [vmem:[#allocation2 + $0x110] sm:$0xff]
      %v346 = vld [vmem:[#allocation2 + $0x120] sm:$0xff]
      %v347 = vld [vmem:[#allocation2 + $0x128] sm:$0xff]
      %v348 = vld [vmem:[#allocation2 + $0x138] sm:$0xff]
      %v349 = vld [vmem:[#allocation2 + $0x140] sm:$0xff]
      %v350 = vld [vmem:[#allocation2 + $0x150] sm:$0xff]
      %v351 = vld [vmem:[#allocation2 + $0x158] sm:$0xff]
      %v352 = vld [vmem:[#allocation2 + $0x168] sm:$0xff]
      %v353 = vld [vmem:[#allocation2 + $0x170] sm:$0xff]
      %v354 = vld [vmem:[#allocation2 + $0x180] sm:$0xff]
      %v355 = vld [vmem:[#allocation2 + $0x188] sm:$0xff]
      %v356 = vld [vmem:[#allocation2 + $0x198] sm:$0xff]
      %v357 = vld [vmem:[#allocation2 + $0x1a0] sm:$0xff]
      %358 = vst.msk [vmem:[#allocation3] sm:$0xff] %vm211, %v322
      %359 = vst.msk [vmem:[#allocation3 + $0x8] sm:$0xff] %vm211, %v323
      %360 = vst.msk [vmem:[#allocation3 + $0x10] sm:$0xff] %vm211, %v324
      %361 = vst.msk [vmem:[#allocation3 + $0x18] sm:$0xff] %vm211, %v325
      %362 = vst.msk [vmem:[#allocation3 + $0x20] sm:$0xff] %vm211, %v326
      %363 = vst.msk [vmem:[#allocation3 + $0x28] sm:$0xff] %vm211, %v327
      %364 = vst.msk [vmem:[#allocation3 + $0x30] sm:$0xff] %vm211, %v328
      %365 = vst.msk [vmem:[#allocation3 + $0x38] sm:$0xff] %vm211, %v329
      %366 = vst.msk [vmem:[#allocation3 + $0x40] sm:$0xff] %vm211, %v330
      %367 = vst.msk [vmem:[#allocation3 + $0x48] sm:$0xff] %vm211, %v331
      %368 = vst.msk [vmem:[#allocation3 + $0x50] sm:$0xff] %vm211, %v332
      %369 = vst.msk [vmem:[#allocation3 + $0x58] sm:$0xff] %vm211, %v333
      %370 = vst.msk [vmem:[#allocation3 + $0x60] sm:$0xff] %vm211, %v334
      %371 = vst.msk [vmem:[#allocation3 + $0x68] sm:$0xff] %vm211, %v335
      %372 = vst.msk [vmem:[#allocation3 + $0x70] sm:$0xff] %vm211, %v336
      %373 = vst.msk [vmem:[#allocation3 + $0x78] sm:$0xff] %vm211, %v337
      %374 = vst.msk [vmem:[#allocation3 + $0x80] sm:$0xff] %vm211, %v338
      %375 = vst.msk [vmem:[#allocation3 + $0x88] sm:$0xff] %vm211, %v339
      %376 = vst.msk [vmem:[#allocation3 + $0x90] sm:$0xff] %vm211, %v340
      %377 = vst.msk [vmem:[#allocation3 + $0x98] sm:$0xff] %vm211, %v341
      %378 = vst.msk [vmem:[#allocation3 + $0xa0] sm:$0xff] %vm211, %v342
      %379 = vst.msk [vmem:[#allocation3 + $0xa8] sm:$0xff] %vm211, %v343
      %380 = vst.msk [vmem:[#allocation3 + $0xb0] sm:$0xff] %vm211, %v344
      %381 = vst.msk [vmem:[#allocation3 + $0xb8] sm:$0xff] %vm211, %v345
      %382 = vst.msk [vmem:[#allocation3 + $0xc0] sm:$0xff] %vm211, %v346
      %383 = vst.msk [vmem:[#allocation3 + $0xc8] sm:$0xff] %vm211, %v347
      %384 = vst.msk [vmem:[#allocation3 + $0xd0] sm:$0xff] %vm211, %v348
      %385 = vst.msk [vmem:[#allocation3 + $0xd8] sm:$0xff] %vm211, %v349
      %386 = vst.msk [vmem:[#allocation3 + $0xe0] sm:$0xff] %vm211, %v350
      %387 = vst.msk [vmem:[#allocation3 + $0xe8] sm:$0xff] %vm211, %v351
      %388 = vst.msk [vmem:[#allocation3 + $0xf0] sm:$0xff] %vm211, %v352
      %389 = vst.msk [vmem:[#allocation3 + $0xf8] sm:$0xff] %vm211, %v353
      %422 = vrot.lane.b32.xlu0 %v324, 12
      %v423 = vpop.permute.xlu0 %422
      %424 = vrot.lane.b32.xlu0 %v325, 12
      %v425 = vpop.permute.xlu0 %424
      %426 = vrot.lane.b32.xlu0 %v326, 12
      %v427 = vpop.permute.xlu0 %426
      %428 = vrot.lane.b32.xlu0 %v327, 12
      %v429 = vpop.permute.xlu0 %428
      %430 = vrot.lane.b32.xlu0 %v328, 12
      %v431 = vpop.permute.xlu0 %430
      %432 = vrot.lane.b32.xlu0 %v329, 12
      %v433 = vpop.permute.xlu0 %432
      %434 = vrot.lane.b32.xlu0 %v330, 12
      %v435 = vpop.permute.xlu0 %434
      %436 = vrot.lane.b32.xlu0 %v331, 12
      %v437 = vpop.permute.xlu0 %436
      %438 = vrot.lane.b32.xlu0 %v332, 12
      %v439 = vpop.permute.xlu0 %438
      %440 = vrot.lane.b32.xlu0 %v333, 12
      %v441 = vpop.permute.xlu0 %440
      %442 = vrot.lane.b32.xlu0 %v334, 12
      %v443 = vpop.permute.xlu0 %442
      %444 = vrot.lane.b32.xlu0 %v335, 12
      %v445 = vpop.permute.xlu0 %444
      %446 = vrot.lane.b32.xlu0 %v336, 12
      %v447 = vpop.permute.xlu0 %446
      %448 = vrot.lane.b32.xlu0 %v337, 12
      %v449 = vpop.permute.xlu0 %448
      %450 = vrot.lane.b32.xlu0 %v338, 12
      %v451 = vpop.permute.xlu0 %450
      %452 = vrot.lane.b32.xlu0 %v339, 12
      %v453 = vpop.permute.xlu0 %452
      %454 = vrot.lane.b32.xlu0 %v340, 12
      %v455 = vpop.permute.xlu0 %454
      %456 = vrot.lane.b32.xlu0 %v341, 12
      %v457 = vpop.permute.xlu0 %456
      %458 = vrot.lane.b32.xlu0 %v342, 12
      %v459 = vpop.permute.xlu0 %458
      %460 = vrot.lane.b32.xlu0 %v343, 12
      %v461 = vpop.permute.xlu0 %460
      %462 = vrot.lane.b32.xlu0 %v344, 12
      %v463 = vpop.permute.xlu0 %462
      %464 = vrot.lane.b32.xlu0 %v345, 12
      %v465 = vpop.permute.xlu0 %464
      %466 = vrot.lane.b32.xlu0 %v346, 12
      %v467 = vpop.permute.xlu0 %466
      %468 = vrot.lane.b32.xlu0 %v347, 12
      %v469 = vpop.permute.xlu0 %468
      %470 = vrot.lane.b32.xlu0 %v348, 12
      %v471 = vpop.permute.xlu0 %470
      %472 = vrot.lane.b32.xlu0 %v349, 12
      %v473 = vpop.permute.xlu0 %472
      %474 = vrot.lane.b32.xlu0 %v350, 12
      %v475 = vpop.permute.xlu0 %474
      %476 = vrot.lane.b32.xlu0 %v351, 12
      %v477 = vpop.permute.xlu0 %476
      %478 = vrot.lane.b32.xlu0 %v352, 12
      %v479 = vpop.permute.xlu0 %478
      %480 = vrot.lane.b32.xlu0 %v353, 12
      %v481 = vpop.permute.xlu0 %480
      %482 = vrot.lane.b32.xlu0 %v354, 12
      %v483 = vpop.permute.xlu0 %482
      %484 = vrot.lane.b32.xlu0 %v355, 12
      %v485 = vpop.permute.xlu0 %484
      %vm518 = vcmask 130144
      %519 = vst.msk [vmem:[#allocation3] sm:$0xff] %vm518, %v423
      %520 = vst.msk [vmem:[#allocation3 + $0x8] sm:$0xff] %vm518, %v425
      %521 = vst.msk [vmem:[#allocation3 + $0x10] sm:$0xff] %vm518, %v427
      %522 = vst.msk [vmem:[#allocation3 + $0x18] sm:$0xff] %vm518, %v429
      %523 = vst.msk [vmem:[#allocation3 + $0x20] sm:$0xff] %vm518, %v431
      %524 = vst.msk [vmem:[#allocation3 + $0x28] sm:$0xff] %vm518, %v433
      %525 = vst.msk [vmem:[#allocation3 + $0x30] sm:$0xff] %vm518, %v435
      %526 = vst.msk [vmem:[#allocation3 + $0x38] sm:$0xff] %vm518, %v437
      %527 = vst.msk [vmem:[#allocation3 + $0x40] sm:$0xff] %vm518, %v439
      %528 = vst.msk [vmem:[#allocation3 + $0x48] sm:$0xff] %vm518, %v441
      %529 = vst.msk [vmem:[#allocation3 + $0x50] sm:$0xff] %vm518, %v443
      %530 = vst.msk [vmem:[#allocation3 + $0x58] sm:$0xff] %vm518, %v445
      %531 = vst.msk [vmem:[#allocation3 + $0x60] sm:$0xff] %vm518, %v447
      %532 = vst.msk [vmem:[#allocation3 + $0x68] sm:$0xff] %vm518, %v449
      %533 = vst.msk [vmem:[#allocation3 + $0x70] sm:$0xff] %vm518, %v451
      %534 = vst.msk [vmem:[#allocation3 + $0x78] sm:$0xff] %vm518, %v453
      %535 = vst.msk [vmem:[#allocation3 + $0x80] sm:$0xff] %vm518, %v455
      %536 = vst.msk [vmem:[#allocation3 + $0x88] sm:$0xff] %vm518, %v457
      %537 = vst.msk [vmem:[#allocation3 + $0x90] sm:$0xff] %vm518, %v459
      %538 = vst.msk [vmem:[#allocation3 + $0x98] sm:$0xff] %vm518, %v461
      %539 = vst.msk [vmem:[#allocation3 + $0xa0] sm:$0xff] %vm518, %v463
      %540 = vst.msk [vmem:[#allocation3 + $0xa8] sm:$0xff] %vm518, %v465
      %541 = vst.msk [vmem:[#allocation3 + $0xb0] sm:$0xff] %vm518, %v467
      %542 = vst.msk [vmem:[#allocation3 + $0xb8] sm:$0xff] %vm518, %v469
      %543 = vst.msk [vmem:[#allocation3 + $0xc0] sm:$0xff] %vm518, %v471
      %544 = vst.msk [vmem:[#allocation3 + $0xc8] sm:$0xff] %vm518, %v473
      %545 = vst.msk [vmem:[#allocation3 + $0xd0] sm:$0xff] %vm518, %v475
      %546 = vst.msk [vmem:[#allocation3 + $0xd8] sm:$0xff] %vm518, %v477
      %547 = vst.msk [vmem:[#allocation3 + $0xe0] sm:$0xff] %vm518, %v479
      %548 = vst.msk [vmem:[#allocation3 + $0xe8] sm:$0xff] %vm518, %v481
      %549 = vst.msk [vmem:[#allocation3 + $0xf0] sm:$0xff] %vm518, %v483
      %550 = vst.msk [vmem:[#allocation3 + $0xf8] sm:$0xff] %vm518, %v485
      %553 = vrot.lane.b32.xlu0 %v326, 24
      %v554 = vpop.permute.xlu0 %553
      %555 = vrot.lane.b32.xlu0 %v327, 24
      %v556 = vpop.permute.xlu0 %555
      %557 = vrot.lane.b32.xlu0 %v328, 24
      %v558 = vpop.permute.xlu0 %557
      %559 = vrot.lane.b32.xlu0 %v329, 24
      %v560 = vpop.permute.xlu0 %559
      %561 = vrot.lane.b32.xlu0 %v330, 24
      %v562 = vpop.permute.xlu0 %561
      %563 = vrot.lane.b32.xlu0 %v331, 24
      %v564 = vpop.permute.xlu0 %563
      %565 = vrot.lane.b32.xlu0 %v332, 24
      %v566 = vpop.permute.xlu0 %565
      %567 = vrot.lane.b32.xlu0 %v333, 24
      %v568 = vpop.permute.xlu0 %567
      %569 = vrot.lane.b32.xlu0 %v334, 24
      %v570 = vpop.permute.xlu0 %569
      %571 = vrot.lane.b32.xlu0 %v335, 24
      %v572 = vpop.permute.xlu0 %571
      %573 = vrot.lane.b32.xlu0 %v336, 24
      %v574 = vpop.permute.xlu0 %573
      %575 = vrot.lane.b32.xlu0 %v337, 24
      %v576 = vpop.permute.xlu0 %575
      %577 = vrot.lane.b32.xlu0 %v338, 24
      %v578 = vpop.permute.xlu0 %577
      %579 = vrot.lane.b32.xlu0 %v339, 24
      %v580 = vpop.permute.xlu0 %579
      %581 = vrot.lane.b32.xlu0 %v340, 24
      %v582 = vpop.permute.xlu0 %581
      %583 = vrot.lane.b32.xlu0 %v341, 24
      %v584 = vpop.permute.xlu0 %583
      %585 = vrot.lane.b32.xlu0 %v342, 24
      %v586 = vpop.permute.xlu0 %585
      %587 = vrot.lane.b32.xlu0 %v343, 24
      %v588 = vpop.permute.xlu0 %587
      %589 = vrot.lane.b32.xlu0 %v344, 24
      %v590 = vpop.permute.xlu0 %589
      %591 = vrot.lane.b32.xlu0 %v345, 24
      %v592 = vpop.permute.xlu0 %591
      %593 = vrot.lane.b32.xlu0 %v346, 24
      %v594 = vpop.permute.xlu0 %593
      %595 = vrot.lane.b32.xlu0 %v347, 24
      %v596 = vpop.permute.xlu0 %595
      %597 = vrot.lane.b32.xlu0 %v348, 24
      %v598 = vpop.permute.xlu0 %597
      %599 = vrot.lane.b32.xlu0 %v349, 24
      %v600 = vpop.permute.xlu0 %599
      %601 = vrot.lane.b32.xlu0 %v350, 24
      %v602 = vpop.permute.xlu0 %601
      %603 = vrot.lane.b32.xlu0 %v351, 24
      %v604 = vpop.permute.xlu0 %603
      %605 = vrot.lane.b32.xlu0 %v352, 24
      %v606 = vpop.permute.xlu0 %605
      %607 = vrot.lane.b32.xlu0 %v353, 24
      %v608 = vpop.permute.xlu0 %607
      %609 = vrot.lane.b32.xlu0 %v354, 24
      %v610 = vpop.permute.xlu0 %609
      %611 = vrot.lane.b32.xlu0 %v355, 24
      %v612 = vpop.permute.xlu0 %611
      %613 = vrot.lane.b32.xlu0 %v356, 24
      %v614 = vpop.permute.xlu0 %613
      %615 = vrot.lane.b32.xlu0 %v357, 24
      %v616 = vpop.permute.xlu0 %615
      %vm649 = vcmask 228544
      %650 = vst.msk [vmem:[#allocation3] sm:$0xff] %vm649, %v554
      %651 = vst.msk [vmem:[#allocation3 + $0x8] sm:$0xff] %vm649, %v556
      %652 = vst.msk [vmem:[#allocation3 + $0x10] sm:$0xff] %vm649, %v558
      %653 = vst.msk [vmem:[#allocation3 + $0x18] sm:$0xff] %vm649, %v560
      %654 = vst.msk [vmem:[#allocation3 + $0x20] sm:$0xff] %vm649, %v562
      %655 = vst.msk [vmem:[#allocation3 + $0x28] sm:$0xff] %vm649, %v564
      %656 = vst.msk [vmem:[#allocation3 + $0x30] sm:$0xff] %vm649, %v566
      %657 = vst.msk [vmem:[#allocation3 + $0x38] sm:$0xff] %vm649, %v568
      %658 = vst.msk [vmem:[#allocation3 + $0x40] sm:$0xff] %vm649, %v570
      %659 = vst.msk [vmem:[#allocation3 + $0x48] sm:$0xff] %vm649, %v572
      %660 = vst.msk [vmem:[#allocation3 + $0x50] sm:$0xff] %vm649, %v574
      %661 = vst.msk [vmem:[#allocation3 + $0x58] sm:$0xff] %vm649, %v576
      %662 = vst.msk [vmem:[#allocation3 + $0x60] sm:$0xff] %vm649, %v578
      %663 = vst.msk [vmem:[#allocation3 + $0x68] sm:$0xff] %vm649, %v580
      %664 = vst.msk [vmem:[#allocation3 + $0x70] sm:$0xff] %vm649, %v582
      %665 = vst.msk [vmem:[#allocation3 + $0x78] sm:$0xff] %vm649, %v584
      %666 = vst.msk [vmem:[#allocation3 + $0x80] sm:$0xff] %vm649, %v586
      %667 = vst.msk [vmem:[#allocation3 + $0x88] sm:$0xff] %vm649, %v588
      %668 = vst.msk [vmem:[#allocation3 + $0x90] sm:$0xff] %vm649, %v590
      %669 = vst.msk [vmem:[#allocation3 + $0x98] sm:$0xff] %vm649, %v592
      %670 = vst.msk [vmem:[#allocation3 + $0xa0] sm:$0xff] %vm649, %v594
      %671 = vst.msk [vmem:[#allocation3 + $0xa8] sm:$0xff] %vm649, %v596
      %672 = vst.msk [vmem:[#allocation3 + $0xb0] sm:$0xff] %vm649, %v598
      %673 = vst.msk [vmem:[#allocation3 + $0xb8] sm:$0xff] %vm649, %v600
      %674 = vst.msk [vmem:[#allocation3 + $0xc0] sm:$0xff] %vm649, %v602
      %675 = vst.msk [vmem:[#allocation3 + $0xc8] sm:$0xff] %vm649, %v604
      %676 = vst.msk [vmem:[#allocation3 + $0xd0] sm:$0xff] %vm649, %v606
      %677 = vst.msk [vmem:[#allocation3 + $0xd8] sm:$0xff] %vm649, %v608
      %678 = vst.msk [vmem:[#allocation3 + $0xe0] sm:$0xff] %vm649, %v610
      %679 = vst.msk [vmem:[#allocation3 + $0xe8] sm:$0xff] %vm649, %v612
      %680 = vst.msk [vmem:[#allocation3 + $0xf0] sm:$0xff] %vm649, %v614
      %681 = vst.msk [vmem:[#allocation3 + $0xf8] sm:$0xff] %vm649, %v616
      %v682 = vld [vmem:[#allocation2 + $0x1] sm:$0xff]
      %v683 = vld [vmem:[#allocation2 + $0x9] sm:$0xff]
      %v684 = vld [vmem:[#allocation2 + $0x19] sm:$0xff]
      %v685 = vld [vmem:[#allocation2 + $0x21] sm:$0xff]
      %v686 = vld [vmem:[#allocation2 + $0x31] sm:$0xff]
      %v687 = vld [vmem:[#allocation2 + $0x39] sm:$0xff]
      %v688 = vld [vmem:[#allocation2 + $0x49] sm:$0xff]
      %v689 = vld [vmem:[#allocation2 + $0x51] sm:$0xff]
      %v690 = vld [vmem:[#allocation2 + $0x61] sm:$0xff]
      %v691 = vld [vmem:[#allocation2 + $0x69] sm:$0xff]
      %v692 = vld [vmem:[#allocation2 + $0x79] sm:$0xff]
      %v693 = vld [vmem:[#allocation2 + $0x81] sm:$0xff]
      %v694 = vld [vmem:[#allocation2 + $0x91] sm:$0xff]
      %v695 = vld [vmem:[#allocation2 + $0x99] sm:$0xff]
      %v696 = vld [vmem:[#allocation2 + $0xa9] sm:$0xff]
      %v697 = vld [vmem:[#allocation2 + $0xb1] sm:$0xff]
      %v698 = vld [vmem:[#allocation2 + $0xc1] sm:$0xff]
      %v699 = vld [vmem:[#allocation2 + $0xc9] sm:$0xff]
      %v700 = vld [vmem:[#allocation2 + $0xd9] sm:$0xff]
      %v701 = vld [vmem:[#allocation2 + $0xe1] sm:$0xff]
      %v702 = vld [vmem:[#allocation2 + $0xf1] sm:$0xff]
      %v703 = vld [vmem:[#allocation2 + $0xf9] sm:$0xff]
      %v704 = vld [vmem:[#allocation2 + $0x109] sm:$0xff]
      %v705 = vld [vmem:[#allocation2 + $0x111] sm:$0xff]
      %v706 = vld [vmem:[#allocation2 + $0x121] sm:$0xff]
      %v707 = vld [vmem:[#allocation2 + $0x129] sm:$0xff]
      %v708 = vld [vmem:[#allocation2 + $0x139] sm:$0xff]
      %v709 = vld [vmem:[#allocation2 + $0x141] sm:$0xff]
      %v710 = vld [vmem:[#allocation2 + $0x151] sm:$0xff]
      %v711 = vld [vmem:[#allocation2 + $0x159] sm:$0xff]
      %v712 = vld [vmem:[#allocation2 + $0x169] sm:$0xff]
      %v713 = vld [vmem:[#allocation2 + $0x171] sm:$0xff]
      %v714 = vld [vmem:[#allocation2 + $0x181] sm:$0xff]
      %v715 = vld [vmem:[#allocation2 + $0x189] sm:$0xff]
      %v716 = vld [vmem:[#allocation2 + $0x199] sm:$0xff]
      %v717 = vld [vmem:[#allocation2 + $0x1a1] sm:$0xff]
      %750 = vrot.lane.b32.xlu0 %v682, 4
      %v751 = vpop.permute.xlu0 %750
      %752 = vrot.lane.b32.xlu0 %v683, 4
      %v753 = vpop.permute.xlu0 %752
      %754 = vrot.lane.b32.xlu0 %v684, 4
      %v755 = vpop.permute.xlu0 %754
      %756 = vrot.lane.b32.xlu0 %v685, 4
      %v757 = vpop.permute.xlu0 %756
      %758 = vrot.lane.b32.xlu0 %v686, 4
      %v759 = vpop.permute.xlu0 %758
      %760 = vrot.lane.b32.xlu0 %v687, 4
      %v761 = vpop.permute.xlu0 %760
      %762 = vrot.lane.b32.xlu0 %v688, 4
      %v763 = vpop.permute.xlu0 %762
      %764 = vrot.lane.b32.xlu0 %v689, 4
      %v765 = vpop.permute.xlu0 %764
      %766 = vrot.lane.b32.xlu0 %v690, 4
      %v767 = vpop.permute.xlu0 %766
      %768 = vrot.lane.b32.xlu0 %v691, 4
      %v769 = vpop.permute.xlu0 %768
      %770 = vrot.lane.b32.xlu0 %v692, 4
      %v771 = vpop.permute.xlu0 %770
      %772 = vrot.lane.b32.xlu0 %v693, 4
      %v773 = vpop.permute.xlu0 %772
      %774 = vrot.lane.b32.xlu0 %v694, 4
      %v775 = vpop.permute.xlu0 %774
      %776 = vrot.lane.b32.xlu0 %v695, 4
      %v777 = vpop.permute.xlu0 %776
      %778 = vrot.lane.b32.xlu0 %v696, 4
      %v779 = vpop.permute.xlu0 %778
      %780 = vrot.lane.b32.xlu0 %v697, 4
      %v781 = vpop.permute.xlu0 %780
      %782 = vrot.lane.b32.xlu0 %v698, 4
      %v783 = vpop.permute.xlu0 %782
      %784 = vrot.lane.b32.xlu0 %v699, 4
      %v785 = vpop.permute.xlu0 %784
      %786 = vrot.lane.b32.xlu0 %v700, 4
      %v787 = vpop.permute.xlu0 %786
      %788 = vrot.lane.b32.xlu0 %v701, 4
      %v789 = vpop.permute.xlu0 %788
      %790 = vrot.lane.b32.xlu0 %v702, 4
      %v791 = vpop.permute.xlu0 %790
      %792 = vrot.lane.b32.xlu0 %v703, 4
      %v793 = vpop.permute.xlu0 %792
      %794 = vrot.lane.b32.xlu0 %v704, 4
      %v795 = vpop.permute.xlu0 %794
      %796 = vrot.lane.b32.xlu0 %v705, 4
      %v797 = vpop.permute.xlu0 %796
      %798 = vrot.lane.b32.xlu0 %v706, 4
      %v799 = vpop.permute.xlu0 %798
      %800 = vrot.lane.b32.xlu0 %v707, 4
      %v801 = vpop.permute.xlu0 %800
      %802 = vrot.lane.b32.xlu0 %v708, 4
      %v803 = vpop.permute.xlu0 %802
      %804 = vrot.lane.b32.xlu0 %v709, 4
      %v805 = vpop.permute.xlu0 %804
      %806 = vrot.lane.b32.xlu0 %v710, 4
      %v807 = vpop.permute.xlu0 %806
      %808 = vrot.lane.b32.xlu0 %v711, 4
      %v809 = vpop.permute.xlu0 %808
      %810 = vrot.lane.b32.xlu0 %v712, 4
      %v811 = vpop.permute.xlu0 %810
      %812 = vrot.lane.b32.xlu0 %v713, 4
      %v813 = vpop.permute.xlu0 %812
      %vm846 = vcmask 64544
      %847 = vst.msk [vmem:[#allocation3] sm:$0xff] %vm846, %v751
      %848 = vst.msk [vmem:[#allocation3 + $0x8] sm:$0xff] %vm846, %v753
      %849 = vst.msk [vmem:[#allocation3 + $0x10] sm:$0xff] %vm846, %v755
      %850 = vst.msk [vmem:[#allocation3 + $0x18] sm:$0xff] %vm846, %v757
      %851 = vst.msk [vmem:[#allocation3 + $0x20] sm:$0xff] %vm846, %v759
      %852 = vst.msk [vmem:[#allocation3 + $0x28] sm:$0xff] %vm846, %v761
      %853 = vst.msk [vmem:[#allocation3 + $0x30] sm:$0xff] %vm846, %v763
      %854 = vst.msk [vmem:[#allocation3 + $0x38] sm:$0xff] %vm846, %v765
      %855 = vst.msk [vmem:[#allocation3 + $0x40] sm:$0xff] %vm846, %v767
      %856 = vst.msk [vmem:[#allocation3 + $0x48] sm:$0xff] %vm846, %v769
      %857 = vst.msk [vmem:[#allocation3 + $0x50] sm:$0xff] %vm846, %v771
      %858 = vst.msk [vmem:[#allocation3 + $0x58] sm:$0xff] %vm846, %v773
      %859 = vst.msk [vmem:[#allocation3 + $0x60] sm:$0xff] %vm846, %v775
      %860 = vst.msk [vmem:[#allocation3 + $0x68] sm:$0xff] %vm846, %v777
      %861 = vst.msk [vmem:[#allocation3 + $0x70] sm:$0xff] %vm846, %v779
      %862 = vst.msk [vmem:[#allocation3 + $0x78] sm:$0xff] %vm846, %v781
      %863 = vst.msk [vmem:[#allocation3 + $0x80] sm:$0xff] %vm846, %v783
      %864 = vst.msk [vmem:[#allocation3 + $0x88] sm:$0xff] %vm846, %v785
      %865 = vst.msk [vmem:[#allocation3 + $0x90] sm:$0xff] %vm846, %v787
      %866 = vst.msk [vmem:[#allocation3 + $0x98] sm:$0xff] %vm846, %v789
      %867 = vst.msk [vmem:[#allocation3 + $0xa0] sm:$0xff] %vm846, %v791
      %868 = vst.msk [vmem:[#allocation3 + $0xa8] sm:$0xff] %vm846, %v793
      %869 = vst.msk [vmem:[#allocation3 + $0xb0] sm:$0xff] %vm846, %v795
      %870 = vst.msk [vmem:[#allocation3 + $0xb8] sm:$0xff] %vm846, %v797
      %871 = vst.msk [vmem:[#allocation3 + $0xc0] sm:$0xff] %vm846, %v799
      %872 = vst.msk [vmem:[#allocation3 + $0xc8] sm:$0xff] %vm846, %v801
      %873 = vst.msk [vmem:[#allocation3 + $0xd0] sm:$0xff] %vm846, %v803
      %874 = vst.msk [vmem:[#allocation3 + $0xd8] sm:$0xff] %vm846, %v805
      %875 = vst.msk [vmem:[#allocation3 + $0xe0] sm:$0xff] %vm846, %v807
      %876 = vst.msk [vmem:[#allocation3 + $0xe8] sm:$0xff] %vm846, %v809
      %877 = vst.msk [vmem:[#allocation3 + $0xf0] sm:$0xff] %vm846, %v811
      %878 = vst.msk [vmem:[#allocation3 + $0xf8] sm:$0xff] %vm846, %v813
      %881 = vrot.lane.b32.xlu0 %v684, 16
      %v882 = vpop.permute.xlu0 %881
      %883 = vrot.lane.b32.xlu0 %v685, 16
      %v884 = vpop.permute.xlu0 %883
      %885 = vrot.lane.b32.xlu0 %v686, 16
      %v886 = vpop.permute.xlu0 %885
      %887 = vrot.lane.b32.xlu0 %v687, 16
      %v888 = vpop.permute.xlu0 %887
      %889 = vrot.lane.b32.xlu0 %v688, 16
      %v890 = vpop.permute.xlu0 %889
      %891 = vrot.lane.b32.xlu0 %v689, 16
      %v892 = vpop.permute.xlu0 %891
      %893 = vrot.lane.b32.xlu0 %v690, 16
      %v894 = vpop.permute.xlu0 %893
      %895 = vrot.lane.b32.xlu0 %v691, 16
      %v896 = vpop.permute.xlu0 %895
      %897 = vrot.lane.b32.xlu0 %v692, 16
      %v898 = vpop.permute.xlu0 %897
      %899 = vrot.lane.b32.xlu0 %v693, 16
      %v900 = vpop.permute.xlu0 %899
      %901 = vrot.lane.b32.xlu0 %v694, 16
      %v902 = vpop.permute.xlu0 %901
      %903 = vrot.lane.b32.xlu0 %v695, 16
      %v904 = vpop.permute.xlu0 %903
      %905 = vrot.lane.b32.xlu0 %v696, 16
      %v906 = vpop.permute.xlu0 %905
      %907 = vrot.lane.b32.xlu0 %v697, 16
      %v908 = vpop.permute.xlu0 %907
      %909 = vrot.lane.b32.xlu0 %v698, 16
      %v910 = vpop.permute.xlu0 %909
      %911 = vrot.lane.b32.xlu0 %v699, 16
      %v912 = vpop.permute.xlu0 %911
      %913 = vrot.lane.b32.xlu0 %v700, 16
      %v914 = vpop.permute.xlu0 %913
      %915 = vrot.lane.b32.xlu0 %v701, 16
      %v916 = vpop.permute.xlu0 %915
      %917 = vrot.lane.b32.xlu0 %v702, 16
      %v918 = vpop.permute.xlu0 %917
      %919 = vrot.lane.b32.xlu0 %v703, 16
      %v920 = vpop.permute.xlu0 %919
      %921 = vrot.lane.b32.xlu0 %v704, 16
      %v922 = vpop.permute.xlu0 %921
      %923 = vrot.lane.b32.xlu0 %v705, 16
      %v924 = vpop.permute.xlu0 %923
      %925 = vrot.lane.b32.xlu0 %v706, 16
      %v926 = vpop.permute.xlu0 %925
      %927 = vrot.lane.b32.xlu0 %v707, 16
      %v928 = vpop.permute.xlu0 %927
      %929 = vrot.lane.b32.xlu0 %v708, 16
      %v930 = vpop.permute.xlu0 %929
      %931 = vrot.lane.b32.xlu0 %v709, 16
      %v932 = vpop.permute.xlu0 %931
      %933 = vrot.lane.b32.xlu0 %v710, 16
      %v934 = vpop.permute.xlu0 %933
      %935 = vrot.lane.b32.xlu0 %v711, 16
      %v936 = vpop.permute.xlu0 %935
      %937 = vrot.lane.b32.xlu0 %v712, 16
      %v938 = vpop.permute.xlu0 %937
      %939 = vrot.lane.b32.xlu0 %v713, 16
      %v940 = vpop.permute.xlu0 %939
      %941 = vrot.lane.b32.xlu0 %v714, 16
      %v942 = vpop.permute.xlu0 %941
      %943 = vrot.lane.b32.xlu0 %v715, 16
      %v944 = vpop.permute.xlu0 %943
      %vm977 = vcmask 162944
      %978 = vst.msk [vmem:[#allocation3] sm:$0xff] %vm977, %v882
      %979 = vst.msk [vmem:[#allocation3 + $0x8] sm:$0xff] %vm977, %v884
      %980 = vst.msk [vmem:[#allocation3 + $0x10] sm:$0xff] %vm977, %v886
      %981 = vst.msk [vmem:[#allocation3 + $0x18] sm:$0xff] %vm977, %v888
      %982 = vst.msk [vmem:[#allocation3 + $0x20] sm:$0xff] %vm977, %v890
      %983 = vst.msk [vmem:[#allocation3 + $0x28] sm:$0xff] %vm977, %v892
      %984 = vst.msk [vmem:[#allocation3 + $0x30] sm:$0xff] %vm977, %v894
      %985 = vst.msk [vmem:[#allocation3 + $0x38] sm:$0xff] %vm977, %v896
      %986 = vst.msk [vmem:[#allocation3 + $0x40] sm:$0xff] %vm977, %v898
      %987 = vst.msk [vmem:[#allocation3 + $0x48] sm:$0xff] %vm977, %v900
      %988 = vst.msk [vmem:[#allocation3 + $0x50] sm:$0xff] %vm977, %v902
      %989 = vst.msk [vmem:[#allocation3 + $0x58] sm:$0xff] %vm977, %v904
      %990 = vst.msk [vmem:[#allocation3 + $0x60] sm:$0xff] %vm977, %v906
      %991 = vst.msk [vmem:[#allocation3 + $0x68] sm:$0xff] %vm977, %v908
      %992 = vst.msk [vmem:[#allocation3 + $0x70] sm:$0xff] %vm977, %v910
      %993 = vst.msk [vmem:[#allocation3 + $0x78] sm:$0xff] %vm977, %v912
      %994 = vst.msk [vmem:[#allocation3 + $0x80] sm:$0xff] %vm977, %v914
      %995 = vst.msk [vmem:[#allocation3 + $0x88] sm:$0xff] %vm977, %v916
      %996 = vst.msk [vmem:[#allocation3 + $0x90] sm:$0xff] %vm977, %v918
      %997 = vst.msk [vmem:[#allocation3 + $0x98] sm:$0xff] %vm977, %v920
      %998 = vst.msk [vmem:[#allocation3 + $0xa0] sm:$0xff] %vm977, %v922
      %999 = vst.msk [vmem:[#allocation3 + $0xa8] sm:$0xff] %vm977, %v924
      %1000 = vst.msk [vmem:[#allocation3 + $0xb0] sm:$0xff] %vm977, %v926
      %1001 = vst.msk [vmem:[#allocation3 + $0xb8] sm:$0xff] %vm977, %v928
      %1002 = vst.msk [vmem:[#allocation3 + $0xc0] sm:$0xff] %vm977, %v930
      %1003 = vst.msk [vmem:[#allocation3 + $0xc8] sm:$0xff] %vm977, %v932
      %1004 = vst.msk [vmem:[#allocation3 + $0xd0] sm:$0xff] %vm977, %v934
      %1005 = vst.msk [vmem:[#allocation3 + $0xd8] sm:$0xff] %vm977, %v936
      %1006 = vst.msk [vmem:[#allocation3 + $0xe0] sm:$0xff] %vm977, %v938
      %1007 = vst.msk [vmem:[#allocation3 + $0xe8] sm:$0xff] %vm977, %v940
      %1008 = vst.msk [vmem:[#allocation3 + $0xf0] sm:$0xff] %vm977, %v942
      %1009 = vst.msk [vmem:[#allocation3 + $0xf8] sm:$0xff] %vm977, %v944
      %1012 = vrot.lane.b32.xlu0 %v686, 28
      %v1013 = vpop.permute.xlu0 %1012
      %1014 = vrot.lane.b32.xlu0 %v687, 28
      %v1015 = vpop.permute.xlu0 %1014
      %1016 = vrot.lane.b32.xlu0 %v688, 28
      %v1017 = vpop.permute.xlu0 %1016
      %1018 = vrot.lane.b32.xlu0 %v689, 28
      %v1019 = vpop.permute.xlu0 %1018
      %1020 = vrot.lane.b32.xlu0 %v690, 28
      %v1021 = vpop.permute.xlu0 %1020
      %1022 = vrot.lane.b32.xlu0 %v691, 28
      %v1023 = vpop.permute.xlu0 %1022
      %1024 = vrot.lane.b32.xlu0 %v692, 28
      %v1025 = vpop.permute.xlu0 %1024
      %1026 = vrot.lane.b32.xlu0 %v693, 28
      %v1027 = vpop.permute.xlu0 %1026
      %1028 = vrot.lane.b32.xlu0 %v694, 28
      %v1029 = vpop.permute.xlu0 %1028
      %1030 = vrot.lane.b32.xlu0 %v695, 28
      %v1031 = vpop.permute.xlu0 %1030
      %1032 = vrot.lane.b32.xlu0 %v696, 28
      %v1033 = vpop.permute.xlu0 %1032
      %1034 = vrot.lane.b32.xlu0 %v697, 28
      %v1035 = vpop.permute.xlu0 %1034
      %1036 = vrot.lane.b32.xlu0 %v698, 28
      %v1037 = vpop.permute.xlu0 %1036
      %1038 = vrot.lane.b32.xlu0 %v699, 28
      %v1039 = vpop.permute.xlu0 %1038
      %1040 = vrot.lane.b32.xlu0 %v700, 28
      %v1041 = vpop.permute.xlu0 %1040
      %1042 = vrot.lane.b32.xlu0 %v701, 28
      %v1043 = vpop.permute.xlu0 %1042
      %1044 = vrot.lane.b32.xlu0 %v702, 28
      %v1045 = vpop.permute.xlu0 %1044
      %1046 = vrot.lane.b32.xlu0 %v703, 28
      %v1047 = vpop.permute.xlu0 %1046
      %1048 = vrot.lane.b32.xlu0 %v704, 28
      %v1049 = vpop.permute.xlu0 %1048
      %1050 = vrot.lane.b32.xlu0 %v705, 28
      %v1051 = vpop.permute.xlu0 %1050
      %1052 = vrot.lane.b32.xlu0 %v706, 28
      %v1053 = vpop.permute.xlu0 %1052
      %1054 = vrot.lane.b32.xlu0 %v707, 28
      %v1055 = vpop.permute.xlu0 %1054
      %1056 = vrot.lane.b32.xlu0 %v708, 28
      %v1057 = vpop.permute.xlu0 %1056
      %1058 = vrot.lane.b32.xlu0 %v709, 28
      %v1059 = vpop.permute.xlu0 %1058
      %1060 = vrot.lane.b32.xlu0 %v710, 28
      %v1061 = vpop.permute.xlu0 %1060
      %1062 = vrot.lane.b32.xlu0 %v711, 28
      %v1063 = vpop.permute.xlu0 %1062
      %1064 = vrot.lane.b32.xlu0 %v712, 28
      %v1065 = vpop.permute.xlu0 %1064
      %1066 = vrot.lane.b32.xlu0 %v713, 28
      %v1067 = vpop.permute.xlu0 %1066
      %1068 = vrot.lane.b32.xlu0 %v714, 28
      %v1069 = vpop.permute.xlu0 %1068
      %1070 = vrot.lane.b32.xlu0 %v715, 28
      %v1071 = vpop.permute.xlu0 %1070
      %1072 = vrot.lane.b32.xlu0 %v716, 28
      %v1073 = vpop.permute.xlu0 %1072
      %1074 = vrot.lane.b32.xlu0 %v717, 28
      %v1075 = vpop.permute.xlu0 %1074
      %vm1108 = vcmask 261344
      %1109 = vst.msk [vmem:[#allocation3] sm:$0xff] %vm1108, %v1013
      %1110 = vst.msk [vmem:[#allocation3 + $0x8] sm:$0xff] %vm1108, %v1015
      %1111 = vst.msk [vmem:[#allocation3 + $0x10] sm:$0xff] %vm1108, %v1017
      %1112 = vst.msk [vmem:[#allocation3 + $0x18] sm:$0xff] %vm1108, %v1019
      %1113 = vst.msk [vmem:[#allocation3 + $0x20] sm:$0xff] %vm1108, %v1021
      %1114 = vst.msk [vmem:[#allocation3 + $0x28] sm:$0xff] %vm1108, %v1023
      %1115 = vst.msk [vmem:[#allocation3 + $0x30] sm:$0xff] %vm1108, %v1025
      %1116 = vst.msk [vmem:[#allocation3 + $0x38] sm:$0xff] %vm1108, %v1027
      %1117 = vst.msk [vmem:[#allocation3 + $0x40] sm:$0xff] %vm1108, %v1029
      %1118 = vst.msk [vmem:[#allocation3 + $0x48] sm:$0xff] %vm1108, %v1031
      %1119 = vst.msk [vmem:[#allocation3 + $0x50] sm:$0xff] %vm1108, %v1033
      %1120 = vst.msk [vmem:[#allocation3 + $0x58] sm:$0xff] %vm1108, %v1035
      %1121 = vst.msk [vmem:[#allocation3 + $0x60] sm:$0xff] %vm1108, %v1037
      %1122 = vst.msk [vmem:[#allocation3 + $0x68] sm:$0xff] %vm1108, %v1039
      %1123 = vst.msk [vmem:[#allocation3 + $0x70] sm:$0xff] %vm1108, %v1041
      %1124 = vst.msk [vmem:[#allocation3 + $0x78] sm:$0xff] %vm1108, %v1043
      %1125 = vst.msk [vmem:[#allocation3 + $0x80] sm:$0xff] %vm1108, %v1045
      %1126 = vst.msk [vmem:[#allocation3 + $0x88] sm:$0xff] %vm1108, %v1047
      %1127 = vst.msk [vmem:[#allocation3 + $0x90] sm:$0xff] %vm1108, %v1049
      %1128 = vst.msk [vmem:[#allocation3 + $0x98] sm:$0xff] %vm1108, %v1051
      %1129 = vst.msk [vmem:[#allocation3 + $0xa0] sm:$0xff] %vm1108, %v1053
      %1130 = vst.msk [vmem:[#allocation3 + $0xa8] sm:$0xff] %vm1108, %v1055
      %1131 = vst.msk [vmem:[#allocation3 + $0xb0] sm:$0xff] %vm1108, %v1057
      %1132 = vst.msk [vmem:[#allocation3 + $0xb8] sm:$0xff] %vm1108, %v1059
      %1133 = vst.msk [vmem:[#allocation3 + $0xc0] sm:$0xff] %vm1108, %v1061
      %1134 = vst.msk [vmem:[#allocation3 + $0xc8] sm:$0xff] %vm1108, %v1063
      %1135 = vst.msk [vmem:[#allocation3 + $0xd0] sm:$0xff] %vm1108, %v1065
      %1136 = vst.msk [vmem:[#allocation3 + $0xd8] sm:$0xff] %vm1108, %v1067
      %1137 = vst.msk [vmem:[#allocation3 + $0xe0] sm:$0xff] %vm1108, %v1069
      %1138 = vst.msk [vmem:[#allocation3 + $0xe8] sm:$0xff] %vm1108, %v1071
      %1139 = vst.msk [vmem:[#allocation3 + $0xf0] sm:$0xff] %vm1108, %v1073
      %1140 = vst.msk [vmem:[#allocation3 + $0xf8] sm:$0xff] %vm1108, %v1075
      %v1141 = vld [vmem:[#allocation2 + $0x2] sm:$0xff]
      %v1142 = vld [vmem:[#allocation2 + $0xa] sm:$0xff]
      %v1143 = vld [vmem:[#allocation2 + $0x1a] sm:$0xff]
      %v1144 = vld [vmem:[#allocation2 + $0x22] sm:$0xff]
      %v1145 = vld [vmem:[#allocation2 + $0x32] sm:$0xff]
      %v1146 = vld [vmem:[#allocation2 + $0x3a] sm:$0xff]
      %v1147 = vld [vmem:[#allocation2 + $0x4a] sm:$0xff]
      %v1148 = vld [vmem:[#allocation2 + $0x52] sm:$0xff]
      %v1149 = vld [vmem:[#allocation2 + $0x62] sm:$0xff]
      %v1150 = vld [vmem:[#allocation2 + $0x6a] sm:$0xff]
      %v1151 = vld [vmem:[#allocation2 + $0x7a] sm:$0xff]
      %v1152 = vld [vmem:[#allocation2 + $0x82] sm:$0xff]
      %v1153 = vld [vmem:[#allocation2 + $0x92] sm:$0xff]
      %v1154 = vld [vmem:[#allocation2 + $0x9a] sm:$0xff]
      %v1155 = vld [vmem:[#allocation2 + $0xaa] sm:$0xff]
      %v1156 = vld [vmem:[#allocation2 + $0xb2] sm:$0xff]
      %v1157 = vld [vmem:[#allocation2 + $0xc2] sm:$0xff]
      %v1158 = vld [vmem:[#allocation2 + $0xca] sm:$0xff]
      %v1159 = vld [vmem:[#allocation2 + $0xda] sm:$0xff]
      %v1160 = vld [vmem:[#allocation2 + $0xe2] sm:$0xff]
      %v1161 = vld [vmem:[#allocation2 + $0xf2] sm:$0xff]
      %v1162 = vld [vmem:[#allocation2 + $0xfa] sm:$0xff]
      %v1163 = vld [vmem:[#allocation2 + $0x10a] sm:$0xff]
      %v1164 = vld [vmem:[#allocation2 + $0x112] sm:$0xff]
      %v1165 = vld [vmem:[#allocation2 + $0x122] sm:$0xff]
      %v1166 = vld [vmem:[#allocation2 + $0x12a] sm:$0xff]
      %v1167 = vld [vmem:[#allocation2 + $0x13a] sm:$0xff]
      %v1168 = vld [vmem:[#allocation2 + $0x142] sm:$0xff]
      %v1169 = vld [vmem:[#allocation2 + $0x152] sm:$0xff]
      %v1170 = vld [vmem:[#allocation2 + $0x15a] sm:$0xff]
      %v1171 = vld [vmem:[#allocation2 + $0x16a] sm:$0xff]
      %v1172 = vld [vmem:[#allocation2 + $0x172] sm:$0xff]
      %v1173 = vld [vmem:[#allocation2 + $0x182] sm:$0xff]
      %v1174 = vld [vmem:[#allocation2 + $0x18a] sm:$0xff]
      %v1175 = vld [vmem:[#allocation2 + $0x19a] sm:$0xff]
      %v1176 = vld [vmem:[#allocation2 + $0x1a2] sm:$0xff]
      %1209 = vrot.lane.b32.xlu0 %v1141, 8
      %v1210 = vpop.permute.xlu0 %1209
      %1211 = vrot.lane.b32.xlu0 %v1142, 8
      %v1212 = vpop.permute.xlu0 %1211
      %1213 = vrot.lane.b32.xlu0 %v1143, 8
      %v1214 = vpop.permute.xlu0 %1213
      %1215 = vrot.lane.b32.xlu0 %v1144, 8
      %v1216 = vpop.permute.xlu0 %1215
      %1217 = vrot.lane.b32.xlu0 %v1145, 8
      %v1218 = vpop.permute.xlu0 %1217
      %1219 = vrot.lane.b32.xlu0 %v1146, 8
      %v1220 = vpop.permute.xlu0 %1219
      %1221 = vrot.lane.b32.xlu0 %v1147, 8
      %v1222 = vpop.permute.xlu0 %1221
      %1223 = vrot.lane.b32.xlu0 %v1148, 8
      %v1224 = vpop.permute.xlu0 %1223
      %1225 = vrot.lane.b32.xlu0 %v1149, 8
      %v1226 = vpop.permute.xlu0 %1225
      %1227 = vrot.lane.b32.xlu0 %v1150, 8
      %v1228 = vpop.permute.xlu0 %1227
      %1229 = vrot.lane.b32.xlu0 %v1151, 8
      %v1230 = vpop.permute.xlu0 %1229
      %1231 = vrot.lane.b32.xlu0 %v1152, 8
      %v1232 = vpop.permute.xlu0 %1231
      %1233 = vrot.lane.b32.xlu0 %v1153, 8
      %v1234 = vpop.permute.xlu0 %1233
      %1235 = vrot.lane.b32.xlu0 %v1154, 8
      %v1236 = vpop.permute.xlu0 %1235
      %1237 = vrot.lane.b32.xlu0 %v1155, 8
      %v1238 = vpop.permute.xlu0 %1237
      %1239 = vrot.lane.b32.xlu0 %v1156, 8
      %v1240 = vpop.permute.xlu0 %1239
      %1241 = vrot.lane.b32.xlu0 %v1157, 8
      %v1242 = vpop.permute.xlu0 %1241
      %1243 = vrot.lane.b32.xlu0 %v1158, 8
      %v1244 = vpop.permute.xlu0 %1243
      %1245 = vrot.lane.b32.xlu0 %v1159, 8
      %v1246 = vpop.permute.xlu0 %1245
      %1247 = vrot.lane.b32.xlu0 %v1160, 8
      %v1248 = vpop.permute.xlu0 %1247
      %1249 = vrot.lane.b32.xlu0 %v1161, 8
      %v1250 = vpop.permute.xlu0 %1249
      %1251 = vrot.lane.b32.xlu0 %v1162, 8
      %v1252 = vpop.permute.xlu0 %1251
      %1253 = vrot.lane.b32.xlu0 %v1163, 8
      %v1254 = vpop.permute.xlu0 %1253
      %1255 = vrot.lane.b32.xlu0 %v1164, 8
      %v1256 = vpop.permute.xlu0 %1255
      %1257 = vrot.lane.b32.xlu0 %v1165, 8
      %v1258 = vpop.permute.xlu0 %1257
      %1259 = vrot.lane.b32.xlu0 %v1166, 8
      %v1260 = vpop.permute.xlu0 %1259
      %1261 = vrot.lane.b32.xlu0 %v1167, 8
      %v1262 = vpop.permute.xlu0 %1261
      %1263 = vrot.lane.b32.xlu0 %v1168, 8
      %v1264 = vpop.permute.xlu0 %1263
      %1265 = vrot.lane.b32.xlu0 %v1169, 8
      %v1266 = vpop.permute.xlu0 %1265
      %1267 = vrot.lane.b32.xlu0 %v1170, 8
      %v1268 = vpop.permute.xlu0 %1267
      %1269 = vrot.lane.b32.xlu0 %v1171, 8
      %v1270 = vpop.permute.xlu0 %1269
      %1271 = vrot.lane.b32.xlu0 %v1172, 8
      %v1272 = vpop.permute.xlu0 %1271
      %vm1305 = vcmask 97344
      %1306 = vst.msk [vmem:[#allocation3] sm:$0xff] %vm1305, %v1210
      %1307 = vst.msk [vmem:[#allocation3 + $0x8] sm:$0xff] %vm1305, %v1212
      %1308 = vst.msk [vmem:[#allocation3 + $0x10] sm:$0xff] %vm1305, %v1214
      %1309 = vst.msk [vmem:[#allocation3 + $0x18] sm:$0xff] %vm1305, %v1216
      %1310 = vst.msk [vmem:[#allocation3 + $0x20] sm:$0xff] %vm1305, %v1218
      %1311 = vst.msk [vmem:[#allocation3 + $0x28] sm:$0xff] %vm1305, %v1220
      %1312 = vst.msk [vmem:[#allocation3 + $0x30] sm:$0xff] %vm1305, %v1222
      %1313 = vst.msk [vmem:[#allocation3 + $0x38] sm:$0xff] %vm1305, %v1224
      %1314 = vst.msk [vmem:[#allocation3 + $0x40] sm:$0xff] %vm1305, %v1226
      %1315 = vst.msk [vmem:[#allocation3 + $0x48] sm:$0xff] %vm1305, %v1228
      %1316 = vst.msk [vmem:[#allocation3 + $0x50] sm:$0xff] %vm1305, %v1230
      %1317 = vst.msk [vmem:[#allocation3 + $0x58] sm:$0xff] %vm1305, %v1232
      %1318 = vst.msk [vmem:[#allocation3 + $0x60] sm:$0xff] %vm1305, %v1234
      %1319 = vst.msk [vmem:[#allocation3 + $0x68] sm:$0xff] %vm1305, %v1236
      %1320 = vst.msk [vmem:[#allocation3 + $0x70] sm:$0xff] %vm1305, %v1238
      %1321 = vst.msk [vmem:[#allocation3 + $0x78] sm:$0xff] %vm1305, %v1240
      %1322 = vst.msk [vmem:[#allocation3 + $0x80] sm:$0xff] %vm1305, %v1242
      %1323 = vst.msk [vmem:[#allocation3 + $0x88] sm:$0xff] %vm1305, %v1244
      %1324 = vst.msk [vmem:[#allocation3 + $0x90] sm:$0xff] %vm1305, %v1246
      %1325 = vst.msk [vmem:[#allocation3 + $0x98] sm:$0xff] %vm1305, %v1248
      %1326 = vst.msk [vmem:[#allocation3 + $0xa0] sm:$0xff] %vm1305, %v1250
      %1327 = vst.msk [vmem:[#allocation3 + $0xa8] sm:$0xff] %vm1305, %v1252
      %1328 = vst.msk [vmem:[#allocation3 + $0xb0] sm:$0xff] %vm1305, %v1254
      %1329 = vst.msk [vmem:[#allocation3 + $0xb8] sm:$0xff] %vm1305, %v1256
      %1330 = vst.msk [vmem:[#allocation3 + $0xc0] sm:$0xff] %vm1305, %v1258
      %1331 = vst.msk [vmem:[#allocation3 + $0xc8] sm:$0xff] %vm1305, %v1260
      %1332 = vst.msk [vmem:[#allocation3 + $0xd0] sm:$0xff] %vm1305, %v1262
      %1333 = vst.msk [vmem:[#allocation3 + $0xd8] sm:$0xff] %vm1305, %v1264
      %1334 = vst.msk [vmem:[#allocation3 + $0xe0] sm:$0xff] %vm1305, %v1266
      %1335 = vst.msk [vmem:[#allocation3 + $0xe8] sm:$0xff] %vm1305, %v1268
      %1336 = vst.msk [vmem:[#allocation3 + $0xf0] sm:$0xff] %vm1305, %v1270
      %1337 = vst.msk [vmem:[#allocation3 + $0xf8] sm:$0xff] %vm1305, %v1272
      %1340 = vrot.lane.b32.xlu0 %v1143, 20
      %v1341 = vpop.permute.xlu0 %1340
      %1342 = vrot.lane.b32.xlu0 %v1144, 20
      %v1343 = vpop.permute.xlu0 %1342
      %1344 = vrot.lane.b32.xlu0 %v1145, 20
      %v1345 = vpop.permute.xlu0 %1344
      %1346 = vrot.lane.b32.xlu0 %v1146, 20
      %v1347 = vpop.permute.xlu0 %1346
      %1348 = vrot.lane.b32.xlu0 %v1147, 20
      %v1349 = vpop.permute.xlu0 %1348
      %1350 = vrot.lane.b32.xlu0 %v1148, 20
      %v1351 = vpop.permute.xlu0 %1350
      %1352 = vrot.lane.b32.xlu0 %v1149, 20
      %v1353 = vpop.permute.xlu0 %1352
      %1354 = vrot.lane.b32.xlu0 %v1150, 20
      %v1355 = vpop.permute.xlu0 %1354
      %1356 = vrot.lane.b32.xlu0 %v1151, 20
      %v1357 = vpop.permute.xlu0 %1356
      %1358 = vrot.lane.b32.xlu0 %v1152, 20
      %v1359 = vpop.permute.xlu0 %1358
      %1360 = vrot.lane.b32.xlu0 %v1153, 20
      %v1361 = vpop.permute.xlu0 %1360
      %1362 = vrot.lane.b32.xlu0 %v1154, 20
      %v1363 = vpop.permute.xlu0 %1362
      %1364 = vrot.lane.b32.xlu0 %v1155, 20
      %v1365 = vpop.permute.xlu0 %1364
      %1366 = vrot.lane.b32.xlu0 %v1156, 20
      %v1367 = vpop.permute.xlu0 %1366
      %1368 = vrot.lane.b32.xlu0 %v1157, 20
      %v1369 = vpop.permute.xlu0 %1368
      %1370 = vrot.lane.b32.xlu0 %v1158, 20
      %v1371 = vpop.permute.xlu0 %1370
      %1372 = vrot.lane.b32.xlu0 %v1159, 20
      %v1373 = vpop.permute.xlu0 %1372
      %1374 = vrot.lane.b32.xlu0 %v1160, 20
      %v1375 = vpop.permute.xlu0 %1374
      %1376 = vrot.lane.b32.xlu0 %v1161, 20
      %v1377 = vpop.permute.xlu0 %1376
      %1378 = vrot.lane.b32.xlu0 %v1162, 20
      %v1379 = vpop.permute.xlu0 %1378
      %1380 = vrot.lane.b32.xlu0 %v1163, 20
      %v1381 = vpop.permute.xlu0 %1380
      %1382 = vrot.lane.b32.xlu0 %v1164, 20
      %v1383 = vpop.permute.xlu0 %1382
      %1384 = vrot.lane.b32.xlu0 %v1165, 20
      %v1385 = vpop.permute.xlu0 %1384
      %1386 = vrot.lane.b32.xlu0 %v1166, 20
      %v1387 = vpop.permute.xlu0 %1386
      %1388 = vrot.lane.b32.xlu0 %v1167, 20
      %v1389 = vpop.permute.xlu0 %1388
      %1390 = vrot.lane.b32.xlu0 %v1168, 20
      %v1391 = vpop.permute.xlu0 %1390
      %1392 = vrot.lane.b32.xlu0 %v1169, 20
      %v1393 = vpop.permute.xlu0 %1392
      %1394 = vrot.lane.b32.xlu0 %v1170, 20
      %v1395 = vpop.permute.xlu0 %1394
      %1396 = vrot.lane.b32.xlu0 %v1171, 20
      %v1397 = vpop.permute.xlu0 %1396
      %1398 = vrot.lane.b32.xlu0 %v1172, 20
      %v1399 = vpop.permute.xlu0 %1398
      %1400 = vrot.lane.b32.xlu0 %v1173, 20
      %v1401 = vpop.permute.xlu0 %1400
      %1402 = vrot.lane.b32.xlu0 %v1174, 20
      %v1403 = vpop.permute.xlu0 %1402
      %vm1436 = vcmask 195744
      %1437 = vst.msk [vmem:[#allocation3] sm:$0xff] %vm1436, %v1341
      %1438 = vst.msk [vmem:[#allocation3 + $0x8] sm:$0xff] %vm1436, %v1343
      %1439 = vst.msk [vmem:[#allocation3 + $0x10] sm:$0xff] %vm1436, %v1345
      %1440 = vst.msk [vmem:[#allocation3 + $0x18] sm:$0xff] %vm1436, %v1347
      %1441 = vst.msk [vmem:[#allocation3 + $0x20] sm:$0xff] %vm1436, %v1349
      %1442 = vst.msk [vmem:[#allocation3 + $0x28] sm:$0xff] %vm1436, %v1351
      %1443 = vst.msk [vmem:[#allocation3 + $0x30] sm:$0xff] %vm1436, %v1353
      %1444 = vst.msk [vmem:[#allocation3 + $0x38] sm:$0xff] %vm1436, %v1355
      %1445 = vst.msk [vmem:[#allocation3 + $0x40] sm:$0xff] %vm1436, %v1357
      %1446 = vst.msk [vmem:[#allocation3 + $0x48] sm:$0xff] %vm1436, %v1359
      %1447 = vst.msk [vmem:[#allocation3 + $0x50] sm:$0xff] %vm1436, %v1361
      %1448 = vst.msk [vmem:[#allocation3 + $0x58] sm:$0xff] %vm1436, %v1363
      %1449 = vst.msk [vmem:[#allocation3 + $0x60] sm:$0xff] %vm1436, %v1365
      %1450 = vst.msk [vmem:[#allocation3 + $0x68] sm:$0xff] %vm1436, %v1367
      %1451 = vst.msk [vmem:[#allocation3 + $0x70] sm:$0xff] %vm1436, %v1369
      %1452 = vst.msk [vmem:[#allocation3 + $0x78] sm:$0xff] %vm1436, %v1371
      %1453 = vst.msk [vmem:[#allocation3 + $0x80] sm:$0xff] %vm1436, %v1373
      %1454 = vst.msk [vmem:[#allocation3 + $0x88] sm:$0xff] %vm1436, %v1375
      %1455 = vst.msk [vmem:[#allocation3 + $0x90] sm:$0xff] %vm1436, %v1377
      %1456 = vst.msk [vmem:[#allocation3 + $0x98] sm:$0xff] %vm1436, %v1379
      %1457 = vst.msk [vmem:[#allocation3 + $0xa0] sm:$0xff] %vm1436, %v1381
      %1458 = vst.msk [vmem:[#allocation3 + $0xa8] sm:$0xff] %vm1436, %v1383
      %1459 = vst.msk [vmem:[#allocation3 + $0xb0] sm:$0xff] %vm1436, %v1385
      %1460 = vst.msk [vmem:[#allocation3 + $0xb8] sm:$0xff] %vm1436, %v1387
      %1461 = vst.msk [vmem:[#allocation3 + $0xc0] sm:$0xff] %vm1436, %v1389
      %1462 = vst.msk [vmem:[#allocation3 + $0xc8] sm:$0xff] %vm1436, %v1391
      %1463 = vst.msk [vmem:[#allocation3 + $0xd0] sm:$0xff] %vm1436, %v1393
      %1464 = vst.msk [vmem:[#allocation3 + $0xd8] sm:$0xff] %vm1436, %v1395
      %1465 = vst.msk [vmem:[#allocation3 + $0xe0] sm:$0xff] %vm1436, %v1397
      %1466 = vst.msk [vmem:[#allocation3 + $0xe8] sm:$0xff] %vm1436, %v1399
      %1467 = vst.msk [vmem:[#allocation3 + $0xf0] sm:$0xff] %vm1436, %v1401
      %1468 = vst.msk [vmem:[#allocation3 + $0xf8] sm:$0xff] %vm1436, %v1403
      %1471 = vrot.lane.b32.xlu0 %v1145, 32
      %v1472 = vpop.permute.xlu0 %1471
      %1473 = vrot.lane.b32.xlu0 %v1146, 32
      %v1474 = vpop.permute.xlu0 %1473
      %1475 = vrot.lane.b32.xlu0 %v1147, 32
      %v1476 = vpop.permute.xlu0 %1475
      %1477 = vrot.lane.b32.xlu0 %v1148, 32
      %v1478 = vpop.permute.xlu0 %1477
      %1479 = vrot.lane.b32.xlu0 %v1149, 32
      %v1480 = vpop.permute.xlu0 %1479
      %1481 = vrot.lane.b32.xlu0 %v1150, 32
      %v1482 = vpop.permute.xlu0 %1481
      %1483 = vrot.lane.b32.xlu0 %v1151, 32
      %v1484 = vpop.permute.xlu0 %1483
      %1485 = vrot.lane.b32.xlu0 %v1152, 32
      %v1486 = vpop.permute.xlu0 %1485
      %1487 = vrot.lane.b32.xlu0 %v1153, 32
      %v1488 = vpop.permute.xlu0 %1487
      %1489 = vrot.lane.b32.xlu0 %v1154, 32
      %v1490 = vpop.permute.xlu0 %1489
      %1491 = vrot.lane.b32.xlu0 %v1155, 32
      %v1492 = vpop.permute.xlu0 %1491
      %1493 = vrot.lane.b32.xlu0 %v1156, 32
      %v1494 = vpop.permute.xlu0 %1493
      %1495 = vrot.lane.b32.xlu0 %v1157, 32
      %v1496 = vpop.permute.xlu0 %1495
      %1497 = vrot.lane.b32.xlu0 %v1158, 32
      %v1498 = vpop.permute.xlu0 %1497
      %1499 = vrot.lane.b32.xlu0 %v1159, 32
      %v1500 = vpop.permute.xlu0 %1499
      %1501 = vrot.lane.b32.xlu0 %v1160, 32
      %v1502 = vpop.permute.xlu0 %1501
      %1503 = vrot.lane.b32.xlu0 %v1161, 32
      %v1504 = vpop.permute.xlu0 %1503
      %1505 = vrot.lane.b32.xlu0 %v1162, 32
      %v1506 = vpop.permute.xlu0 %1505
      %1507 = vrot.lane.b32.xlu0 %v1163, 32
      %v1508 = vpop.permute.xlu0 %1507
      %1509 = vrot.lane.b32.xlu0 %v1164, 32
      %v1510 = vpop.permute.xlu0 %1509
      %1511 = vrot.lane.b32.xlu0 %v1165, 32
      %v1512 = vpop.permute.xlu0 %1511
      %1513 = vrot.lane.b32.xlu0 %v1166, 32
      %v1514 = vpop.permute.xlu0 %1513
      %1515 = vrot.lane.b32.xlu0 %v1167, 32
      %v1516 = vpop.permute.xlu0 %1515
      %1517 = vrot.lane.b32.xlu0 %v1168, 32
      %v1518 = vpop.permute.xlu0 %1517
      %1519 = vrot.lane.b32.xlu0 %v1169, 32
      %v1520 = vpop.permute.xlu0 %1519
      %1521 = vrot.lane.b32.xlu0 %v1170, 32
      %v1522 = vpop.permute.xlu0 %1521
      %1523 = vrot.lane.b32.xlu0 %v1171, 32
      %v1524 = vpop.permute.xlu0 %1523
      %1525 = vrot.lane.b32.xlu0 %v1172, 32
      %v1526 = vpop.permute.xlu0 %1525
      %1527 = vrot.lane.b32.xlu0 %v1173, 32
      %v1528 = vpop.permute.xlu0 %1527
      %1529 = vrot.lane.b32.xlu0 %v1174, 32
      %v1530 = vpop.permute.xlu0 %1529
      %1531 = vrot.lane.b32.xlu0 %v1175, 32
      %v1532 = vpop.permute.xlu0 %1531
      %1533 = vrot.lane.b32.xlu0 %v1176, 32
      %v1534 = vpop.permute.xlu0 %1533
      %vm1567 = vcmask 294144
      %1568 = vst.msk [vmem:[#allocation3] sm:$0xff] %vm1567, %v1472
      %1569 = vst.msk [vmem:[#allocation3 + $0x8] sm:$0xff] %vm1567, %v1474
      %1570 = vst.msk [vmem:[#allocation3 + $0x10] sm:$0xff] %vm1567, %v1476
      %1571 = vst.msk [vmem:[#allocation3 + $0x18] sm:$0xff] %vm1567, %v1478
      %1572 = vst.msk [vmem:[#allocation3 + $0x20] sm:$0xff] %vm1567, %v1480
      %1573 = vst.msk [vmem:[#allocation3 + $0x28] sm:$0xff] %vm1567, %v1482
      %1574 = vst.msk [vmem:[#allocation3 + $0x30] sm:$0xff] %vm1567, %v1484
      %1575 = vst.msk [vmem:[#allocation3 + $0x38] sm:$0xff] %vm1567, %v1486
      %1576 = vst.msk [vmem:[#allocation3 + $0x40] sm:$0xff] %vm1567, %v1488
      %1577 = vst.msk [vmem:[#allocation3 + $0x48] sm:$0xff] %vm1567, %v1490
      %1578 = vst.msk [vmem:[#allocation3 + $0x50] sm:$0xff] %vm1567, %v1492
      %1579 = vst.msk [vmem:[#allocation3 + $0x58] sm:$0xff] %vm1567, %v1494
      %1580 = vst.msk [vmem:[#allocation3 + $0x60] sm:$0xff] %vm1567, %v1496
      %1581 = vst.msk [vmem:[#allocation3 + $0x68] sm:$0xff] %vm1567, %v1498
      %1582 = vst.msk [vmem:[#allocation3 + $0x70] sm:$0xff] %vm1567, %v1500
      %1583 = vst.msk [vmem:[#allocation3 + $0x78] sm:$0xff] %vm1567, %v1502
      %1584 = vst.msk [vmem:[#allocation3 + $0x80] sm:$0xff] %vm1567, %v1504
      %1585 = vst.msk [vmem:[#allocation3 + $0x88] sm:$0xff] %vm1567, %v1506
      %1586 = vst.msk [vmem:[#allocation3 + $0x90] sm:$0xff] %vm1567, %v1508
      %1587 = vst.msk [vmem:[#allocation3 + $0x98] sm:$0xff] %vm1567, %v1510
      %1588 = vst.msk [vmem:[#allocation3 + $0xa0] sm:$0xff] %vm1567, %v1512
      %1589 = vst.msk [vmem:[#allocation3 + $0xa8] sm:$0xff] %vm1567, %v1514
      %1590 = vst.msk [vmem:[#allocation3 + $0xb0] sm:$0xff] %vm1567, %v1516
      %1591 = vst.msk [vmem:[#allocation3 + $0xb8] sm:$0xff] %vm1567, %v1518
      %1592 = vst.msk [vmem:[#allocation3 + $0xc0] sm:$0xff] %vm1567, %v1520
      %1593 = vst.msk [vmem:[#allocation3 + $0xc8] sm:$0xff] %vm1567, %v1522
      %1594 = vst.msk [vmem:[#allocation3 + $0xd0] sm:$0xff] %vm1567, %v1524
      %1595 = vst.msk [vmem:[#allocation3 + $0xd8] sm:$0xff] %vm1567, %v1526
      %1596 = vst.msk [vmem:[#allocation3 + $0xe0] sm:$0xff] %vm1567, %v1528
      %1597 = vst.msk [vmem:[#allocation3 + $0xe8] sm:$0xff] %vm1567, %v1530
      %1598 = vst.msk [vmem:[#allocation3 + $0xf0] sm:$0xff] %vm1567, %v1532
      %1599 = vst.msk [vmem:[#allocation3 + $0xf8] sm:$0xff] %vm1567, %v1534
      %v1600 = vld [vmem:[#allocation3] sm:$0xff]
      %v1601 = vld [vmem:[#allocation3 + $0x8] sm:$0xff]
      %v1602 = vld [vmem:[#allocation3 + $0x10] sm:$0xff]
      %v1603 = vld [vmem:[#allocation3 + $0x18] sm:$0xff]
      %v1604 = vld [vmem:[#allocation3 + $0x20] sm:$0xff]
      %v1605 = vld [vmem:[#allocation3 + $0x28] sm:$0xff]
      %v1606 = vld [vmem:[#allocation3 + $0x30] sm:$0xff]
      %v1607 = vld [vmem:[#allocation3 + $0x38] sm:$0xff]
      %v1608 = vld [vmem:[#allocation3 + $0x40] sm:$0xff]
      %v1609 = vld [vmem:[#allocation3 + $0x48] sm:$0xff]
      %v1610 = vld [vmem:[#allocation3 + $0x50] sm:$0xff]
      %v1611 = vld [vmem:[#allocation3 + $0x58] sm:$0xff]
      %v1612 = vld [vmem:[#allocation3 + $0x60] sm:$0xff]
      %v1613 = vld [vmem:[#allocation3 + $0x68] sm:$0xff]
      %v1614 = vld [vmem:[#allocation3 + $0x70] sm:$0xff]
      %v1615 = vld [vmem:[#allocation3 + $0x78] sm:$0xff]
      %v1616 = vld [vmem:[#allocation3 + $0x80] sm:$0xff]
      %v1617 = vld [vmem:[#allocation3 + $0x88] sm:$0xff]
      %v1618 = vld [vmem:[#allocation3 + $0x90] sm:$0xff]
      %v1619 = vld [vmem:[#allocation3 + $0x98] sm:$0xff]
      %v1620 = vld [vmem:[#allocation3 + $0xa0] sm:$0xff]
      %v1621 = vld [vmem:[#allocation3 + $0xa8] sm:$0xff]
      %v1622 = vld [vmem:[#allocation3 + $0xb0] sm:$0xff]
      %v1623 = vld [vmem:[#allocation3 + $0xb8] sm:$0xff]
      %v1624 = vld [vmem:[#allocation3 + $0xc0] sm:$0xff]
      %v1625 = vld [vmem:[#allocation3 + $0xc8] sm:$0xff]
      %v1626 = vld [vmem:[#allocation3 + $0xd0] sm:$0xff]
      %v1627 = vld [vmem:[#allocation3 + $0xd8] sm:$0xff]
      %v1628 = vld [vmem:[#allocation3 + $0xe0] sm:$0xff]
      %v1629 = vld [vmem:[#allocation3 + $0xe8] sm:$0xff]
      %v1630 = vld [vmem:[#allocation3 + $0xf0] sm:$0xff]
      %v1631 = vld [vmem:[#allocation3 + $0xf8] sm:$0xff]
      %vm1632 = vcmask 293888
      %v1634 = vsel %vm1632, %v1600, 0
      %v1637 = vsel %vm1632, %v1601, 0
      %v1640 = vsel %vm1632, %v1602, 0
      %v1643 = vsel %vm1632, %v1603, 0
      %v1646 = vsel %vm1632, %v1604, 0
      %v1649 = vsel %vm1632, %v1605, 0
      %v1652 = vsel %vm1632, %v1606, 0
      %v1655 = vsel %vm1632, %v1607, 0
      %v1658 = vsel %vm1632, %v1608, 0
      %v1661 = vsel %vm1632, %v1609, 0
      %v1664 = vsel %vm1632, %v1610, 0
      %v1667 = vsel %vm1632, %v1611, 0
      %v1670 = vsel %vm1632, %v1612, 0
      %v1673 = vsel %vm1632, %v1613, 0
      %v1676 = vsel %vm1632, %v1614, 0
      %v1679 = vsel %vm1632, %v1615, 0
      %v1682 = vsel %vm1632, %v1616, 0
      %v1685 = vsel %vm1632, %v1617, 0
      %v1688 = vsel %vm1632, %v1618, 0
      %v1691 = vsel %vm1632, %v1619, 0
      %v1694 = vsel %vm1632, %v1620, 0
      %v1697 = vsel %vm1632, %v1621, 0
      %v1700 = vsel %vm1632, %v1622, 0
      %v1703 = vsel %vm1632, %v1623, 0
      %v1706 = vsel %vm1632, %v1624, 0
      %v1709 = vsel %vm1632, %v1625, 0
      %v1712 = vsel %vm1632, %v1626, 0
      %v1715 = vsel %vm1632, %v1627, 0
      %v1718 = vsel %vm1632, %v1628, 0
      %v1721 = vsel %vm1632, %v1629, 0
      %v1724 = vsel %vm1632, %v1630, 0
      %v1727 = vsel %vm1632, %v1631, 0
      %vm1729 = vcmask 1043456
      %v1731 = vsel %vm1729, %v207, 0
      %1733 = vmatprep.subr.mxu0 0.0
      %1734 = vmatpush1.msra.mxu0 0.0
      %1735 = vmatprep.subr.mxu0 0.0
      %1736 = vmatpush1.msra.mxu0 0.0
      %1737 = vmatprep.subr.mxu0 0.0
      %1738 = vmatpush1.msra.mxu0 0.0
      %1739 = vmatprep.subr.mxu0 0.0
      %1740 = vmatpush1.msra.mxu0 0.0
      %1741 = vmatprep.subr.mxu0 0.0
      %1742 = vmatpush1.msra.mxu0 0.0
      %1743 = vmatprep.subr.mxu0 0.0
      %1744 = vmatpush1.msra.mxu0 0.0
      %1745 = vmatprep.subr.mxu0 0.0
      %1746 = vmatpush1.msra.mxu0 0.0
      %1747 = vmatprep.subr.mxu0 0.0
      %1748 = vmatpush1.msra.mxu0 0.0
      %1749 = vmatprep.subr.mxu0 0.0
      %1750 = vmatpush1.msra.mxu0 0.0
      %1751 = vmatprep.subr.mxu0 0.0
      %1752 = vmatpush1.msra.mxu0 0.0
      %1753 = vmatprep.subr.mxu0 0.0
      %1754 = vmatpush1.msra.mxu0 0.0
      %1755 = vmatprep.subr.mxu0 0.0
      %1756 = vmatpush1.msra.mxu0 %v1731
      %1757 = vmatprep.subr.mxu0 0.0
      %1758 = vmatpush1.msra.mxu0 %v206
      %1759 = vmatprep.subr.mxu0 0.0
      %1760 = vmatpush1.msra.mxu0 %v205
      %1761 = vmatprep.subr.mxu0 0.0
      %1762 = vmatpush1.msra.mxu0 %v204
      %1763 = vmatprep.subr.mxu0 0.0
      %1764 = vmatpush1.msra.mxu0 %v203
      %1765 = vmatprep.subr.mxu0 0.0
      %1766 = vmatpush2.msra.mxu0 0.0
      %1767 = vmatprep.subr.mxu0 0.0
      %1768 = vmatpush2.msra.mxu0 0.0
      %1769 = vmatprep.subr.mxu0 0.0
      %1770 = vmatpush2.msra.mxu0 0.0
      %1771 = vmatprep.subr.mxu0 0.0
      %1772 = vmatpush2.msra.mxu0 0.0
      %1773 = vmatprep.subr.mxu0 0.0
      %1774 = vmatpush2.msra.mxu0 0.0
      %1775 = vmatprep.subr.mxu0 0.0
      %1776 = vmatpush2.msra.mxu0 0.0
      %1777 = vmatprep.subr.mxu0 0.0
      %1778 = vmatpush2.msra.mxu0 0.0
      %1779 = vmatprep.subr.mxu0 0.0
      %1780 = vmatpush2.msra.mxu0 0.0
      %1781 = vmatprep.subr.mxu0 0.0
      %1782 = vmatpush2.msra.mxu0 0.0
      %1783 = vmatprep.subr.mxu0 0.0
      %1784 = vmatpush2.msra.mxu0 0.0
      %1785 = vmatprep.subr.mxu0 0.0
      %1786 = vmatpush2.msra.mxu0 0.0
      %1787 = vmatprep.subr.mxu0 0.0
      %1788 = vmatpush2.msra.mxu0 0.0
      %1789 = vmatprep.subr.mxu0 0.0
      %1790 = vmatpush2.msra.mxu0 0.0
      %1791 = vmatprep.subr.mxu0 0.0
      %1792 = vmatpush2.msra.mxu0 0.0
      %1793 = vmatprep.subr.mxu0 0.0
      %1794 = vmatpush2.msra.mxu0 0.0
      %1795 = vmatprep.subr.mxu0 0.0
      %1796 = vmatpush2.msra.mxu0 0.0
      %1797 = vmatprep.mubr.f32.mxu0 0.0
      %1798 = vmatmul.mubr.f32.gmra.mxu0 %v1634
      %v1799 = vpop.f32.mrf.mxu0
      %v1800 = vadd.f32 0.0, %v1799
      %v1801 = vpop.f32.mrf.mxu0
      %1802 = vmatprep.mubr.f32.mxu0 0.0
      %1803 = vmatmul.mubr.f32.gmra.mxu0 %v1637
      %v1804 = vpop.f32.mrf.mxu0
      %v1805 = vadd.f32 0.0, %v1804
      %v1806 = vpop.f32.mrf.mxu0
      %1807 = vmatprep.mubr.f32.mxu0 0.0
      %1808 = vmatmul.mubr.f32.gmra.mxu0 %v1640
      %v1809 = vpop.f32.mrf.mxu0
      %v1810 = vadd.f32 0.0, %v1809
      %v1811 = vpop.f32.mrf.mxu0
      %1812 = vmatprep.mubr.f32.mxu0 0.0
      %1813 = vmatmul.mubr.f32.gmra.mxu0 %v1643
      %v1814 = vpop.f32.mrf.mxu0
      %v1815 = vadd.f32 0.0, %v1814
      %v1816 = vpop.f32.mrf.mxu0
      %1817 = vmatprep.mubr.f32.mxu0 0.0
      %1818 = vmatmul.mubr.f32.gmra.mxu0 %v1646
      %v1819 = vpop.f32.mrf.mxu0
      %v1820 = vadd.f32 0.0, %v1819
      %v1821 = vpop.f32.mrf.mxu0
      %1822 = vmatprep.mubr.f32.mxu0 0.0
      %1823 = vmatmul.mubr.f32.gmra.mxu0 %v1649
      %v1824 = vpop.f32.mrf.mxu0
      %v1825 = vadd.f32 0.0, %v1824
      %v1826 = vpop.f32.mrf.mxu0
      %1827 = vmatprep.mubr.f32.mxu0 0.0
      %1828 = vmatmul.mubr.f32.gmra.mxu0 %v1652
      %v1829 = vpop.f32.mrf.mxu0
      %v1830 = vadd.f32 0.0, %v1829
      %v1831 = vpop.f32.mrf.mxu0
      %1832 = vmatprep.mubr.f32.mxu0 0.0
      %1833 = vmatmul.mubr.f32.gmra.mxu0 %v1655
      %v1834 = vpop.f32.mrf.mxu0
      %v1835 = vadd.f32 0.0, %v1834
      %v1836 = vpop.f32.mrf.mxu0
      %1837 = vmatprep.mubr.f32.mxu0 0.0
      %1838 = vmatmul.mubr.f32.gmra.mxu0 %v1658
      %v1839 = vpop.f32.mrf.mxu0
      %v1840 = vadd.f32 0.0, %v1839
      %v1841 = vpop.f32.mrf.mxu0
      %1842 = vmatprep.mubr.f32.mxu0 0.0
      %1843 = vmatmul.mubr.f32.gmra.mxu0 %v1661
      %v1844 = vpop.f32.mrf.mxu0
      %v1845 = vadd.f32 0.0, %v1844
      %v1846 = vpop.f32.mrf.mxu0
      %1847 = vmatprep.mubr.f32.mxu0 0.0
      %1848 = vmatmul.mubr.f32.gmra.mxu0 %v1664
      %v1849 = vpop.f32.mrf.mxu0
      %v1850 = vadd.f32 0.0, %v1849
      %v1851 = vpop.f32.mrf.mxu0
      %1852 = vmatprep.mubr.f32.mxu0 0.0
      %1853 = vmatmul.mubr.f32.gmra.mxu0 %v1667
      %v1854 = vpop.f32.mrf.mxu0
      %v1855 = vadd.f32 0.0, %v1854
      %v1856 = vpop.f32.mrf.mxu0
      %1857 = vmatprep.mubr.f32.mxu0 0.0
      %1858 = vmatmul.mubr.f32.gmra.mxu0 %v1670
      %v1859 = vpop.f32.mrf.mxu0
      %v1860 = vadd.f32 0.0, %v1859
      %v1861 = vpop.f32.mrf.mxu0
      %1862 = vmatprep.mubr.f32.mxu0 0.0
      %1863 = vmatmul.mubr.f32.gmra.mxu0 %v1673
      %v1864 = vpop.f32.mrf.mxu0
      %v1865 = vadd.f32 0.0, %v1864
      %v1866 = vpop.f32.mrf.mxu0
      %1867 = vmatprep.mubr.f32.mxu0 0.0
      %1868 = vmatmul.mubr.f32.gmra.mxu0 %v1676
      %v1869 = vpop.f32.mrf.mxu0
      %v1870 = vadd.f32 0.0, %v1869
      %v1871 = vpop.f32.mrf.mxu0
      %1872 = vmatprep.mubr.f32.mxu0 0.0
      %1873 = vmatmul.mubr.f32.gmra.mxu0 %v1679
      %v1874 = vpop.f32.mrf.mxu0
      %v1875 = vadd.f32 0.0, %v1874
      %v1876 = vpop.f32.mrf.mxu0
      %1877 = vmatprep.mubr.f32.mxu0 0.0
      %1878 = vmatmul.mubr.f32.gmra.mxu0 %v1682
      %v1879 = vpop.f32.mrf.mxu0
      %v1880 = vadd.f32 0.0, %v1879
      %v1881 = vpop.f32.mrf.mxu0
      %1882 = vmatprep.mubr.f32.mxu0 0.0
      %1883 = vmatmul.mubr.f32.gmra.mxu0 %v1685
      %v1884 = vpop.f32.mrf.mxu0
      %v1885 = vadd.f32 0.0, %v1884
      %v1886 = vpop.f32.mrf.mxu0
      %1887 = vmatprep.mubr.f32.mxu0 0.0
      %1888 = vmatmul.mubr.f32.gmra.mxu0 %v1688
      %v1889 = vpop.f32.mrf.mxu0
      %v1890 = vadd.f32 0.0, %v1889
      %v1891 = vpop.f32.mrf.mxu0
      %1892 = vmatprep.mubr.f32.mxu0 0.0
      %1893 = vmatmul.mubr.f32.gmra.mxu0 %v1691
      %v1894 = vpop.f32.mrf.mxu0
      %v1895 = vadd.f32 0.0, %v1894
      %v1896 = vpop.f32.mrf.mxu0
      %1897 = vmatprep.mubr.f32.mxu0 0.0
      %1898 = vmatmul.mubr.f32.gmra.mxu0 %v1694
      %v1899 = vpop.f32.mrf.mxu0
      %v1900 = vadd.f32 0.0, %v1899
      %v1901 = vpop.f32.mrf.mxu0
      %1902 = vmatprep.mubr.f32.mxu0 0.0
      %1903 = vmatmul.mubr.f32.gmra.mxu0 %v1697
      %v1904 = vpop.f32.mrf.mxu0
      %v1905 = vadd.f32 0.0, %v1904
      %v1906 = vpop.f32.mrf.mxu0
      %1907 = vmatprep.mubr.f32.mxu0 0.0
      %1908 = vmatmul.mubr.f32.gmra.mxu0 %v1700
      %v1909 = vpop.f32.mrf.mxu0
      %v1910 = vadd.f32 0.0, %v1909
      %v1911 = vpop.f32.mrf.mxu0
      %1912 = vmatprep.mubr.f32.mxu0 0.0
      %1913 = vmatmul.mubr.f32.gmra.mxu0 %v1703
      %v1914 = vpop.f32.mrf.mxu0
      %v1915 = vadd.f32 0.0, %v1914
      %v1916 = vpop.f32.mrf.mxu0
      %1917 = vmatprep.mubr.f32.mxu0 0.0
      %1918 = vmatmul.mubr.f32.gmra.mxu0 %v1706
      %v1919 = vpop.f32.mrf.mxu0
      %v1920 = vadd.f32 0.0, %v1919
      %v1921 = vpop.f32.mrf.mxu0
      %1922 = vmatprep.mubr.f32.mxu0 0.0
      %1923 = vmatmul.mubr.f32.gmra.mxu0 %v1709
      %v1924 = vpop.f32.mrf.mxu0
      %v1925 = vadd.f32 0.0, %v1924
      %v1926 = vpop.f32.mrf.mxu0
      %1927 = vmatprep.mubr.f32.mxu0 0.0
      %1928 = vmatmul.mubr.f32.gmra.mxu0 %v1712
      %v1929 = vpop.f32.mrf.mxu0
      %v1930 = vadd.f32 0.0, %v1929
      %v1931 = vpop.f32.mrf.mxu0
      %1932 = vmatprep.mubr.f32.mxu0 0.0
      %1933 = vmatmul.mubr.f32.gmra.mxu0 %v1715
      %v1934 = vpop.f32.mrf.mxu0
      %v1935 = vadd.f32 0.0, %v1934
      %v1936 = vpop.f32.mrf.mxu0
      %1937 = vmatprep.mubr.f32.mxu0 0.0
      %1938 = vmatmul.mubr.f32.gmra.mxu0 %v1718
      %v1939 = vpop.f32.mrf.mxu0
      %v1940 = vadd.f32 0.0, %v1939
      %v1941 = vpop.f32.mrf.mxu0
      %1942 = vmatprep.mubr.f32.mxu0 0.0
      %1943 = vmatmul.mubr.f32.gmra.mxu0 %v1721
      %v1944 = vpop.f32.mrf.mxu0
      %v1945 = vadd.f32 0.0, %v1944
      %v1946 = vpop.f32.mrf.mxu0
      %1947 = vmatprep.mubr.f32.mxu0 0.0
      %1948 = vmatmul.mubr.f32.gmra.mxu0 %v1724
      %v1949 = vpop.f32.mrf.mxu0
      %v1950 = vadd.f32 0.0, %v1949
      %v1951 = vpop.f32.mrf.mxu0
      %1952 = vmatprep.mubr.f32.mxu0 0.0
      %1953 = vmatmul.mubr.f32.gmra.mxu0 %v1727
      %v1954 = vpop.f32.mrf.mxu0
      %v1955 = vadd.f32 0.0, %v1954
      %v1956 = vpop.f32.mrf.mxu0
      %1957 = vdwg.mxu0
      %v1958 = vsel %vm211, %v1800, 0.0
      %v1959 = vsel %vm211, %v1805, 0.0
      %v1960 = vadd.f32 %v1958, %v1959
      %v1961 = vsel %vm211, %v1810, 0.0
      %v1962 = vadd.f32 %v1960, %v1961
      %v1963 = vsel %vm211, %v1815, 0.0
      %v1964 = vadd.f32 %v1962, %v1963
      %v1965 = vsel %vm211, %v1820, 0.0
      %v1966 = vadd.f32 %v1964, %v1965
      %v1967 = vsel %vm211, %v1825, 0.0
      %v1968 = vadd.f32 %v1966, %v1967
      %v1969 = vsel %vm211, %v1830, 0.0
      %v1970 = vadd.f32 %v1968, %v1969
      %v1971 = vsel %vm211, %v1835, 0.0
      %v1972 = vadd.f32 %v1970, %v1971
      %v1973 = vsel %vm211, %v1840, 0.0
      %v1974 = vadd.f32 %v1972, %v1973
      %v1975 = vsel %vm211, %v1845, 0.0
      %v1976 = vadd.f32 %v1974, %v1975
      %v1977 = vsel %vm211, %v1850, 0.0
      %v1978 = vadd.f32 %v1976, %v1977
      %v1979 = vsel %vm211, %v1855, 0.0
      %v1980 = vadd.f32 %v1978, %v1979
      %v1981 = vsel %vm211, %v1860, 0.0
      %v1982 = vadd.f32 %v1980, %v1981
      %v1983 = vsel %vm211, %v1865, 0.0
      %v1984 = vadd.f32 %v1982, %v1983
      %v1985 = vsel %vm211, %v1870, 0.0
      %v1986 = vadd.f32 %v1984, %v1985
      %v1987 = vsel %vm211, %v1875, 0.0
      %v1988 = vadd.f32 %v1986, %v1987
      %v1989 = vsel %vm211, %v1880, 0.0
      %v1990 = vadd.f32 %v1988, %v1989
      %v1991 = vsel %vm211, %v1885, 0.0
      %v1992 = vadd.f32 %v1990, %v1991
      %v1993 = vsel %vm211, %v1890, 0.0
      %v1994 = vadd.f32 %v1992, %v1993
      %v1995 = vsel %vm211, %v1895, 0.0
      %v1996 = vadd.f32 %v1994, %v1995
      %v1997 = vsel %vm211, %v1900, 0.0
      %v1998 = vadd.f32 %v1996, %v1997
      %v1999 = vsel %vm211, %v1905, 0.0
      %v2000 = vadd.f32 %v1998, %v1999
      %v2001 = vsel %vm211, %v1910, 0.0
      %v2002 = vadd.f32 %v2000, %v2001
      %v2003 = vsel %vm211, %v1915, 0.0
      %v2004 = vadd.f32 %v2002, %v2003
      %v2005 = vsel %vm211, %v1920, 0.0
      %v2006 = vadd.f32 %v2004, %v2005
      %v2007 = vsel %vm211, %v1925, 0.0
      %v2008 = vadd.f32 %v2006, %v2007
      %v2009 = vsel %vm211, %v1930, 0.0
      %v2010 = vadd.f32 %v2008, %v2009
      %v2011 = vsel %vm211, %v1935, 0.0
      %v2012 = vadd.f32 %v2010, %v2011
      %v2013 = vsel %vm211, %v1940, 0.0
      %v2014 = vadd.f32 %v2012, %v2013
      %v2015 = vsel %vm211, %v1945, 0.0
      %v2016 = vadd.f32 %v2014, %v2015
      %v2017 = vsel %vm211, %v1950, 0.0
      %v2018 = vadd.f32 %v2016, %v2017
      %v2019 = vsel %vm211, %v1955, 0.0
      %v2020 = vadd.f32 %v2018, %v2019
      %v2021 = vrot.slane %v2020, 4
      %v2022 = vadd.f32 %v2020, %v2021
      %v2023 = vrot.slane %v2022, 2
      %v2024 = vadd.f32 %v2022, %v2023
      %v2025 = vrot.slane %v2024, 1
      %v2026 = vadd.f32 %v2024, %v2025
      %v2027 = vmul.f32 %v1800, %v1800
      %v2028 = vmul.f32 %v1805, %v1805
      %v2029 = vmul.f32 %v1810, %v1810
      %v2030 = vmul.f32 %v1815, %v1815
      %v2031 = vmul.f32 %v1820, %v1820
      %v2032 = vmul.f32 %v1825, %v1825
      %v2033 = vmul.f32 %v1830, %v1830
      %v2034 = vmul.f32 %v1835, %v1835
      %v2035 = vmul.f32 %v1840, %v1840
      %v2036 = vmul.f32 %v1845, %v1845
      %v2037 = vmul.f32 %v1850, %v1850
      %v2038 = vmul.f32 %v1855, %v1855
      %v2039 = vmul.f32 %v1860, %v1860
      %v2040 = vmul.f32 %v1865, %v1865
      %v2041 = vmul.f32 %v1870, %v1870
      %v2042 = vmul.f32 %v1875, %v1875
      %v2043 = vmul.f32 %v1880, %v1880
      %v2044 = vmul.f32 %v1885, %v1885
      %v2045 = vmul.f32 %v1890, %v1890
      %v2046 = vmul.f32 %v1895, %v1895
      %v2047 = vmul.f32 %v1900, %v1900
      %v2048 = vmul.f32 %v1905, %v1905
      %v2049 = vmul.f32 %v1910, %v1910
      %v2050 = vmul.f32 %v1915, %v1915
      %v2051 = vmul.f32 %v1920, %v1920
      %v2052 = vmul.f32 %v1925, %v1925
      %v2053 = vmul.f32 %v1930, %v1930
      %v2054 = vmul.f32 %v1935, %v1935
      %v2055 = vmul.f32 %v1940, %v1940
      %v2056 = vmul.f32 %v1945, %v1945
      %v2057 = vmul.f32 %v1950, %v1950
      %v2058 = vmul.f32 %v1955, %v1955
      %v2059 = vsel %vm211, %v2027, 0.0
      %v2060 = vsel %vm211, %v2028, 0.0
      %v2061 = vadd.f32 %v2059, %v2060
      %v2062 = vsel %vm211, %v2029, 0.0
      %v2063 = vadd.f32 %v2061, %v2062
      %v2064 = vsel %vm211, %v2030, 0.0
      %v2065 = vadd.f32 %v2063, %v2064
      %v2066 = vsel %vm211, %v2031, 0.0
      %v2067 = vadd.f32 %v2065, %v2066
      %v2068 = vsel %vm211, %v2032, 0.0
      %v2069 = vadd.f32 %v2067, %v2068
      %v2070 = vsel %vm211, %v2033, 0.0
      %v2071 = vadd.f32 %v2069, %v2070
      %v2072 = vsel %vm211, %v2034, 0.0
      %v2073 = vadd.f32 %v2071, %v2072
      %v2074 = vsel %vm211, %v2035, 0.0
      %v2075 = vadd.f32 %v2073, %v2074
      %v2076 = vsel %vm211, %v2036, 0.0
      %v2077 = vadd.f32 %v2075, %v2076
      %v2078 = vsel %vm211, %v2037, 0.0
      %v2079 = vadd.f32 %v2077, %v2078
      %v2080 = vsel %vm211, %v2038, 0.0
      %v2081 = vadd.f32 %v2079, %v2080
      %v2082 = vsel %vm211, %v2039, 0.0
      %v2083 = vadd.f32 %v2081, %v2082
      %v2084 = vsel %vm211, %v2040, 0.0
      %v2085 = vadd.f32 %v2083, %v2084
      %v2086 = vsel %vm211, %v2041, 0.0
      %v2087 = vadd.f32 %v2085, %v2086
      %v2088 = vsel %vm211, %v2042, 0.0
      %v2089 = vadd.f32 %v2087, %v2088
      %v2090 = vsel %vm211, %v2043, 0.0
      %v2091 = vadd.f32 %v2089, %v2090
      %v2092 = vsel %vm211, %v2044, 0.0
      %v2093 = vadd.f32 %v2091, %v2092
      %v2094 = vsel %vm211, %v2045, 0.0
      %v2095 = vadd.f32 %v2093, %v2094
      %v2096 = vsel %vm211, %v2046, 0.0
      %v2097 = vadd.f32 %v2095, %v2096
      %v2098 = vsel %vm211, %v2047, 0.0
      %v2099 = vadd.f32 %v2097, %v2098
      %v2100 = vsel %vm211, %v2048, 0.0
      %v2101 = vadd.f32 %v2099, %v2100
      %v2102 = vsel %vm211, %v2049, 0.0
      %v2103 = vadd.f32 %v2101, %v2102
      %v2104 = vsel %vm211, %v2050, 0.0
      %v2105 = vadd.f32 %v2103, %v2104
      %v2106 = vsel %vm211, %v2051, 0.0
      %v2107 = vadd.f32 %v2105, %v2106
      %v2108 = vsel %vm211, %v2052, 0.0
      %v2109 = vadd.f32 %v2107, %v2108
      %v2110 = vsel %vm211, %v2053, 0.0
      %v2111 = vadd.f32 %v2109, %v2110
      %v2112 = vsel %vm211, %v2054, 0.0
      %v2113 = vadd.f32 %v2111, %v2112
      %v2114 = vsel %vm211, %v2055, 0.0
      %v2115 = vadd.f32 %v2113, %v2114
      %v2116 = vsel %vm211, %v2056, 0.0
      %v2117 = vadd.f32 %v2115, %v2116
      %v2118 = vsel %vm211, %v2057, 0.0
      %v2119 = vadd.f32 %v2117, %v2118
      %v2120 = vsel %vm211, %v2058, 0.0
      %v2121 = vadd.f32 %v2119, %v2120
      %v2122 = vrot.slane %v2121, 4
      %v2123 = vadd.f32 %v2121, %v2122
      %v2124 = vrot.slane %v2123, 2
      %v2125 = vadd.f32 %v2123, %v2124
      %v2126 = vrot.slane %v2125, 1
      %v2127 = vadd.f32 %v2125, %v2126
      %v2128 = vmul.f32 %v2026, 0.00390625
      %v2129 = vmul.f32 %v2127, 0.00390625
      %v2130 = vmul.f32 %v2128, %v2128
      %v2131 = vsub.f32 %v2129, %v2130
      %v2132 = vmax.f32 %v2131, 0.0
      %v2133 = vadd.f32 %v2132, 1e-05
      %v2134 = vrsqrt.pop %v2133
      %v2135 = vmul.f32 %v208, %v2134
      %v2136 = vmul.f32 %v2128, %v2135
      %v2137 = vsub.f32 %v209, %v2136
      %v2138 = vlaneseq
      %v2139 = vshrl.u32 %v2138, 7
      %v2140 = vsub.s32 0, %v2139
      %v2141 = vrot.slane %v2135, %v2140
      %v2142 = vmul.f32 %v1800, %v2141
      %v2143 = vmul.f32 %v1805, %v2141
      %v2144 = vmul.f32 %v1810, %v2141
      %v2145 = vmul.f32 %v1815, %v2141
      %v2146 = vmul.f32 %v1820, %v2141
      %v2147 = vmul.f32 %v1825, %v2141
      %v2148 = vmul.f32 %v1830, %v2141
      %v2149 = vmul.f32 %v1835, %v2141
      %v2150 = vmul.f32 %v1840, %v2141
      %v2151 = vmul.f32 %v1845, %v2141
      %v2152 = vmul.f32 %v1850, %v2141
      %v2153 = vmul.f32 %v1855, %v2141
      %v2154 = vmul.f32 %v1860, %v2141
      %v2155 = vmul.f32 %v1865, %v2141
      %v2156 = vmul.f32 %v1870, %v2141
      %v2157 = vmul.f32 %v1875, %v2141
      %v2158 = vmul.f32 %v1880, %v2141
      %v2159 = vmul.f32 %v1885, %v2141
      %v2160 = vmul.f32 %v1890, %v2141
      %v2161 = vmul.f32 %v1895, %v2141
      %v2162 = vmul.f32 %v1900, %v2141
      %v2163 = vmul.f32 %v1905, %v2141
      %v2164 = vmul.f32 %v1910, %v2141
      %v2165 = vmul.f32 %v1915, %v2141
      %v2166 = vmul.f32 %v1920, %v2141
      %v2167 = vmul.f32 %v1925, %v2141
      %v2168 = vmul.f32 %v1930, %v2141
      %v2169 = vmul.f32 %v1935, %v2141
      %v2170 = vmul.f32 %v1940, %v2141
      %v2171 = vmul.f32 %v1945, %v2141
      %v2172 = vmul.f32 %v1950, %v2141
      %v2173 = vmul.f32 %v1955, %v2141
      %v2174 = vlaneseq
      %v2175 = vshrl.u32 %v2174, 7
      %v2176 = vsub.s32 0, %v2175
      %v2177 = vrot.slane %v2137, %v2176
      %v2178 = vadd.f32 %v2142, %v2177
      %v2179 = vadd.f32 %v2143, %v2177
      %v2180 = vadd.f32 %v2144, %v2177
      %v2181 = vadd.f32 %v2145, %v2177
      %v2182 = vadd.f32 %v2146, %v2177
      %v2183 = vadd.f32 %v2147, %v2177
      %v2184 = vadd.f32 %v2148, %v2177
      %v2185 = vadd.f32 %v2149, %v2177
      %v2186 = vadd.f32 %v2150, %v2177
      %v2187 = vadd.f32 %v2151, %v2177
      %v2188 = vadd.f32 %v2152, %v2177
      %v2189 = vadd.f32 %v2153, %v2177
      %v2190 = vadd.f32 %v2154, %v2177
      %v2191 = vadd.f32 %v2155, %v2177
      %v2192 = vadd.f32 %v2156, %v2177
      %v2193 = vadd.f32 %v2157, %v2177
      %v2194 = vadd.f32 %v2158, %v2177
      %v2195 = vadd.f32 %v2159, %v2177
      %v2196 = vadd.f32 %v2160, %v2177
      %v2197 = vadd.f32 %v2161, %v2177
      %v2198 = vadd.f32 %v2162, %v2177
      %v2199 = vadd.f32 %v2163, %v2177
      %v2200 = vadd.f32 %v2164, %v2177
      %v2201 = vadd.f32 %v2165, %v2177
      %v2202 = vadd.f32 %v2166, %v2177
      %v2203 = vadd.f32 %v2167, %v2177
      %v2204 = vadd.f32 %v2168, %v2177
      %v2205 = vadd.f32 %v2169, %v2177
      %v2206 = vadd.f32 %v2170, %v2177
      %v2207 = vadd.f32 %v2171, %v2177
      %v2208 = vadd.f32 %v2172, %v2177
      %v2209 = vadd.f32 %v2173, %v2177
      %v2210 = vmax.f32 %v2178, 0.0
      %v2211 = vmax.f32 %v2179, 0.0
      %v2212 = vmax.f32 %v2180, 0.0
      %v2213 = vmax.f32 %v2181, 0.0
      %v2214 = vmax.f32 %v2182, 0.0
      %v2215 = vmax.f32 %v2183, 0.0
      %v2216 = vmax.f32 %v2184, 0.0
      %v2217 = vmax.f32 %v2185, 0.0
      %v2218 = vmax.f32 %v2186, 0.0
      %v2219 = vmax.f32 %v2187, 0.0
      %v2220 = vmax.f32 %v2188, 0.0
      %v2221 = vmax.f32 %v2189, 0.0
      %v2222 = vmax.f32 %v2190, 0.0
      %v2223 = vmax.f32 %v2191, 0.0
      %v2224 = vmax.f32 %v2192, 0.0
      %v2225 = vmax.f32 %v2193, 0.0
      %v2226 = vmax.f32 %v2194, 0.0
      %v2227 = vmax.f32 %v2195, 0.0
      %v2228 = vmax.f32 %v2196, 0.0
      %v2229 = vmax.f32 %v2197, 0.0
      %v2230 = vmax.f32 %v2198, 0.0
      %v2231 = vmax.f32 %v2199, 0.0
      %v2232 = vmax.f32 %v2200, 0.0
      %v2233 = vmax.f32 %v2201, 0.0
      %v2234 = vmax.f32 %v2202, 0.0
      %v2235 = vmax.f32 %v2203, 0.0
      %v2236 = vmax.f32 %v2204, 0.0
      %v2237 = vmax.f32 %v2205, 0.0
      %v2238 = vmax.f32 %v2206, 0.0
      %v2239 = vmax.f32 %v2207, 0.0
      %v2240 = vmax.f32 %v2208, 0.0
      %v2241 = vmax.f32 %v2209, 0.0
      %s2242 = scalar_lea.vmem %s1, 40
      %v2243 = vld [vmem:[%s2242] sm:$0xff]
      %v2244 = vld [vmem:[%s2242 + $0x8] sm:$0xff]
      %v2245 = vld [vmem:[%s2242 + $0x10] sm:$0xff]
      %v2246 = vld [vmem:[%s2242 + $0x18] sm:$0xff]
      %v2247 = vld [vmem:[%s2242 + $0x20] sm:$0xf]
      %v2248 = vld [vmem:[%s2 + $0x2] sm:$0x1]
      %v2249 = vld [vmem:[%s2 + $0x3] sm:$0x1]
      %2250 = vst.msk [vmem:[%s210 + $0x1] sm:$0xff] %vm211, %v2210
      %2251 = vst.msk [vmem:[%s210 + $0x9] sm:$0xff] %vm211, %v2211
      %2252 = vst.msk [vmem:[%s210 + $0x19] sm:$0xff] %vm211, %v2212
      %2253 = vst.msk [vmem:[%s210 + $0x21] sm:$0xff] %vm211, %v2213
      %2254 = vst.msk [vmem:[%s210 + $0x31] sm:$0xff] %vm211, %v2214
      %2255 = vst.msk [vmem:[%s210 + $0x39] sm:$0xff] %vm211, %v2215
      %2256 = vst.msk [vmem:[%s210 + $0x49] sm:$0xff] %vm211, %v2216
      %2257 = vst.msk [vmem:[%s210 + $0x51] sm:$0xff] %vm211, %v2217
      %2258 = vst.msk [vmem:[%s210 + $0x61] sm:$0xff] %vm211, %v2218
      %2259 = vst.msk [vmem:[%s210 + $0x69] sm:$0xff] %vm211, %v2219
      %2260 = vst.msk [vmem:[%s210 + $0x79] sm:$0xff] %vm211, %v2220
      %2261 = vst.msk [vmem:[%s210 + $0x81] sm:$0xff] %vm211, %v2221
      %2262 = vst.msk [vmem:[%s210 + $0x91] sm:$0xff] %vm211, %v2222
      %2263 = vst.msk [vmem:[%s210 + $0x99] sm:$0xff] %vm211, %v2223
      %2264 = vst.msk [vmem:[%s210 + $0xa9] sm:$0xff] %vm211, %v2224
      %2265 = vst.msk [vmem:[%s210 + $0xb1] sm:$0xff] %vm211, %v2225
      %2266 = vst.msk [vmem:[%s210 + $0xc1] sm:$0xff] %vm211, %v2226
      %2267 = vst.msk [vmem:[%s210 + $0xc9] sm:$0xff] %vm211, %v2227
      %2268 = vst.msk [vmem:[%s210 + $0xd9] sm:$0xff] %vm211, %v2228
      %2269 = vst.msk [vmem:[%s210 + $0xe1] sm:$0xff] %vm211, %v2229
      %2270 = vst.msk [vmem:[%s210 + $0xf1] sm:$0xff] %vm211, %v2230
      %2271 = vst.msk [vmem:[%s210 + $0xf9] sm:$0xff] %vm211, %v2231
      %2272 = vst.msk [vmem:[%s210 + $0x109] sm:$0xff] %vm211, %v2232
      %2273 = vst.msk [vmem:[%s210 + $0x111] sm:$0xff] %vm211, %v2233
      %2274 = vst.msk [vmem:[%s210 + $0x121] sm:$0xff] %vm211, %v2234
      %2275 = vst.msk [vmem:[%s210 + $0x129] sm:$0xff] %vm211, %v2235
      %2276 = vst.msk [vmem:[%s210 + $0x139] sm:$0xff] %vm211, %v2236
      %2277 = vst.msk [vmem:[%s210 + $0x141] sm:$0xff] %vm211, %v2237
      %2278 = vst.msk [vmem:[%s210 + $0x151] sm:$0xff] %vm211, %v2238
      %2279 = vst.msk [vmem:[%s210 + $0x159] sm:$0xff] %vm211, %v2239
      %2280 = vst.msk [vmem:[%s210 + $0x169] sm:$0xff] %vm211, %v2240
      %2281 = vst.msk [vmem:[%s210 + $0x171] sm:$0xff] %vm211, %v2241
      %2282 = vst.msk [vmem:[#allocation2 + $0x1] sm:$0xff] %vm211, %v2212
      %2283 = vst.msk [vmem:[#allocation2 + $0x9] sm:$0xff] %vm211, %v2213
      %2284 = vst.msk [vmem:[%s246 + $0x1] sm:$0xff] %vm211, %v2238
      %2285 = vst.msk [vmem:[%s246 + $0x9] sm:$0xff] %vm211, %v2239
      %v2286 = vld [vmem:[#allocation2 + $0x2] sm:$0x1]
      %v2287 = vld [vmem:[#allocation2 + $0x1a] sm:$0x1]
      %v2288 = vld [vmem:[#allocation2 + $0x32] sm:$0x1]
      %v2289 = vld [vmem:[#allocation2 + $0x4a] sm:$0x1]
      %v2290 = vld [vmem:[#allocation2 + $0x62] sm:$0x1]
      %v2291 = vld [vmem:[#allocation2 + $0x7a] sm:$0x1]
      %v2292 = vld [vmem:[#allocation2 + $0x92] sm:$0x1]
      %v2293 = vld [vmem:[#allocation2 + $0xaa] sm:$0x1]
      %v2294 = vld [vmem:[#allocation2 + $0xc2] sm:$0x1]
      %v2295 = vld [vmem:[#allocation2 + $0xda] sm:$0x1]
      %v2296 = vld [vmem:[#allocation2 + $0xf2] sm:$0x1]
      %v2297 = vld [vmem:[#allocation2 + $0x10a] sm:$0x1]
      %v2298 = vld [vmem:[#allocation2 + $0x122] sm:$0x1]
      %v2299 = vld [vmem:[#allocation2 + $0x13a] sm:$0x1]
      %v2300 = vld [vmem:[#allocation2 + $0x152] sm:$0x1]
      %v2301 = vld [vmem:[#allocation2 + $0x16a] sm:$0x1]
      %v2302 = vld [vmem:[#allocation2 + $0x182] sm:$0x1]
      %v2303 = vld [vmem:[#allocation2 + $0x19a] sm:$0x1]
      %2304 = vst.msk [vmem:[#allocation2] sm:$0x1] %vm267, %v2286
      %2305 = vst.msk [vmem:[#allocation2 + $0x18] sm:$0x1] %vm267, %v2287
      %2306 = vst.msk [vmem:[#allocation2 + $0x30] sm:$0x1] %vm267, %v2288
      %2307 = vst.msk [vmem:[#allocation2 + $0x48] sm:$0x1] %vm267, %v2289
      %2308 = vst.msk [vmem:[#allocation2 + $0x60] sm:$0x1] %vm267, %v2290
      %2309 = vst.msk [vmem:[#allocation2 + $0x78] sm:$0x1] %vm267, %v2291
      %2310 = vst.msk [vmem:[#allocation2 + $0x90] sm:$0x1] %vm267, %v2292
      %2311 = vst.msk [vmem:[#allocation2 + $0xa8] sm:$0x1] %vm267, %v2293
      %2312 = vst.msk [vmem:[#allocation2 + $0xc0] sm:$0x1] %vm267, %v2294
      %2313 = vst.msk [vmem:[#allocation2 + $0xd8] sm:$0x1] %vm267, %v2295
      %2314 = vst.msk [vmem:[#allocation2 + $0xf0] sm:$0x1] %vm267, %v2296
      %2315 = vst.msk [vmem:[#allocation2 + $0x108] sm:$0x1] %vm267, %v2297
      %2316 = vst.msk [vmem:[#allocation2 + $0x120] sm:$0x1] %vm267, %v2298
      %2317 = vst.msk [vmem:[#allocation2 + $0x138] sm:$0x1] %vm267, %v2299
      %2318 = vst.msk [vmem:[#allocation2 + $0x150] sm:$0x1] %vm267, %v2300
      %2319 = vst.msk [vmem:[#allocation2 + $0x168] sm:$0x1] %vm267, %v2301
      %2320 = vst.msk [vmem:[#allocation2 + $0x180] sm:$0x1] %vm267, %v2302
      %2321 = vst.msk [vmem:[#allocation2 + $0x198] sm:$0x1] %vm267, %v2303
      %v2322 = vld [vmem:[#allocation2 + $0xf] sm:$0x1]
      %v2323 = vld [vmem:[#allocation2 + $0x27] sm:$0x1]
      %v2324 = vld [vmem:[#allocation2 + $0x3f] sm:$0x1]
      %v2325 = vld [vmem:[#allocation2 + $0x57] sm:$0x1]
      %v2326 = vld [vmem:[#allocation2 + $0x6f] sm:$0x1]
      %v2327 = vld [vmem:[#allocation2 + $0x87] sm:$0x1]
      %v2328 = vld [vmem:[#allocation2 + $0x9f] sm:$0x1]
      %v2329 = vld [vmem:[#allocation2 + $0xb7] sm:$0x1]
      %v2330 = vld [vmem:[#allocation2 + $0xcf] sm:$0x1]
      %v2331 = vld [vmem:[#allocation2 + $0xe7] sm:$0x1]
      %v2332 = vld [vmem:[#allocation2 + $0xff] sm:$0x1]
      %v2333 = vld [vmem:[#allocation2 + $0x117] sm:$0x1]
      %v2334 = vld [vmem:[#allocation2 + $0x12f] sm:$0x1]
      %v2335 = vld [vmem:[#allocation2 + $0x147] sm:$0x1]
      %v2336 = vld [vmem:[#allocation2 + $0x15f] sm:$0x1]
      %v2337 = vld [vmem:[#allocation2 + $0x177] sm:$0x1]
      %v2338 = vld [vmem:[#allocation2 + $0x18f] sm:$0x1]
      %v2339 = vld [vmem:[#allocation2 + $0x1a7] sm:$0x1]
      %2340 = vst.msk [vmem:[#allocation2 + $0x11] sm:$0x1] %vm267, %v2322
      %2341 = vst.msk [vmem:[#allocation2 + $0x29] sm:$0x1] %vm267, %v2323
      %2342 = vst.msk [vmem:[#allocation2 + $0x41] sm:$0x1] %vm267, %v2324
      %2343 = vst.msk [vmem:[#allocation2 + $0x59] sm:$0x1] %vm267, %v2325
      %2344 = vst.msk [vmem:[#allocation2 + $0x71] sm:$0x1] %vm267, %v2326
      %2345 = vst.msk [vmem:[#allocation2 + $0x89] sm:$0x1] %vm267, %v2327
      %2346 = vst.msk [vmem:[#allocation2 + $0xa1] sm:$0x1] %vm267, %v2328
      %2347 = vst.msk [vmem:[#allocation2 + $0xb9] sm:$0x1] %vm267, %v2329
      %2348 = vst.msk [vmem:[#allocation2 + $0xd1] sm:$0x1] %vm267, %v2330
      %2349 = vst.msk [vmem:[#allocation2 + $0xe9] sm:$0x1] %vm267, %v2331
      %2350 = vst.msk [vmem:[#allocation2 + $0x101] sm:$0x1] %vm267, %v2332
      %2351 = vst.msk [vmem:[#allocation2 + $0x119] sm:$0x1] %vm267, %v2333
      %2352 = vst.msk [vmem:[#allocation2 + $0x131] sm:$0x1] %vm267, %v2334
      %2353 = vst.msk [vmem:[#allocation2 + $0x149] sm:$0x1] %vm267, %v2335
      %2354 = vst.msk [vmem:[#allocation2 + $0x161] sm:$0x1] %vm267, %v2336
      %2355 = vst.msk [vmem:[#allocation2 + $0x179] sm:$0x1] %vm267, %v2337
      %2356 = vst.msk [vmem:[#allocation2 + $0x191] sm:$0x1] %vm267, %v2338
      %2357 = vst.msk [vmem:[#allocation2 + $0x1a9] sm:$0x1] %vm267, %v2339
      %v2358 = vld [vmem:[#allocation2] sm:$0xff]
      %v2359 = vld [vmem:[#allocation2 + $0x8] sm:$0xff]
      %v2360 = vld [vmem:[#allocation2 + $0x18] sm:$0xff]
      %v2361 = vld [vmem:[#allocation2 + $0x20] sm:$0xff]
      %v2362 = vld [vmem:[#allocation2 + $0x30] sm:$0xff]
      %v2363 = vld [vmem:[#allocation2 + $0x38] sm:$0xff]
      %v2364 = vld [vmem:[#allocation2 + $0x48] sm:$0xff]
      %v2365 = vld [vmem:[#allocation2 + $0x50] sm:$0xff]
      %v2366 = vld [vmem:[#allocation2 + $0x60] sm:$0xff]
      %v2367 = vld [vmem:[#allocation2 + $0x68] sm:$0xff]
      %v2368 = vld [vmem:[#allocation2 + $0x78] sm:$0xff]
      %v2369 = vld [vmem:[#allocation2 + $0x80] sm:$0xff]
      %v2370 = vld [vmem:[#allocation2 + $0x90] sm:$0xff]
      %v2371 = vld [vmem:[#allocation2 + $0x98] sm:$0xff]
      %v2372 = vld [vmem:[#allocation2 + $0xa8] sm:$0xff]
      %v2373 = vld [vmem:[#allocation2 + $0xb0] sm:$0xff]
      %v2374 = vld [vmem:[#allocation2 + $0xc0] sm:$0xff]
      %v2375 = vld [vmem:[#allocation2 + $0xc8] sm:$0xff]
      %v2376 = vld [vmem:[#allocation2 + $0xd8] sm:$0xff]
      %v2377 = vld [vmem:[#allocation2 + $0xe0] sm:$0xff]
      %v2378 = vld [vmem:[#allocation2 + $0xf0] sm:$0xff]
      %v2379 = vld [vmem:[#allocation2 + $0xf8] sm:$0xff]
      %v2380 = vld [vmem:[#allocation2 + $0x108] sm:$0xff]
      %v2381 = vld [vmem:[#allocation2 + $0x110] sm:$0xff]
      %v2382 = vld [vmem:[#allocation2 + $0x120] sm:$0xff]
      %v2383 = vld [vmem:[#allocation2 + $0x128] sm:$0xff]
      %v2384 = vld [vmem:[#allocation2 + $0x138] sm:$0xff]
      %v2385 = vld [vmem:[#allocation2 + $0x140] sm:$0xff]
      %v2386 = vld [vmem:[#allocation2 + $0x150] sm:$0xff]
      %v2387 = vld [vmem:[#allocation2 + $0x158] sm:$0xff]
      %v2388 = vld [vmem:[#allocation2 + $0x168] sm:$0xff]
      %v2389 = vld [vmem:[#allocation2 + $0x170] sm:$0xff]
      %v2390 = vld [vmem:[#allocation2 + $0x180] sm:$0xff]
      %v2391 = vld [vmem:[#allocation2 + $0x188] sm:$0xff]
      %v2392 = vld [vmem:[#allocation2 + $0x198] sm:$0xff]
      %v2393 = vld [vmem:[#allocation2 + $0x1a0] sm:$0xff]
      %2394 = vst.msk [vmem:[#allocation3] sm:$0xff] %vm211, %v2358
      %2395 = vst.msk [vmem:[#allocation3 + $0x8] sm:$0xff] %vm211, %v2359
      %2396 = vst.msk [vmem:[#allocation3 + $0x10] sm:$0xff] %vm211, %v2360
      %2397 = vst.msk [vmem:[#allocation3 + $0x18] sm:$0xff] %vm211, %v2361
      %2398 = vst.msk [vmem:[#allocation3 + $0x20] sm:$0xff] %vm211, %v2362
      %2399 = vst.msk [vmem:[#allocation3 + $0x28] sm:$0xff] %vm211, %v2363
      %2400 = vst.msk [vmem:[#allocation3 + $0x30] sm:$0xff] %vm211, %v2364
      %2401 = vst.msk [vmem:[#allocation3 + $0x38] sm:$0xff] %vm211, %v2365
      %2402 = vst.msk [vmem:[#allocation3 + $0x40] sm:$0xff] %vm211, %v2366
      %2403 = vst.msk [vmem:[#allocation3 + $0x48] sm:$0xff] %vm211, %v2367
      %2404 = vst.msk [vmem:[#allocation3 + $0x50] sm:$0xff] %vm211, %v2368
      %2405 = vst.msk [vmem:[#allocation3 + $0x58] sm:$0xff] %vm211, %v2369
      %2406 = vst.msk [vmem:[#allocation3 + $0x60] sm:$0xff] %vm211, %v2370
      %2407 = vst.msk [vmem:[#allocation3 + $0x68] sm:$0xff] %vm211, %v2371
      %2408 = vst.msk [vmem:[#allocation3 + $0x70] sm:$0xff] %vm211, %v2372
      %2409 = vst.msk [vmem:[#allocation3 + $0x78] sm:$0xff] %vm211, %v2373
      %2410 = vst.msk [vmem:[#allocation3 + $0x80] sm:$0xff] %vm211, %v2374
      %2411 = vst.msk [vmem:[#allocation3 + $0x88] sm:$0xff] %vm211, %v2375
      %2412 = vst.msk [vmem:[#allocation3 + $0x90] sm:$0xff] %vm211, %v2376
      %2413 = vst.msk [vmem:[#allocation3 + $0x98] sm:$0xff] %vm211, %v2377
      %2414 = vst.msk [vmem:[#allocation3 + $0xa0] sm:$0xff] %vm211, %v2378
      %2415 = vst.msk [vmem:[#allocation3 + $0xa8] sm:$0xff] %vm211, %v2379
      %2416 = vst.msk [vmem:[#allocation3 + $0xb0] sm:$0xff] %vm211, %v2380
      %2417 = vst.msk [vmem:[#allocation3 + $0xb8] sm:$0xff] %vm211, %v2381
      %2418 = vst.msk [vmem:[#allocation3 + $0xc0] sm:$0xff] %vm211, %v2382
      %2419 = vst.msk [vmem:[#allocation3 + $0xc8] sm:$0xff] %vm211, %v2383
      %2420 = vst.msk [vmem:[#allocation3 + $0xd0] sm:$0xff] %vm211, %v2384
      %2421 = vst.msk [vmem:[#allocation3 + $0xd8] sm:$0xff] %vm211, %v2385
      %2422 = vst.msk [vmem:[#allocation3 + $0xe0] sm:$0xff] %vm211, %v2386
      %2423 = vst.msk [vmem:[#allocation3 + $0xe8] sm:$0xff] %vm211, %v2387
      %2424 = vst.msk [vmem:[#allocation3 + $0xf0] sm:$0xff] %vm211, %v2388
      %2425 = vst.msk [vmem:[#allocation3 + $0xf8] sm:$0xff] %vm211, %v2389
      %2458 = vrot.lane.b32.xlu0 %v2360, 12
      %v2459 = vpop.permute.xlu0 %2458
      %2460 = vrot.lane.b32.xlu0 %v2361, 12
      %v2461 = vpop.permute.xlu0 %2460
      %2462 = vrot.lane.b32.xlu0 %v2362, 12
      %v2463 = vpop.permute.xlu0 %2462
      %2464 = vrot.lane.b32.xlu0 %v2363, 12
      %v2465 = vpop.permute.xlu0 %2464
      %2466 = vrot.lane.b32.xlu0 %v2364, 12
      %v2467 = vpop.permute.xlu0 %2466
      %2468 = vrot.lane.b32.xlu0 %v2365, 12
      %v2469 = vpop.permute.xlu0 %2468
      %2470 = vrot.lane.b32.xlu0 %v2366, 12
      %v2471 = vpop.permute.xlu0 %2470
      %2472 = vrot.lane.b32.xlu0 %v2367, 12
      %v2473 = vpop.permute.xlu0 %2472
      %2474 = vrot.lane.b32.xlu0 %v2368, 12
      %v2475 = vpop.permute.xlu0 %2474
      %2476 = vrot.lane.b32.xlu0 %v2369, 12
      %v2477 = vpop.permute.xlu0 %2476
      %2478 = vrot.lane.b32.xlu0 %v2370, 12
      %v2479 = vpop.permute.xlu0 %2478
      %2480 = vrot.lane.b32.xlu0 %v2371, 12
      %v2481 = vpop.permute.xlu0 %2480
      %2482 = vrot.lane.b32.xlu0 %v2372, 12
      %v2483 = vpop.permute.xlu0 %2482
      %2484 = vrot.lane.b32.xlu0 %v2373, 12
      %v2485 = vpop.permute.xlu0 %2484
      %2486 = vrot.lane.b32.xlu0 %v2374, 12
      %v2487 = vpop.permute.xlu0 %2486
      %2488 = vrot.lane.b32.xlu0 %v2375, 12
      %v2489 = vpop.permute.xlu0 %2488
      %2490 = vrot.lane.b32.xlu0 %v2376, 12
      %v2491 = vpop.permute.xlu0 %2490
      %2492 = vrot.lane.b32.xlu0 %v2377, 12
      %v2493 = vpop.permute.xlu0 %2492
      %2494 = vrot.lane.b32.xlu0 %v2378, 12
      %v2495 = vpop.permute.xlu0 %2494
      %2496 = vrot.lane.b32.xlu0 %v2379, 12
      %v2497 = vpop.permute.xlu0 %2496
      %2498 = vrot.lane.b32.xlu0 %v2380, 12
      %v2499 = vpop.permute.xlu0 %2498
      %2500 = vrot.lane.b32.xlu0 %v2381, 12
      %v2501 = vpop.permute.xlu0 %2500
      %2502 = vrot.lane.b32.xlu0 %v2382, 12
      %v2503 = vpop.permute.xlu0 %2502
      %2504 = vrot.lane.b32.xlu0 %v2383, 12
      %v2505 = vpop.permute.xlu0 %2504
      %2506 = vrot.lane.b32.xlu0 %v2384, 12
      %v2507 = vpop.permute.xlu0 %2506
      %2508 = vrot.lane.b32.xlu0 %v2385, 12
      %v2509 = vpop.permute.xlu0 %2508
      %2510 = vrot.lane.b32.xlu0 %v2386, 12
      %v2511 = vpop.permute.xlu0 %2510
      %2512 = vrot.lane.b32.xlu0 %v2387, 12
      %v2513 = vpop.permute.xlu0 %2512
      %2514 = vrot.lane.b32.xlu0 %v2388, 12
      %v2515 = vpop.permute.xlu0 %2514
      %2516 = vrot.lane.b32.xlu0 %v2389, 12
      %v2517 = vpop.permute.xlu0 %2516
      %2518 = vrot.lane.b32.xlu0 %v2390, 12
      %v2519 = vpop.permute.xlu0 %2518
      %2520 = vrot.lane.b32.xlu0 %v2391, 12
      %v2521 = vpop.permute.xlu0 %2520
      %2554 = vst.msk [vmem:[#allocation3] sm:$0xff] %vm518, %v2459
      %2555 = vst.msk [vmem:[#allocation3 + $0x8] sm:$0xff] %vm518, %v2461
      %2556 = vst.msk [vmem:[#allocation3 + $0x10] sm:$0xff] %vm518, %v2463
      %2557 = vst.msk [vmem:[#allocation3 + $0x18] sm:$0xff] %vm518, %v2465
      %2558 = vst.msk [vmem:[#allocation3 + $0x20] sm:$0xff] %vm518, %v2467
      %2559 = vst.msk [vmem:[#allocation3 + $0x28] sm:$0xff] %vm518, %v2469
      %2560 = vst.msk [vmem:[#allocation3 + $0x30] sm:$0xff] %vm518, %v2471
      %2561 = vst.msk [vmem:[#allocation3 + $0x38] sm:$0xff] %vm518, %v2473
      %2562 = vst.msk [vmem:[#allocation3 + $0x40] sm:$0xff] %vm518, %v2475
      %2563 = vst.msk [vmem:[#allocation3 + $0x48] sm:$0xff] %vm518, %v2477
      %2564 = vst.msk [vmem:[#allocation3 + $0x50] sm:$0xff] %vm518, %v2479
      %2565 = vst.msk [vmem:[#allocation3 + $0x58] sm:$0xff] %vm518, %v2481
      %2566 = vst.msk [vmem:[#allocation3 + $0x60] sm:$0xff] %vm518, %v2483
      %2567 = vst.msk [vmem:[#allocation3 + $0x68] sm:$0xff] %vm518, %v2485
      %2568 = vst.msk [vmem:[#allocation3 + $0x70] sm:$0xff] %vm518, %v2487
      %2569 = vst.msk [vmem:[#allocation3 + $0x78] sm:$0xff] %vm518, %v2489
      %2570 = vst.msk [vmem:[#allocation3 + $0x80] sm:$0xff] %vm518, %v2491
      %2571 = vst.msk [vmem:[#allocation3 + $0x88] sm:$0xff] %vm518, %v2493
      %2572 = vst.msk [vmem:[#allocation3 + $0x90] sm:$0xff] %vm518, %v2495
      %2573 = vst.msk [vmem:[#allocation3 + $0x98] sm:$0xff] %vm518, %v2497
      %2574 = vst.msk [vmem:[#allocation3 + $0xa0] sm:$0xff] %vm518, %v2499
      %2575 = vst.msk [vmem:[#allocation3 + $0xa8] sm:$0xff] %vm518, %v2501
      %2576 = vst.msk [vmem:[#allocation3 + $0xb0] sm:$0xff] %vm518, %v2503
      %2577 = vst.msk [vmem:[#allocation3 + $0xb8] sm:$0xff] %vm518, %v2505
      %2578 = vst.msk [vmem:[#allocation3 + $0xc0] sm:$0xff] %vm518, %v2507
      %2579 = vst.msk [vmem:[#allocation3 + $0xc8] sm:$0xff] %vm518, %v2509
      %2580 = vst.msk [vmem:[#allocation3 + $0xd0] sm:$0xff] %vm518, %v2511
      %2581 = vst.msk [vmem:[#allocation3 + $0xd8] sm:$0xff] %vm518, %v2513
      %2582 = vst.msk [vmem:[#allocation3 + $0xe0] sm:$0xff] %vm518, %v2515
      %2583 = vst.msk [vmem:[#allocation3 + $0xe8] sm:$0xff] %vm518, %v2517
      %2584 = vst.msk [vmem:[#allocation3 + $0xf0] sm:$0xff] %vm518, %v2519
      %2585 = vst.msk [vmem:[#allocation3 + $0xf8] sm:$0xff] %vm518, %v2521
      %2588 = vrot.lane.b32.xlu0 %v2362, 24
      %v2589 = vpop.permute.xlu0 %2588
      %2590 = vrot.lane.b32.xlu0 %v2363, 24
      %v2591 = vpop.permute.xlu0 %2590
      %2592 = vrot.lane.b32.xlu0 %v2364, 24
      %v2593 = vpop.permute.xlu0 %2592
      %2594 = vrot.lane.b32.xlu0 %v2365, 24
      %v2595 = vpop.permute.xlu0 %2594
      %2596 = vrot.lane.b32.xlu0 %v2366, 24
      %v2597 = vpop.permute.xlu0 %2596
      %2598 = vrot.lane.b32.xlu0 %v2367, 24
      %v2599 = vpop.permute.xlu0 %2598
      %2600 = vrot.lane.b32.xlu0 %v2368, 24
      %v2601 = vpop.permute.xlu0 %2600
      %2602 = vrot.lane.b32.xlu0 %v2369, 24
      %v2603 = vpop.permute.xlu0 %2602
      %2604 = vrot.lane.b32.xlu0 %v2370, 24
      %v2605 = vpop.permute.xlu0 %2604
      %2606 = vrot.lane.b32.xlu0 %v2371, 24
      %v2607 = vpop.permute.xlu0 %2606
      %2608 = vrot.lane.b32.xlu0 %v2372, 24
      %v2609 = vpop.permute.xlu0 %2608
      %2610 = vrot.lane.b32.xlu0 %v2373, 24
      %v2611 = vpop.permute.xlu0 %2610
      %2612 = vrot.lane.b32.xlu0 %v2374, 24
      %v2613 = vpop.permute.xlu0 %2612
      %2614 = vrot.lane.b32.xlu0 %v2375, 24
      %v2615 = vpop.permute.xlu0 %2614
      %2616 = vrot.lane.b32.xlu0 %v2376, 24
      %v2617 = vpop.permute.xlu0 %2616
      %2618 = vrot.lane.b32.xlu0 %v2377, 24
      %v2619 = vpop.permute.xlu0 %2618
      %2620 = vrot.lane.b32.xlu0 %v2378, 24
      %v2621 = vpop.permute.xlu0 %2620
      %2622 = vrot.lane.b32.xlu0 %v2379, 24
      %v2623 = vpop.permute.xlu0 %2622
      %2624 = vrot.lane.b32.xlu0 %v2380, 24
      %v2625 = vpop.permute.xlu0 %2624
      %2626 = vrot.lane.b32.xlu0 %v2381, 24
      %v2627 = vpop.permute.xlu0 %2626
      %2628 = vrot.lane.b32.xlu0 %v2382, 24
      %v2629 = vpop.permute.xlu0 %2628
      %2630 = vrot.lane.b32.xlu0 %v2383, 24
      %v2631 = vpop.permute.xlu0 %2630
      %2632 = vrot.lane.b32.xlu0 %v2384, 24
      %v2633 = vpop.permute.xlu0 %2632
      %2634 = vrot.lane.b32.xlu0 %v2385, 24
      %v2635 = vpop.permute.xlu0 %2634
      %2636 = vrot.lane.b32.xlu0 %v2386, 24
      %v2637 = vpop.permute.xlu0 %2636
      %2638 = vrot.lane.b32.xlu0 %v2387, 24
      %v2639 = vpop.permute.xlu0 %2638
      %2640 = vrot.lane.b32.xlu0 %v2388, 24
      %v2641 = vpop.permute.xlu0 %2640
      %2642 = vrot.lane.b32.xlu0 %v2389, 24
      %v2643 = vpop.permute.xlu0 %2642
      %2644 = vrot.lane.b32.xlu0 %v2390, 24
      %v2645 = vpop.permute.xlu0 %2644
      %2646 = vrot.lane.b32.xlu0 %v2391, 24
      %v2647 = vpop.permute.xlu0 %2646
      %2648 = vrot.lane.b32.xlu0 %v2392, 24
      %v2649 = vpop.permute.xlu0 %2648
      %2650 = vrot.lane.b32.xlu0 %v2393, 24
      %v2651 = vpop.permute.xlu0 %2650
      %2684 = vst.msk [vmem:[#allocation3] sm:$0xff] %vm649, %v2589
      %2685 = vst.msk [vmem:[#allocation3 + $0x8] sm:$0xff] %vm649, %v2591
      %2686 = vst.msk [vmem:[#allocation3 + $0x10] sm:$0xff] %vm649, %v2593
      %2687 = vst.msk [vmem:[#allocation3 + $0x18] sm:$0xff] %vm649, %v2595
      %2688 = vst.msk [vmem:[#allocation3 + $0x20] sm:$0xff] %vm649, %v2597
      %2689 = vst.msk [vmem:[#allocation3 + $0x28] sm:$0xff] %vm649, %v2599
      %2690 = vst.msk [vmem:[#allocation3 + $0x30] sm:$0xff] %vm649, %v2601
      %2691 = vst.msk [vmem:[#allocation3 + $0x38] sm:$0xff] %vm649, %v2603
      %2692 = vst.msk [vmem:[#allocation3 + $0x40] sm:$0xff] %vm649, %v2605
      %2693 = vst.msk [vmem:[#allocation3 + $0x48] sm:$0xff] %vm649, %v2607
      %2694 = vst.msk [vmem:[#allocation3 + $0x50] sm:$0xff] %vm649, %v2609
      %2695 = vst.msk [vmem:[#allocation3 + $0x58] sm:$0xff] %vm649, %v2611
      %2696 = vst.msk [vmem:[#allocation3 + $0x60] sm:$0xff] %vm649, %v2613
      %2697 = vst.msk [vmem:[#allocation3 + $0x68] sm:$0xff] %vm649, %v2615
      %2698 = vst.msk [vmem:[#allocation3 + $0x70] sm:$0xff] %vm649, %v2617
      %2699 = vst.msk [vmem:[#allocation3 + $0x78] sm:$0xff] %vm649, %v2619
      %2700 = vst.msk [vmem:[#allocation3 + $0x80] sm:$0xff] %vm649, %v2621
      %2701 = vst.msk [vmem:[#allocation3 + $0x88] sm:$0xff] %vm649, %v2623
      %2702 = vst.msk [vmem:[#allocation3 + $0x90] sm:$0xff] %vm649, %v2625
      %2703 = vst.msk [vmem:[#allocation3 + $0x98] sm:$0xff] %vm649, %v2627
      %2704 = vst.msk [vmem:[#allocation3 + $0xa0] sm:$0xff] %vm649, %v2629
      %2705 = vst.msk [vmem:[#allocation3 + $0xa8] sm:$0xff] %vm649, %v2631
      %2706 = vst.msk [vmem:[#allocation3 + $0xb0] sm:$0xff] %vm649, %v2633
      %2707 = vst.msk [vmem:[#allocation3 + $0xb8] sm:$0xff] %vm649, %v2635
      %2708 = vst.msk [vmem:[#allocation3 + $0xc0] sm:$0xff] %vm649, %v2637
      %2709 = vst.msk [vmem:[#allocation3 + $0xc8] sm:$0xff] %vm649, %v2639
      %2710 = vst.msk [vmem:[#allocation3 + $0xd0] sm:$0xff] %vm649, %v2641
      %2711 = vst.msk [vmem:[#allocation3 + $0xd8] sm:$0xff] %vm649, %v2643
      %2712 = vst.msk [vmem:[#allocation3 + $0xe0] sm:$0xff] %vm649, %v2645
      %2713 = vst.msk [vmem:[#allocation3 + $0xe8] sm:$0xff] %vm649, %v2647
      %2714 = vst.msk [vmem:[#allocation3 + $0xf0] sm:$0xff] %vm649, %v2649
      %2715 = vst.msk [vmem:[#allocation3 + $0xf8] sm:$0xff] %vm649, %v2651
      %v2716 = vld [vmem:[#allocation2 + $0x1] sm:$0xff]
      %v2717 = vld [vmem:[#allocation2 + $0x9] sm:$0xff]
      %v2718 = vld [vmem:[#allocation2 + $0x19] sm:$0xff]
      %v2719 = vld [vmem:[#allocation2 + $0x21] sm:$0xff]
      %v2720 = vld [vmem:[#allocation2 + $0x31] sm:$0xff]
      %v2721 = vld [vmem:[#allocation2 + $0x39] sm:$0xff]
      %v2722 = vld [vmem:[#allocation2 + $0x49] sm:$0xff]
      %v2723 = vld [vmem:[#allocation2 + $0x51] sm:$0xff]
      %v2724 = vld [vmem:[#allocation2 + $0x61] sm:$0xff]
      %v2725 = vld [vmem:[#allocation2 + $0x69] sm:$0xff]
      %v2726 = vld [vmem:[#allocation2 + $0x79] sm:$0xff]
      %v2727 = vld [vmem:[#allocation2 + $0x81] sm:$0xff]
      %v2728 = vld [vmem:[#allocation2 + $0x91] sm:$0xff]
      %v2729 = vld [vmem:[#allocation2 + $0x99] sm:$0xff]
      %v2730 = vld [vmem:[#allocation2 + $0xa9] sm:$0xff]
      %v2731 = vld [vmem:[#allocation2 + $0xb1] sm:$0xff]
      %v2732 = vld [vmem:[#allocation2 + $0xc1] sm:$0xff]
      %v2733 = vld [vmem:[#allocation2 + $0xc9] sm:$0xff]
      %v2734 = vld [vmem:[#allocation2 + $0xd9] sm:$0xff]
      %v2735 = vld [vmem:[#allocation2 + $0xe1] sm:$0xff]
      %v2736 = vld [vmem:[#allocation2 + $0xf1] sm:$0xff]
      %v2737 = vld [vmem:[#allocation2 + $0xf9] sm:$0xff]
      %v2738 = vld [vmem:[#allocation2 + $0x109] sm:$0xff]
      %v2739 = vld [vmem:[#allocation2 + $0x111] sm:$0xff]
      %v2740 = vld [vmem:[#allocation2 + $0x121] sm:$0xff]
      %v2741 = vld [vmem:[#allocation2 + $0x129] sm:$0xff]
      %v2742 = vld [vmem:[#allocation2 + $0x139] sm:$0xff]
      %v2743 = vld [vmem:[#allocation2 + $0x141] sm:$0xff]
      %v2744 = vld [vmem:[#allocation2 + $0x151] sm:$0xff]
      %v2745 = vld [vmem:[#allocation2 + $0x159] sm:$0xff]
      %v2746 = vld [vmem:[#allocation2 + $0x169] sm:$0xff]
      %v2747 = vld [vmem:[#allocation2 + $0x171] sm:$0xff]
      %v2748 = vld [vmem:[#allocation2 + $0x181] sm:$0xff]
      %v2749 = vld [vmem:[#allocation2 + $0x189] sm:$0xff]
      %v2750 = vld [vmem:[#allocation2 + $0x199] sm:$0xff]
      %v2751 = vld [vmem:[#allocation2 + $0x1a1] sm:$0xff]
      %2784 = vrot.lane.b32.xlu0 %v2716, 4
      %v2785 = vpop.permute.xlu0 %2784
      %2786 = vrot.lane.b32.xlu0 %v2717, 4
      %v2787 = vpop.permute.xlu0 %2786
      %2788 = vrot.lane.b32.xlu0 %v2718, 4
      %v2789 = vpop.permute.xlu0 %2788
      %2790 = vrot.lane.b32.xlu0 %v2719, 4
      %v2791 = vpop.permute.xlu0 %2790
      %2792 = vrot.lane.b32.xlu0 %v2720, 4
      %v2793 = vpop.permute.xlu0 %2792
      %2794 = vrot.lane.b32.xlu0 %v2721, 4
      %v2795 = vpop.permute.xlu0 %2794
      %2796 = vrot.lane.b32.xlu0 %v2722, 4
      %v2797 = vpop.permute.xlu0 %2796
      %2798 = vrot.lane.b32.xlu0 %v2723, 4
      %v2799 = vpop.permute.xlu0 %2798
      %2800 = vrot.lane.b32.xlu0 %v2724, 4
      %v2801 = vpop.permute.xlu0 %2800
      %2802 = vrot.lane.b32.xlu0 %v2725, 4
      %v2803 = vpop.permute.xlu0 %2802
      %2804 = vrot.lane.b32.xlu0 %v2726, 4
      %v2805 = vpop.permute.xlu0 %2804
      %2806 = vrot.lane.b32.xlu0 %v2727, 4
      %v2807 = vpop.permute.xlu0 %2806
      %2808 = vrot.lane.b32.xlu0 %v2728, 4
      %v2809 = vpop.permute.xlu0 %2808
      %2810 = vrot.lane.b32.xlu0 %v2729, 4
      %v2811 = vpop.permute.xlu0 %2810
      %2812 = vrot.lane.b32.xlu0 %v2730, 4
      %v2813 = vpop.permute.xlu0 %2812
      %2814 = vrot.lane.b32.xlu0 %v2731, 4
      %v2815 = vpop.permute.xlu0 %2814
      %2816 = vrot.lane.b32.xlu0 %v2732, 4
      %v2817 = vpop.permute.xlu0 %2816
      %2818 = vrot.lane.b32.xlu0 %v2733, 4
      %v2819 = vpop.permute.xlu0 %2818
      %2820 = vrot.lane.b32.xlu0 %v2734, 4
      %v2821 = vpop.permute.xlu0 %2820
      %2822 = vrot.lane.b32.xlu0 %v2735, 4
      %v2823 = vpop.permute.xlu0 %2822
      %2824 = vrot.lane.b32.xlu0 %v2736, 4
      %v2825 = vpop.permute.xlu0 %2824
      %2826 = vrot.lane.b32.xlu0 %v2737, 4
      %v2827 = vpop.permute.xlu0 %2826
      %2828 = vrot.lane.b32.xlu0 %v2738, 4
      %v2829 = vpop.permute.xlu0 %2828
      %2830 = vrot.lane.b32.xlu0 %v2739, 4
      %v2831 = vpop.permute.xlu0 %2830
      %2832 = vrot.lane.b32.xlu0 %v2740, 4
      %v2833 = vpop.permute.xlu0 %2832
      %2834 = vrot.lane.b32.xlu0 %v2741, 4
      %v2835 = vpop.permute.xlu0 %2834
      %2836 = vrot.lane.b32.xlu0 %v2742, 4
      %v2837 = vpop.permute.xlu0 %2836
      %2838 = vrot.lane.b32.xlu0 %v2743, 4
      %v2839 = vpop.permute.xlu0 %2838
      %2840 = vrot.lane.b32.xlu0 %v2744, 4
      %v2841 = vpop.permute.xlu0 %2840
      %2842 = vrot.lane.b32.xlu0 %v2745, 4
      %v2843 = vpop.permute.xlu0 %2842
      %2844 = vrot.lane.b32.xlu0 %v2746, 4
      %v2845 = vpop.permute.xlu0 %2844
      %2846 = vrot.lane.b32.xlu0 %v2747, 4
      %v2847 = vpop.permute.xlu0 %2846
      %2880 = vst.msk [vmem:[#allocation3] sm:$0xff] %vm846, %v2785
      %2881 = vst.msk [vmem:[#allocation3 + $0x8] sm:$0xff] %vm846, %v2787
      %2882 = vst.msk [vmem:[#allocation3 + $0x10] sm:$0xff] %vm846, %v2789
      %2883 = vst.msk [vmem:[#allocation3 + $0x18] sm:$0xff] %vm846, %v2791
      %2884 = vst.msk [vmem:[#allocation3 + $0x20] sm:$0xff] %vm846, %v2793
      %2885 = vst.msk [vmem:[#allocation3 + $0x28] sm:$0xff] %vm846, %v2795
      %2886 = vst.msk [vmem:[#allocation3 + $0x30] sm:$0xff] %vm846, %v2797
      %2887 = vst.msk [vmem:[#allocation3 + $0x38] sm:$0xff] %vm846, %v2799
      %2888 = vst.msk [vmem:[#allocation3 + $0x40] sm:$0xff] %vm846, %v2801
      %2889 = vst.msk [vmem:[#allocation3 + $0x48] sm:$0xff] %vm846, %v2803
      %2890 = vst.msk [vmem:[#allocation3 + $0x50] sm:$0xff] %vm846, %v2805
      %2891 = vst.msk [vmem:[#allocation3 + $0x58] sm:$0xff] %vm846, %v2807
      %2892 = vst.msk [vmem:[#allocation3 + $0x60] sm:$0xff] %vm846, %v2809
      %2893 = vst.msk [vmem:[#allocation3 + $0x68] sm:$0xff] %vm846, %v2811
      %2894 = vst.msk [vmem:[#allocation3 + $0x70] sm:$0xff] %vm846, %v2813
      %2895 = vst.msk [vmem:[#allocation3 + $0x78] sm:$0xff] %vm846, %v2815
      %2896 = vst.msk [vmem:[#allocation3 + $0x80] sm:$0xff] %vm846, %v2817
      %2897 = vst.msk [vmem:[#allocation3 + $0x88] sm:$0xff] %vm846, %v2819
      %2898 = vst.msk [vmem:[#allocation3 + $0x90] sm:$0xff] %vm846, %v2821
      %2899 = vst.msk [vmem:[#allocation3 + $0x98] sm:$0xff] %vm846, %v2823
      %2900 = vst.msk [vmem:[#allocation3 + $0xa0] sm:$0xff] %vm846, %v2825
      %2901 = vst.msk [vmem:[#allocation3 + $0xa8] sm:$0xff] %vm846, %v2827
      %2902 = vst.msk [vmem:[#allocation3 + $0xb0] sm:$0xff] %vm846, %v2829
      %2903 = vst.msk [vmem:[#allocation3 + $0xb8] sm:$0xff] %vm846, %v2831
      %2904 = vst.msk [vmem:[#allocation3 + $0xc0] sm:$0xff] %vm846, %v2833
      %2905 = vst.msk [vmem:[#allocation3 + $0xc8] sm:$0xff] %vm846, %v2835
      %2906 = vst.msk [vmem:[#allocation3 + $0xd0] sm:$0xff] %vm846, %v2837
      %2907 = vst.msk [vmem:[#allocation3 + $0xd8] sm:$0xff] %vm846, %v2839
      %2908 = vst.msk [vmem:[#allocation3 + $0xe0] sm:$0xff] %vm846, %v2841
      %2909 = vst.msk [vmem:[#allocation3 + $0xe8] sm:$0xff] %vm846, %v2843
      %2910 = vst.msk [vmem:[#allocation3 + $0xf0] sm:$0xff] %vm846, %v2845
      %2911 = vst.msk [vmem:[#allocation3 + $0xf8] sm:$0xff] %vm846, %v2847
      %2914 = vrot.lane.b32.xlu0 %v2718, 16
      %v2915 = vpop.permute.xlu0 %2914
      %2916 = vrot.lane.b32.xlu0 %v2719, 16
      %v2917 = vpop.permute.xlu0 %2916
      %2918 = vrot.lane.b32.xlu0 %v2720, 16
      %v2919 = vpop.permute.xlu0 %2918
      %2920 = vrot.lane.b32.xlu0 %v2721, 16
      %v2921 = vpop.permute.xlu0 %2920
      %2922 = vrot.lane.b32.xlu0 %v2722, 16
      %v2923 = vpop.permute.xlu0 %2922
      %2924 = vrot.lane.b32.xlu0 %v2723, 16
      %v2925 = vpop.permute.xlu0 %2924
      %2926 = vrot.lane.b32.xlu0 %v2724, 16
      %v2927 = vpop.permute.xlu0 %2926
      %2928 = vrot.lane.b32.xlu0 %v2725, 16
      %v2929 = vpop.permute.xlu0 %2928
      %2930 = vrot.lane.b32.xlu0 %v2726, 16
      %v2931 = vpop.permute.xlu0 %2930
      %2932 = vrot.lane.b32.xlu0 %v2727, 16
      %v2933 = vpop.permute.xlu0 %2932
      %2934 = vrot.lane.b32.xlu0 %v2728, 16
      %v2935 = vpop.permute.xlu0 %2934
      %2936 = vrot.lane.b32.xlu0 %v2729, 16
      %v2937 = vpop.permute.xlu0 %2936
      %2938 = vrot.lane.b32.xlu0 %v2730, 16
      %v2939 = vpop.permute.xlu0 %2938
      %2940 = vrot.lane.b32.xlu0 %v2731, 16
      %v2941 = vpop.permute.xlu0 %2940
      %2942 = vrot.lane.b32.xlu0 %v2732, 16
      %v2943 = vpop.permute.xlu0 %2942
      %2944 = vrot.lane.b32.xlu0 %v2733, 16
      %v2945 = vpop.permute.xlu0 %2944
      %2946 = vrot.lane.b32.xlu0 %v2734, 16
      %v2947 = vpop.permute.xlu0 %2946
      %2948 = vrot.lane.b32.xlu0 %v2735, 16
      %v2949 = vpop.permute.xlu0 %2948
      %2950 = vrot.lane.b32.xlu0 %v2736, 16
      %v2951 = vpop.permute.xlu0 %2950
      %2952 = vrot.lane.b32.xlu0 %v2737, 16
      %v2953 = vpop.permute.xlu0 %2952
      %2954 = vrot.lane.b32.xlu0 %v2738, 16
      %v2955 = vpop.permute.xlu0 %2954
      %2956 = vrot.lane.b32.xlu0 %v2739, 16
      %v2957 = vpop.permute.xlu0 %2956
      %2958 = vrot.lane.b32.xlu0 %v2740, 16
      %v2959 = vpop.permute.xlu0 %2958
      %2960 = vrot.lane.b32.xlu0 %v2741, 16
      %v2961 = vpop.permute.xlu0 %2960
      %2962 = vrot.lane.b32.xlu0 %v2742, 16
      %v2963 = vpop.permute.xlu0 %2962
      %2964 = vrot.lane.b32.xlu0 %v2743, 16
      %v2965 = vpop.permute.xlu0 %2964
      %2966 = vrot.lane.b32.xlu0 %v2744, 16
      %v2967 = vpop.permute.xlu0 %2966
      %2968 = vrot.lane.b32.xlu0 %v2745, 16
      %v2969 = vpop.permute.xlu0 %2968
      %2970 = vrot.lane.b32.xlu0 %v2746, 16
      %v2971 = vpop.permute.xlu0 %2970
      %2972 = vrot.lane.b32.xlu0 %v2747, 16
      %v2973 = vpop.permute.xlu0 %2972
      %2974 = vrot.lane.b32.xlu0 %v2748, 16
      %v2975 = vpop.permute.xlu0 %2974
      %2976 = vrot.lane.b32.xlu0 %v2749, 16
      %v2977 = vpop.permute.xlu0 %2976
      %3010 = vst.msk [vmem:[#allocation3] sm:$0xff] %vm977, %v2915
      %3011 = vst.msk [vmem:[#allocation3 + $0x8] sm:$0xff] %vm977, %v2917
      %3012 = vst.msk [vmem:[#allocation3 + $0x10] sm:$0xff] %vm977, %v2919
      %3013 = vst.msk [vmem:[#allocation3 + $0x18] sm:$0xff] %vm977, %v2921
      %3014 = vst.msk [vmem:[#allocation3 + $0x20] sm:$0xff] %vm977, %v2923
      %3015 = vst.msk [vmem:[#allocation3 + $0x28] sm:$0xff] %vm977, %v2925
      %3016 = vst.msk [vmem:[#allocation3 + $0x30] sm:$0xff] %vm977, %v2927
      %3017 = vst.msk [vmem:[#allocation3 + $0x38] sm:$0xff] %vm977, %v2929
      %3018 = vst.msk [vmem:[#allocation3 + $0x40] sm:$0xff] %vm977, %v2931
      %3019 = vst.msk [vmem:[#allocation3 + $0x48] sm:$0xff] %vm977, %v2933
      %3020 = vst.msk [vmem:[#allocation3 + $0x50] sm:$0xff] %vm977, %v2935
      %3021 = vst.msk [vmem:[#allocation3 + $0x58] sm:$0xff] %vm977, %v2937
      %3022 = vst.msk [vmem:[#allocation3 + $0x60] sm:$0xff] %vm977, %v2939
      %3023 = vst.msk [vmem:[#allocation3 + $0x68] sm:$0xff] %vm977, %v2941
      %3024 = vst.msk [vmem:[#allocation3 + $0x70] sm:$0xff] %vm977, %v2943
      %3025 = vst.msk [vmem:[#allocation3 + $0x78] sm:$0xff] %vm977, %v2945
      %3026 = vst.msk [vmem:[#allocation3 + $0x80] sm:$0xff] %vm977, %v2947
      %3027 = vst.msk [vmem:[#allocation3 + $0x88] sm:$0xff] %vm977, %v2949
      %3028 = vst.msk [vmem:[#allocation3 + $0x90] sm:$0xff] %vm977, %v2951
      %3029 = vst.msk [vmem:[#allocation3 + $0x98] sm:$0xff] %vm977, %v2953
      %3030 = vst.msk [vmem:[#allocation3 + $0xa0] sm:$0xff] %vm977, %v2955
      %3031 = vst.msk [vmem:[#allocation3 + $0xa8] sm:$0xff] %vm977, %v2957
      %3032 = vst.msk [vmem:[#allocation3 + $0xb0] sm:$0xff] %vm977, %v2959
      %3033 = vst.msk [vmem:[#allocation3 + $0xb8] sm:$0xff] %vm977, %v2961
      %3034 = vst.msk [vmem:[#allocation3 + $0xc0] sm:$0xff] %vm977, %v2963
      %3035 = vst.msk [vmem:[#allocation3 + $0xc8] sm:$0xff] %vm977, %v2965
      %3036 = vst.msk [vmem:[#allocation3 + $0xd0] sm:$0xff] %vm977, %v2967
      %3037 = vst.msk [vmem:[#allocation3 + $0xd8] sm:$0xff] %vm977, %v2969
      %3038 = vst.msk [vmem:[#allocation3 + $0xe0] sm:$0xff] %vm977, %v2971
      %3039 = vst.msk [vmem:[#allocation3 + $0xe8] sm:$0xff] %vm977, %v2973
      %3040 = vst.msk [vmem:[#allocation3 + $0xf0] sm:$0xff] %vm977, %v2975
      %3041 = vst.msk [vmem:[#allocation3 + $0xf8] sm:$0xff] %vm977, %v2977
      %3044 = vrot.lane.b32.xlu0 %v2720, 28
      %v3045 = vpop.permute.xlu0 %3044
      %3046 = vrot.lane.b32.xlu0 %v2721, 28
      %v3047 = vpop.permute.xlu0 %3046
      %3048 = vrot.lane.b32.xlu0 %v2722, 28
      %v3049 = vpop.permute.xlu0 %3048
      %3050 = vrot.lane.b32.xlu0 %v2723, 28
      %v3051 = vpop.permute.xlu0 %3050
      %3052 = vrot.lane.b32.xlu0 %v2724, 28
      %v3053 = vpop.permute.xlu0 %3052
      %3054 = vrot.lane.b32.xlu0 %v2725, 28
      %v3055 = vpop.permute.xlu0 %3054
      %3056 = vrot.lane.b32.xlu0 %v2726, 28
      %v3057 = vpop.permute.xlu0 %3056
      %3058 = vrot.lane.b32.xlu0 %v2727, 28
      %v3059 = vpop.permute.xlu0 %3058
      %3060 = vrot.lane.b32.xlu0 %v2728, 28
      %v3061 = vpop.permute.xlu0 %3060
      %3062 = vrot.lane.b32.xlu0 %v2729, 28
      %v3063 = vpop.permute.xlu0 %3062
      %3064 = vrot.lane.b32.xlu0 %v2730, 28
      %v3065 = vpop.permute.xlu0 %3064
      %3066 = vrot.lane.b32.xlu0 %v2731, 28
      %v3067 = vpop.permute.xlu0 %3066
      %3068 = vrot.lane.b32.xlu0 %v2732, 28
      %v3069 = vpop.permute.xlu0 %3068
      %3070 = vrot.lane.b32.xlu0 %v2733, 28
      %v3071 = vpop.permute.xlu0 %3070
      %3072 = vrot.lane.b32.xlu0 %v2734, 28
      %v3073 = vpop.permute.xlu0 %3072
      %3074 = vrot.lane.b32.xlu0 %v2735, 28
      %v3075 = vpop.permute.xlu0 %3074
      %3076 = vrot.lane.b32.xlu0 %v2736, 28
      %v3077 = vpop.permute.xlu0 %3076
      %3078 = vrot.lane.b32.xlu0 %v2737, 28
      %v3079 = vpop.permute.xlu0 %3078
      %3080 = vrot.lane.b32.xlu0 %v2738, 28
      %v3081 = vpop.permute.xlu0 %3080
      %3082 = vrot.lane.b32.xlu0 %v2739, 28
      %v3083 = vpop.permute.xlu0 %3082
      %3084 = vrot.lane.b32.xlu0 %v2740, 28
      %v3085 = vpop.permute.xlu0 %3084
      %3086 = vrot.lane.b32.xlu0 %v2741, 28
      %v3087 = vpop.permute.xlu0 %3086
      %3088 = vrot.lane.b32.xlu0 %v2742, 28
      %v3089 = vpop.permute.xlu0 %3088
      %3090 = vrot.lane.b32.xlu0 %v2743, 28
      %v3091 = vpop.permute.xlu0 %3090
      %3092 = vrot.lane.b32.xlu0 %v2744, 28
      %v3093 = vpop.permute.xlu0 %3092
      %3094 = vrot.lane.b32.xlu0 %v2745, 28
      %v3095 = vpop.permute.xlu0 %3094
      %3096 = vrot.lane.b32.xlu0 %v2746, 28
      %v3097 = vpop.permute.xlu0 %3096
      %3098 = vrot.lane.b32.xlu0 %v2747, 28
      %v3099 = vpop.permute.xlu0 %3098
      %3100 = vrot.lane.b32.xlu0 %v2748, 28
      %v3101 = vpop.permute.xlu0 %3100
      %3102 = vrot.lane.b32.xlu0 %v2749, 28
      %v3103 = vpop.permute.xlu0 %3102
      %3104 = vrot.lane.b32.xlu0 %v2750, 28
      %v3105 = vpop.permute.xlu0 %3104
      %3106 = vrot.lane.b32.xlu0 %v2751, 28
      %v3107 = vpop.permute.xlu0 %3106
      %3140 = vst.msk [vmem:[#allocation3] sm:$0xff] %vm1108, %v3045
      %3141 = vst.msk [vmem:[#allocation3 + $0x8] sm:$0xff] %vm1108, %v3047
      %3142 = vst.msk [vmem:[#allocation3 + $0x10] sm:$0xff] %vm1108, %v3049
      %3143 = vst.msk [vmem:[#allocation3 + $0x18] sm:$0xff] %vm1108, %v3051
      %3144 = vst.msk [vmem:[#allocation3 + $0x20] sm:$0xff] %vm1108, %v3053
      %3145 = vst.msk [vmem:[#allocation3 + $0x28] sm:$0xff] %vm1108, %v3055
      %3146 = vst.msk [vmem:[#allocation3 + $0x30] sm:$0xff] %vm1108, %v3057
      %3147 = vst.msk [vmem:[#allocation3 + $0x38] sm:$0xff] %vm1108, %v3059
      %3148 = vst.msk [vmem:[#allocation3 + $0x40] sm:$0xff] %vm1108, %v3061
      %3149 = vst.msk [vmem:[#allocation3 + $0x48] sm:$0xff] %vm1108, %v3063
      %3150 = vst.msk [vmem:[#allocation3 + $0x50] sm:$0xff] %vm1108, %v3065
      %3151 = vst.msk [vmem:[#allocation3 + $0x58] sm:$0xff] %vm1108, %v3067
      %3152 = vst.msk [vmem:[#allocation3 + $0x60] sm:$0xff] %vm1108, %v3069
      %3153 = vst.msk [vmem:[#allocation3 + $0x68] sm:$0xff] %vm1108, %v3071
      %3154 = vst.msk [vmem:[#allocation3 + $0x70] sm:$0xff] %vm1108, %v3073
      %3155 = vst.msk [vmem:[#allocation3 + $0x78] sm:$0xff] %vm1108, %v3075
      %3156 = vst.msk [vmem:[#allocation3 + $0x80] sm:$0xff] %vm1108, %v3077
      %3157 = vst.msk [vmem:[#allocation3 + $0x88] sm:$0xff] %vm1108, %v3079
      %3158 = vst.msk [vmem:[#allocation3 + $0x90] sm:$0xff] %vm1108, %v3081
      %3159 = vst.msk [vmem:[#allocation3 + $0x98] sm:$0xff] %vm1108, %v3083
      %3160 = vst.msk [vmem:[#allocation3 + $0xa0] sm:$0xff] %vm1108, %v3085
      %3161 = vst.msk [vmem:[#allocation3 + $0xa8] sm:$0xff] %vm1108, %v3087
      %3162 = vst.msk [vmem:[#allocation3 + $0xb0] sm:$0xff] %vm1108, %v3089
      %3163 = vst.msk [vmem:[#allocation3 + $0xb8] sm:$0xff] %vm1108, %v3091
      %3164 = vst.msk [vmem:[#allocation3 + $0xc0] sm:$0xff] %vm1108, %v3093
      %3165 = vst.msk [vmem:[#allocation3 + $0xc8] sm:$0xff] %vm1108, %v3095
      %3166 = vst.msk [vmem:[#allocation3 + $0xd0] sm:$0xff] %vm1108, %v3097
      %3167 = vst.msk [vmem:[#allocation3 + $0xd8] sm:$0xff] %vm1108, %v3099
      %3168 = vst.msk [vmem:[#allocation3 + $0xe0] sm:$0xff] %vm1108, %v3101
      %3169 = vst.msk [vmem:[#allocation3 + $0xe8] sm:$0xff] %vm1108, %v3103
      %3170 = vst.msk [vmem:[#allocation3 + $0xf0] sm:$0xff] %vm1108, %v3105
      %3171 = vst.msk [vmem:[#allocation3 + $0xf8] sm:$0xff] %vm1108, %v3107
      %v3172 = vld [vmem:[#allocation2 + $0x2] sm:$0xff]
      %v3173 = vld [vmem:[#allocation2 + $0xa] sm:$0xff]
      %v3174 = vld [vmem:[#allocation2 + $0x1a] sm:$0xff]
      %v3175 = vld [vmem:[#allocation2 + $0x22] sm:$0xff]
      %v3176 = vld [vmem:[#allocation2 + $0x32] sm:$0xff]
      %v3177 = vld [vmem:[#allocation2 + $0x3a] sm:$0xff]
      %v3178 = vld [vmem:[#allocation2 + $0x4a] sm:$0xff]
      %v3179 = vld [vmem:[#allocation2 + $0x52] sm:$0xff]
      %v3180 = vld [vmem:[#allocation2 + $0x62] sm:$0xff]
      %v3181 = vld [vmem:[#allocation2 + $0x6a] sm:$0xff]
      %v3182 = vld [vmem:[#allocation2 + $0x7a] sm:$0xff]
      %v3183 = vld [vmem:[#allocation2 + $0x82] sm:$0xff]
      %v3184 = vld [vmem:[#allocation2 + $0x92] sm:$0xff]
      %v3185 = vld [vmem:[#allocation2 + $0x9a] sm:$0xff]
      %v3186 = vld [vmem:[#allocation2 + $0xaa] sm:$0xff]
      %v3187 = vld [vmem:[#allocation2 + $0xb2] sm:$0xff]
      %v3188 = vld [vmem:[#allocation2 + $0xc2] sm:$0xff]
      %v3189 = vld [vmem:[#allocation2 + $0xca] sm:$0xff]
      %v3190 = vld [vmem:[#allocation2 + $0xda] sm:$0xff]
      %v3191 = vld [vmem:[#allocation2 + $0xe2] sm:$0xff]
      %v3192 = vld [vmem:[#allocation2 + $0xf2] sm:$0xff]
      %v3193 = vld [vmem:[#allocation2 + $0xfa] sm:$0xff]
      %v3194 = vld [vmem:[#allocation2 + $0x10a] sm:$0xff]
      %v3195 = vld [vmem:[#allocation2 + $0x112] sm:$0xff]
      %v3196 = vld [vmem:[#allocation2 + $0x122] sm:$0xff]
      %v3197 = vld [vmem:[#allocation2 + $0x12a] sm:$0xff]
      %v3198 = vld [vmem:[#allocation2 + $0x13a] sm:$0xff]
      %v3199 = vld [vmem:[#allocation2 + $0x142] sm:$0xff]
      %v3200 = vld [vmem:[#allocation2 + $0x152] sm:$0xff]
      %v3201 = vld [vmem:[#allocation2 + $0x15a] sm:$0xff]
      %v3202 = vld [vmem:[#allocation2 + $0x16a] sm:$0xff]
      %v3203 = vld [vmem:[#allocation2 + $0x172] sm:$0xff]
      %v3204 = vld [vmem:[#allocation2 + $0x182] sm:$0xff]
      %v3205 = vld [vmem:[#allocation2 + $0x18a] sm:$0xff]
      %v3206 = vld [vmem:[#allocation2 + $0x19a] sm:$0xff]
      %v3207 = vld [vmem:[#allocation2 + $0x1a2] sm:$0xff]
      %3240 = vrot.lane.b32.xlu0 %v3172, 8
      %v3241 = vpop.permute.xlu0 %3240
      %3242 = vrot.lane.b32.xlu0 %v3173, 8
      %v3243 = vpop.permute.xlu0 %3242
      %3244 = vrot.lane.b32.xlu0 %v3174, 8
      %v3245 = vpop.permute.xlu0 %3244
      %3246 = vrot.lane.b32.xlu0 %v3175, 8
      %v3247 = vpop.permute.xlu0 %3246
      %3248 = vrot.lane.b32.xlu0 %v3176, 8
      %v3249 = vpop.permute.xlu0 %3248
      %3250 = vrot.lane.b32.xlu0 %v3177, 8
      %v3251 = vpop.permute.xlu0 %3250
      %3252 = vrot.lane.b32.xlu0 %v3178, 8
      %v3253 = vpop.permute.xlu0 %3252
      %3254 = vrot.lane.b32.xlu0 %v3179, 8
      %v3255 = vpop.permute.xlu0 %3254
      %3256 = vrot.lane.b32.xlu0 %v3180, 8
      %v3257 = vpop.permute.xlu0 %3256
      %3258 = vrot.lane.b32.xlu0 %v3181, 8
      %v3259 = vpop.permute.xlu0 %3258
      %3260 = vrot.lane.b32.xlu0 %v3182, 8
      %v3261 = vpop.permute.xlu0 %3260
      %3262 = vrot.lane.b32.xlu0 %v3183, 8
      %v3263 = vpop.permute.xlu0 %3262
      %3264 = vrot.lane.b32.xlu0 %v3184, 8
      %v3265 = vpop.permute.xlu0 %3264
      %3266 = vrot.lane.b32.xlu0 %v3185, 8
      %v3267 = vpop.permute.xlu0 %3266
      %3268 = vrot.lane.b32.xlu0 %v3186, 8
      %v3269 = vpop.permute.xlu0 %3268
      %3270 = vrot.lane.b32.xlu0 %v3187, 8
      %v3271 = vpop.permute.xlu0 %3270
      %3272 = vrot.lane.b32.xlu0 %v3188, 8
      %v3273 = vpop.permute.xlu0 %3272
      %3274 = vrot.lane.b32.xlu0 %v3189, 8
      %v3275 = vpop.permute.xlu0 %3274
      %3276 = vrot.lane.b32.xlu0 %v3190, 8
      %v3277 = vpop.permute.xlu0 %3276
      %3278 = vrot.lane.b32.xlu0 %v3191, 8
      %v3279 = vpop.permute.xlu0 %3278
      %3280 = vrot.lane.b32.xlu0 %v3192, 8
      %v3281 = vpop.permute.xlu0 %3280
      %3282 = vrot.lane.b32.xlu0 %v3193, 8
      %v3283 = vpop.permute.xlu0 %3282
      %3284 = vrot.lane.b32.xlu0 %v3194, 8
      %v3285 = vpop.permute.xlu0 %3284
      %3286 = vrot.lane.b32.xlu0 %v3195, 8
      %v3287 = vpop.permute.xlu0 %3286
      %3288 = vrot.lane.b32.xlu0 %v3196, 8
      %v3289 = vpop.permute.xlu0 %3288
      %3290 = vrot.lane.b32.xlu0 %v3197, 8
      %v3291 = vpop.permute.xlu0 %3290
      %3292 = vrot.lane.b32.xlu0 %v3198, 8
      %v3293 = vpop.permute.xlu0 %3292
      %3294 = vrot.lane.b32.xlu0 %v3199, 8
      %v3295 = vpop.permute.xlu0 %3294
      %3296 = vrot.lane.b32.xlu0 %v3200, 8
      %v3297 = vpop.permute.xlu0 %3296
      %3298 = vrot.lane.b32.xlu0 %v3201, 8
      %v3299 = vpop.permute.xlu0 %3298
      %3300 = vrot.lane.b32.xlu0 %v3202, 8
      %v3301 = vpop.permute.xlu0 %3300
      %3302 = vrot.lane.b32.xlu0 %v3203, 8
      %v3303 = vpop.permute.xlu0 %3302
      %3336 = vst.msk [vmem:[#allocation3] sm:$0xff] %vm1305, %v3241
      %3337 = vst.msk [vmem:[#allocation3 + $0x8] sm:$0xff] %vm1305, %v3243
      %3338 = vst.msk [vmem:[#allocation3 + $0x10] sm:$0xff] %vm1305, %v3245
      %3339 = vst.msk [vmem:[#allocation3 + $0x18] sm:$0xff] %vm1305, %v3247
      %3340 = vst.msk [vmem:[#allocation3 + $0x20] sm:$0xff] %vm1305, %v3249
      %3341 = vst.msk [vmem:[#allocation3 + $0x28] sm:$0xff] %vm1305, %v3251
      %3342 = vst.msk [vmem:[#allocation3 + $0x30] sm:$0xff] %vm1305, %v3253
      %3343 = vst.msk [vmem:[#allocation3 + $0x38] sm:$0xff] %vm1305, %v3255
      %3344 = vst.msk [vmem:[#allocation3 + $0x40] sm:$0xff] %vm1305, %v3257
      %3345 = vst.msk [vmem:[#allocation3 + $0x48] sm:$0xff] %vm1305, %v3259
      %3346 = vst.msk [vmem:[#allocation3 + $0x50] sm:$0xff] %vm1305, %v3261
      %3347 = vst.msk [vmem:[#allocation3 + $0x58] sm:$0xff] %vm1305, %v3263
      %3348 = vst.msk [vmem:[#allocation3 + $0x60] sm:$0xff] %vm1305, %v3265
      %3349 = vst.msk [vmem:[#allocation3 + $0x68] sm:$0xff] %vm1305, %v3267
      %3350 = vst.msk [vmem:[#allocation3 + $0x70] sm:$0xff] %vm1305, %v3269
      %3351 = vst.msk [vmem:[#allocation3 + $0x78] sm:$0xff] %vm1305, %v3271
      %3352 = vst.msk [vmem:[#allocation3 + $0x80] sm:$0xff] %vm1305, %v3273
      %3353 = vst.msk [vmem:[#allocation3 + $0x88] sm:$0xff] %vm1305, %v3275
      %3354 = vst.msk [vmem:[#allocation3 + $0x90] sm:$0xff] %vm1305, %v3277
      %3355 = vst.msk [vmem:[#allocation3 + $0x98] sm:$0xff] %vm1305, %v3279
      %3356 = vst.msk [vmem:[#allocation3 + $0xa0] sm:$0xff] %vm1305, %v3281
      %3357 = vst.msk [vmem:[#allocation3 + $0xa8] sm:$0xff] %vm1305, %v3283
      %3358 = vst.msk [vmem:[#allocation3 + $0xb0] sm:$0xff] %vm1305, %v3285
      %3359 = vst.msk [vmem:[#allocation3 + $0xb8] sm:$0xff] %vm1305, %v3287
      %3360 = vst.msk [vmem:[#allocation3 + $0xc0] sm:$0xff] %vm1305, %v3289
      %3361 = vst.msk [vmem:[#allocation3 + $0xc8] sm:$0xff] %vm1305, %v3291
      %3362 = vst.msk [vmem:[#allocation3 + $0xd0] sm:$0xff] %vm1305, %v3293
      %3363 = vst.msk [vmem:[#allocation3 + $0xd8] sm:$0xff] %vm1305, %v3295
      %3364 = vst.msk [vmem:[#allocation3 + $0xe0] sm:$0xff] %vm1305, %v3297
      %3365 = vst.msk [vmem:[#allocation3 + $0xe8] sm:$0xff] %vm1305, %v3299
      %3366 = vst.msk [vmem:[#allocation3 + $0xf0] sm:$0xff] %vm1305, %v3301
      %3367 = vst.msk [vmem:[#allocation3 + $0xf8] sm:$0xff] %vm1305, %v3303
      %3370 = vrot.lane.b32.xlu0 %v3174, 20
      %v3371 = vpop.permute.xlu0 %3370
      %3372 = vrot.lane.b32.xlu0 %v3175, 20
      %v3373 = vpop.permute.xlu0 %3372
      %3374 = vrot.lane.b32.xlu0 %v3176, 20
      %v3375 = vpop.permute.xlu0 %3374
      %3376 = vrot.lane.b32.xlu0 %v3177, 20
      %v3377 = vpop.permute.xlu0 %3376
      %3378 = vrot.lane.b32.xlu0 %v3178, 20
      %v3379 = vpop.permute.xlu0 %3378
      %3380 = vrot.lane.b32.xlu0 %v3179, 20
      %v3381 = vpop.permute.xlu0 %3380
      %3382 = vrot.lane.b32.xlu0 %v3180, 20
      %v3383 = vpop.permute.xlu0 %3382
      %3384 = vrot.lane.b32.xlu0 %v3181, 20
      %v3385 = vpop.permute.xlu0 %3384
      %3386 = vrot.lane.b32.xlu0 %v3182, 20
      %v3387 = vpop.permute.xlu0 %3386
      %3388 = vrot.lane.b32.xlu0 %v3183, 20
      %v3389 = vpop.permute.xlu0 %3388
      %3390 = vrot.lane.b32.xlu0 %v3184, 20
      %v3391 = vpop.permute.xlu0 %3390
      %3392 = vrot.lane.b32.xlu0 %v3185, 20
      %v3393 = vpop.permute.xlu0 %3392
      %3394 = vrot.lane.b32.xlu0 %v3186, 20
      %v3395 = vpop.permute.xlu0 %3394
      %3396 = vrot.lane.b32.xlu0 %v3187, 20
      %v3397 = vpop.permute.xlu0 %3396
      %3398 = vrot.lane.b32.xlu0 %v3188, 20
      %v3399 = vpop.permute.xlu0 %3398
      %3400 = vrot.lane.b32.xlu0 %v3189, 20
      %v3401 = vpop.permute.xlu0 %3400
      %3402 = vrot.lane.b32.xlu0 %v3190, 20
      %v3403 = vpop.permute.xlu0 %3402
      %3404 = vrot.lane.b32.xlu0 %v3191, 20
      %v3405 = vpop.permute.xlu0 %3404
      %3406 = vrot.lane.b32.xlu0 %v3192, 20
      %v3407 = vpop.permute.xlu0 %3406
      %3408 = vrot.lane.b32.xlu0 %v3193, 20
      %v3409 = vpop.permute.xlu0 %3408
      %3410 = vrot.lane.b32.xlu0 %v3194, 20
      %v3411 = vpop.permute.xlu0 %3410
      %3412 = vrot.lane.b32.xlu0 %v3195, 20
      %v3413 = vpop.permute.xlu0 %3412
      %3414 = vrot.lane.b32.xlu0 %v3196, 20
      %v3415 = vpop.permute.xlu0 %3414
      %3416 = vrot.lane.b32.xlu0 %v3197, 20
      %v3417 = vpop.permute.xlu0 %3416
      %3418 = vrot.lane.b32.xlu0 %v3198, 20
      %v3419 = vpop.permute.xlu0 %3418
      %3420 = vrot.lane.b32.xlu0 %v3199, 20
      %v3421 = vpop.permute.xlu0 %3420
      %3422 = vrot.lane.b32.xlu0 %v3200, 20
      %v3423 = vpop.permute.xlu0 %3422
      %3424 = vrot.lane.b32.xlu0 %v3201, 20
      %v3425 = vpop.permute.xlu0 %3424
      %3426 = vrot.lane.b32.xlu0 %v3202, 20
      %v3427 = vpop.permute.xlu0 %3426
      %3428 = vrot.lane.b32.xlu0 %v3203, 20
      %v3429 = vpop.permute.xlu0 %3428
      %3430 = vrot.lane.b32.xlu0 %v3204, 20
      %v3431 = vpop.permute.xlu0 %3430
      %3432 = vrot.lane.b32.xlu0 %v3205, 20
      %v3433 = vpop.permute.xlu0 %3432
      %3466 = vst.msk [vmem:[#allocation3] sm:$0xff] %vm1436, %v3371
      %3467 = vst.msk [vmem:[#allocation3 + $0x8] sm:$0xff] %vm1436, %v3373
      %3468 = vst.msk [vmem:[#allocation3 + $0x10] sm:$0xff] %vm1436, %v3375
      %3469 = vst.msk [vmem:[#allocation3 + $0x18] sm:$0xff] %vm1436, %v3377
      %3470 = vst.msk [vmem:[#allocation3 + $0x20] sm:$0xff] %vm1436, %v3379
      %3471 = vst.msk [vmem:[#allocation3 + $0x28] sm:$0xff] %vm1436, %v3381
      %3472 = vst.msk [vmem:[#allocation3 + $0x30] sm:$0xff] %vm1436, %v3383
      %3473 = vst.msk [vmem:[#allocation3 + $0x38] sm:$0xff] %vm1436, %v3385
      %3474 = vst.msk [vmem:[#allocation3 + $0x40] sm:$0xff] %vm1436, %v3387
      %3475 = vst.msk [vmem:[#allocation3 + $0x48] sm:$0xff] %vm1436, %v3389
      %3476 = vst.msk [vmem:[#allocation3 + $0x50] sm:$0xff] %vm1436, %v3391
      %3477 = vst.msk [vmem:[#allocation3 + $0x58] sm:$0xff] %vm1436, %v3393
      %3478 = vst.msk [vmem:[#allocation3 + $0x60] sm:$0xff] %vm1436, %v3395
      %3479 = vst.msk [vmem:[#allocation3 + $0x68] sm:$0xff] %vm1436, %v3397
      %3480 = vst.msk [vmem:[#allocation3 + $0x70] sm:$0xff] %vm1436, %v3399
      %3481 = vst.msk [vmem:[#allocation3 + $0x78] sm:$0xff] %vm1436, %v3401
      %3482 = vst.msk [vmem:[#allocation3 + $0x80] sm:$0xff] %vm1436, %v3403
      %3483 = vst.msk [vmem:[#allocation3 + $0x88] sm:$0xff] %vm1436, %v3405
      %3484 = vst.msk [vmem:[#allocation3 + $0x90] sm:$0xff] %vm1436, %v3407
      %3485 = vst.msk [vmem:[#allocation3 + $0x98] sm:$0xff] %vm1436, %v3409
      %3486 = vst.msk [vmem:[#allocation3 + $0xa0] sm:$0xff] %vm1436, %v3411
      %3487 = vst.msk [vmem:[#allocation3 + $0xa8] sm:$0xff] %vm1436, %v3413
      %3488 = vst.msk [vmem:[#allocation3 + $0xb0] sm:$0xff] %vm1436, %v3415
      %3489 = vst.msk [vmem:[#allocation3 + $0xb8] sm:$0xff] %vm1436, %v3417
      %3490 = vst.msk [vmem:[#allocation3 + $0xc0] sm:$0xff] %vm1436, %v3419
      %3491 = vst.msk [vmem:[#allocation3 + $0xc8] sm:$0xff] %vm1436, %v3421
      %3492 = vst.msk [vmem:[#allocation3 + $0xd0] sm:$0xff] %vm1436, %v3423
      %3493 = vst.msk [vmem:[#allocation3 + $0xd8] sm:$0xff] %vm1436, %v3425
      %3494 = vst.msk [vmem:[#allocation3 + $0xe0] sm:$0xff] %vm1436, %v3427
      %3495 = vst.msk [vmem:[#allocation3 + $0xe8] sm:$0xff] %vm1436, %v3429
      %3496 = vst.msk [vmem:[#allocation3 + $0xf0] sm:$0xff] %vm1436, %v3431
      %3497 = vst.msk [vmem:[#allocation3 + $0xf8] sm:$0xff] %vm1436, %v3433
      %3500 = vrot.lane.b32.xlu0 %v3176, 32
      %v3501 = vpop.permute.xlu0 %3500
      %3502 = vrot.lane.b32.xlu0 %v3177, 32
      %v3503 = vpop.permute.xlu0 %3502
      %3504 = vrot.lane.b32.xlu0 %v3178, 32
      %v3505 = vpop.permute.xlu0 %3504
      %3506 = vrot.lane.b32.xlu0 %v3179, 32
      %v3507 = vpop.permute.xlu0 %3506
      %3508 = vrot.lane.b32.xlu0 %v3180, 32
      %v3509 = vpop.permute.xlu0 %3508
      %3510 = vrot.lane.b32.xlu0 %v3181, 32
      %v3511 = vpop.permute.xlu0 %3510
      %3512 = vrot.lane.b32.xlu0 %v3182, 32
      %v3513 = vpop.permute.xlu0 %3512
      %3514 = vrot.lane.b32.xlu0 %v3183, 32
      %v3515 = vpop.permute.xlu0 %3514
      %3516 = vrot.lane.b32.xlu0 %v3184, 32
      %v3517 = vpop.permute.xlu0 %3516
      %3518 = vrot.lane.b32.xlu0 %v3185, 32
      %v3519 = vpop.permute.xlu0 %3518
      %3520 = vrot.lane.b32.xlu0 %v3186, 32
      %v3521 = vpop.permute.xlu0 %3520
      %3522 = vrot.lane.b32.xlu0 %v3187, 32
      %v3523 = vpop.permute.xlu0 %3522
      %3524 = vrot.lane.b32.xlu0 %v3188, 32
      %v3525 = vpop.permute.xlu0 %3524
      %3526 = vrot.lane.b32.xlu0 %v3189, 32
      %v3527 = vpop.permute.xlu0 %3526
      %3528 = vrot.lane.b32.xlu0 %v3190, 32
      %v3529 = vpop.permute.xlu0 %3528
      %3530 = vrot.lane.b32.xlu0 %v3191, 32
      %v3531 = vpop.permute.xlu0 %3530
      %3532 = vrot.lane.b32.xlu0 %v3192, 32
      %v3533 = vpop.permute.xlu0 %3532
      %3534 = vrot.lane.b32.xlu0 %v3193, 32
      %v3535 = vpop.permute.xlu0 %3534
      %3536 = vrot.lane.b32.xlu0 %v3194, 32
      %v3537 = vpop.permute.xlu0 %3536
      %3538 = vrot.lane.b32.xlu0 %v3195, 32
      %v3539 = vpop.permute.xlu0 %3538
      %3540 = vrot.lane.b32.xlu0 %v3196, 32
      %v3541 = vpop.permute.xlu0 %3540
      %3542 = vrot.lane.b32.xlu0 %v3197, 32
      %v3543 = vpop.permute.xlu0 %3542
      %3544 = vrot.lane.b32.xlu0 %v3198, 32
      %v3545 = vpop.permute.xlu0 %3544
      %3546 = vrot.lane.b32.xlu0 %v3199, 32
      %v3547 = vpop.permute.xlu0 %3546
      %3548 = vrot.lane.b32.xlu0 %v3200, 32
      %v3549 = vpop.permute.xlu0 %3548
      %3550 = vrot.lane.b32.xlu0 %v3201, 32
      %v3551 = vpop.permute.xlu0 %3550
      %3552 = vrot.lane.b32.xlu0 %v3202, 32
      %v3553 = vpop.permute.xlu0 %3552
      %3554 = vrot.lane.b32.xlu0 %v3203, 32
      %v3555 = vpop.permute.xlu0 %3554
      %3556 = vrot.lane.b32.xlu0 %v3204, 32
      %v3557 = vpop.permute.xlu0 %3556
      %3558 = vrot.lane.b32.xlu0 %v3205, 32
      %v3559 = vpop.permute.xlu0 %3558
      %3560 = vrot.lane.b32.xlu0 %v3206, 32
      %v3561 = vpop.permute.xlu0 %3560
      %3562 = vrot.lane.b32.xlu0 %v3207, 32
      %v3563 = vpop.permute.xlu0 %3562
      %3596 = vst.msk [vmem:[#allocation3] sm:$0xff] %vm1567, %v3501
      %3597 = vst.msk [vmem:[#allocation3 + $0x8] sm:$0xff] %vm1567, %v3503
      %3598 = vst.msk [vmem:[#allocation3 + $0x10] sm:$0xff] %vm1567, %v3505
      %3599 = vst.msk [vmem:[#allocation3 + $0x18] sm:$0xff] %vm1567, %v3507
      %3600 = vst.msk [vmem:[#allocation3 + $0x20] sm:$0xff] %vm1567, %v3509
      %3601 = vst.msk [vmem:[#allocation3 + $0x28] sm:$0xff] %vm1567, %v3511
      %3602 = vst.msk [vmem:[#allocation3 + $0x30] sm:$0xff] %vm1567, %v3513
      %3603 = vst.msk [vmem:[#allocation3 + $0x38] sm:$0xff] %vm1567, %v3515
      %3604 = vst.msk [vmem:[#allocation3 + $0x40] sm:$0xff] %vm1567, %v3517
      %3605 = vst.msk [vmem:[#allocation3 + $0x48] sm:$0xff] %vm1567, %v3519
      %3606 = vst.msk [vmem:[#allocation3 + $0x50] sm:$0xff] %vm1567, %v3521
      %3607 = vst.msk [vmem:[#allocation3 + $0x58] sm:$0xff] %vm1567, %v3523
      %3608 = vst.msk [vmem:[#allocation3 + $0x60] sm:$0xff] %vm1567, %v3525
      %3609 = vst.msk [vmem:[#allocation3 + $0x68] sm:$0xff] %vm1567, %v3527
      %3610 = vst.msk [vmem:[#allocation3 + $0x70] sm:$0xff] %vm1567, %v3529
      %3611 = vst.msk [vmem:[#allocation3 + $0x78] sm:$0xff] %vm1567, %v3531
      %3612 = vst.msk [vmem:[#allocation3 + $0x80] sm:$0xff] %vm1567, %v3533
      %3613 = vst.msk [vmem:[#allocation3 + $0x88] sm:$0xff] %vm1567, %v3535
      %3614 = vst.msk [vmem:[#allocation3 + $0x90] sm:$0xff] %vm1567, %v3537
      %3615 = vst.msk [vmem:[#allocation3 + $0x98] sm:$0xff] %vm1567, %v3539
      %3616 = vst.msk [vmem:[#allocation3 + $0xa0] sm:$0xff] %vm1567, %v3541
      %3617 = vst.msk [vmem:[#allocation3 + $0xa8] sm:$0xff] %vm1567, %v3543
      %3618 = vst.msk [vmem:[#allocation3 + $0xb0] sm:$0xff] %vm1567, %v3545
      %3619 = vst.msk [vmem:[#allocation3 + $0xb8] sm:$0xff] %vm1567, %v3547
      %3620 = vst.msk [vmem:[#allocation3 + $0xc0] sm:$0xff] %vm1567, %v3549
      %3621 = vst.msk [vmem:[#allocation3 + $0xc8] sm:$0xff] %vm1567, %v3551
      %3622 = vst.msk [vmem:[#allocation3 + $0xd0] sm:$0xff] %vm1567, %v3553
      %3623 = vst.msk [vmem:[#allocation3 + $0xd8] sm:$0xff] %vm1567, %v3555
      %3624 = vst.msk [vmem:[#allocation3 + $0xe0] sm:$0xff] %vm1567, %v3557
      %3625 = vst.msk [vmem:[#allocation3 + $0xe8] sm:$0xff] %vm1567, %v3559
      %3626 = vst.msk [vmem:[#allocation3 + $0xf0] sm:$0xff] %vm1567, %v3561
      %3627 = vst.msk [vmem:[#allocation3 + $0xf8] sm:$0xff] %vm1567, %v3563
      %v3628 = vld [vmem:[#allocation3] sm:$0xff]
      %v3629 = vld [vmem:[#allocation3 + $0x8] sm:$0xff]
      %v3630 = vld [vmem:[#allocation3 + $0x10] sm:$0xff]
      %v3631 = vld [vmem:[#allocation3 + $0x18] sm:$0xff]
      %v3632 = vld [vmem:[#allocation3 + $0x20] sm:$0xff]
      %v3633 = vld [vmem:[#allocation3 + $0x28] sm:$0xff]
      %v3634 = vld [vmem:[#allocation3 + $0x30] sm:$0xff]
      %v3635 = vld [vmem:[#allocation3 + $0x38] sm:$0xff]
      %v3636 = vld [vmem:[#allocation3 + $0x40] sm:$0xff]
      %v3637 = vld [vmem:[#allocation3 + $0x48] sm:$0xff]
      %v3638 = vld [vmem:[#allocation3 + $0x50] sm:$0xff]
      %v3639 = vld [vmem:[#allocation3 + $0x58] sm:$0xff]
      %v3640 = vld [vmem:[#allocation3 + $0x60] sm:$0xff]
      %v3641 = vld [vmem:[#allocation3 + $0x68] sm:$0xff]
      %v3642 = vld [vmem:[#allocation3 + $0x70] sm:$0xff]
      %v3643 = vld [vmem:[#allocation3 + $0x78] sm:$0xff]
      %v3644 = vld [vmem:[#allocation3 + $0x80] sm:$0xff]
      %v3645 = vld [vmem:[#allocation3 + $0x88] sm:$0xff]
      %v3646 = vld [vmem:[#allocation3 + $0x90] sm:$0xff]
      %v3647 = vld [vmem:[#allocation3 + $0x98] sm:$0xff]
      %v3648 = vld [vmem:[#allocation3 + $0xa0] sm:$0xff]
      %v3649 = vld [vmem:[#allocation3 + $0xa8] sm:$0xff]
      %v3650 = vld [vmem:[#allocation3 + $0xb0] sm:$0xff]
      %v3651 = vld [vmem:[#allocation3 + $0xb8] sm:$0xff]
      %v3652 = vld [vmem:[#allocation3 + $0xc0] sm:$0xff]
      %v3653 = vld [vmem:[#allocation3 + $0xc8] sm:$0xff]
      %v3654 = vld [vmem:[#allocation3 + $0xd0] sm:$0xff]
      %v3655 = vld [vmem:[#allocation3 + $0xd8] sm:$0xff]
      %v3656 = vld [vmem:[#allocation3 + $0xe0] sm:$0xff]
      %v3657 = vld [vmem:[#allocation3 + $0xe8] sm:$0xff]
      %v3658 = vld [vmem:[#allocation3 + $0xf0] sm:$0xff]
      %v3659 = vld [vmem:[#allocation3 + $0xf8] sm:$0xff]
      %v3661 = vsel %vm1632, %v3628, 0
      %v3664 = vsel %vm1632, %v3629, 0
      %v3667 = vsel %vm1632, %v3630, 0
      %v3670 = vsel %vm1632, %v3631, 0
      %v3673 = vsel %vm1632, %v3632, 0
      %v3676 = vsel %vm1632, %v3633, 0
      %v3679 = vsel %vm1632, %v3634, 0
      %v3682 = vsel %vm1632, %v3635, 0
      %v3685 = vsel %vm1632, %v3636, 0
      %v3688 = vsel %vm1632, %v3637, 0
      %v3691 = vsel %vm1632, %v3638, 0
      %v3694 = vsel %vm1632, %v3639, 0
      %v3697 = vsel %vm1632, %v3640, 0
      %v3700 = vsel %vm1632, %v3641, 0
      %v3703 = vsel %vm1632, %v3642, 0
      %v3706 = vsel %vm1632, %v3643, 0
      %v3709 = vsel %vm1632, %v3644, 0
      %v3712 = vsel %vm1632, %v3645, 0
      %v3715 = vsel %vm1632, %v3646, 0
      %v3718 = vsel %vm1632, %v3647, 0
      %v3721 = vsel %vm1632, %v3648, 0
      %v3724 = vsel %vm1632, %v3649, 0
      %v3727 = vsel %vm1632, %v3650, 0
      %v3730 = vsel %vm1632, %v3651, 0
      %v3733 = vsel %vm1632, %v3652, 0
      %v3736 = vsel %vm1632, %v3653, 0
      %v3739 = vsel %vm1632, %v3654, 0
      %v3742 = vsel %vm1632, %v3655, 0
      %v3745 = vsel %vm1632, %v3656, 0
      %v3748 = vsel %vm1632, %v3657, 0
      %v3751 = vsel %vm1632, %v3658, 0
      %v3754 = vsel %vm1632, %v3659, 0
      %v3757 = vsel %vm1729, %v2247, 0
      %3759 = vmatprep.subr.mxu0 0.0
      %3760 = vmatpush1.msra.mxu0 0.0
      %3761 = vmatprep.subr.mxu0 0.0
      %3762 = vmatpush1.msra.mxu0 0.0
      %3763 = vmatprep.subr.mxu0 0.0
      %3764 = vmatpush1.msra.mxu0 0.0
      %3765 = vmatprep.subr.mxu0 0.0
      %3766 = vmatpush1.msra.mxu0 0.0
      %3767 = vmatprep.subr.mxu0 0.0
      %3768 = vmatpush1.msra.mxu0 0.0
      %3769 = vmatprep.subr.mxu0 0.0
      %3770 = vmatpush1.msra.mxu0 0.0
      %3771 = vmatprep.subr.mxu0 0.0
      %3772 = vmatpush1.msra.mxu0 0.0
      %3773 = vmatprep.subr.mxu0 0.0
      %3774 = vmatpush1.msra.mxu0 0.0
      %3775 = vmatprep.subr.mxu0 0.0
      %3776 = vmatpush1.msra.mxu0 0.0
      %3777 = vmatprep.subr.mxu0 0.0
      %3778 = vmatpush1.msra.mxu0 0.0
      %3779 = vmatprep.subr.mxu0 0.0
      %3780 = vmatpush1.msra.mxu0 0.0
      %3781 = vmatprep.subr.mxu0 0.0
      %3782 = vmatpush1.msra.mxu0 %v3757
      %3783 = vmatprep.subr.mxu0 0.0
      %3784 = vmatpush1.msra.mxu0 %v2246
      %3785 = vmatprep.subr.mxu0 0.0
      %3786 = vmatpush1.msra.mxu0 %v2245
      %3787 = vmatprep.subr.mxu0 0.0
      %3788 = vmatpush1.msra.mxu0 %v2244
      %3789 = vmatprep.subr.mxu0 0.0
      %3790 = vmatpush1.msra.mxu0 %v2243
      %3791 = vmatprep.subr.mxu0 0.0
      %3792 = vmatpush2.msra.mxu0 0.0
      %3793 = vmatprep.subr.mxu0 0.0
      %3794 = vmatpush2.msra.mxu0 0.0
      %3795 = vmatprep.subr.mxu0 0.0
      %3796 = vmatpush2.msra.mxu0 0.0
      %3797 = vmatprep.subr.mxu0 0.0
      %3798 = vmatpush2.msra.mxu0 0.0
      %3799 = vmatprep.subr.mxu0 0.0
      %3800 = vmatpush2.msra.mxu0 0.0
      %3801 = vmatprep.subr.mxu0 0.0
      %3802 = vmatpush2.msra.mxu0 0.0
      %3803 = vmatprep.subr.mxu0 0.0
      %3804 = vmatpush2.msra.mxu0 0.0
      %3805 = vmatprep.subr.mxu0 0.0
      %3806 = vmatpush2.msra.mxu0 0.0
      %3807 = vmatprep.subr.mxu0 0.0
      %3808 = vmatpush2.msra.mxu0 0.0
      %3809 = vmatprep.subr.mxu0 0.0
      %3810 = vmatpush2.msra.mxu0 0.0
      %3811 = vmatprep.subr.mxu0 0.0
      %3812 = vmatpush2.msra.mxu0 0.0
      %3813 = vmatprep.subr.mxu0 0.0
      %3814 = vmatpush2.msra.mxu0 0.0
      %3815 = vmatprep.subr.mxu0 0.0
      %3816 = vmatpush2.msra.mxu0 0.0
      %3817 = vmatprep.subr.mxu0 0.0
      %3818 = vmatpush2.msra.mxu0 0.0
      %3819 = vmatprep.subr.mxu0 0.0
      %3820 = vmatpush2.msra.mxu0 0.0
      %3821 = vmatprep.subr.mxu0 0.0
      %3822 = vmatpush2.msra.mxu0 0.0
      %3823 = vmatprep.mubr.f32.mxu0 0.0
      %3824 = vmatmul.mubr.f32.gmra.mxu0 %v3661
      %v3825 = vpop.f32.mrf.mxu0
      %v3826 = vadd.f32 0.0, %v3825
      %v3827 = vpop.f32.mrf.mxu0
      %3828 = vmatprep.mubr.f32.mxu0 0.0
      %3829 = vmatmul.mubr.f32.gmra.mxu0 %v3664
      %v3830 = vpop.f32.mrf.mxu0
      %v3831 = vadd.f32 0.0, %v3830
      %v3832 = vpop.f32.mrf.mxu0
      %3833 = vmatprep.mubr.f32.mxu0 0.0
      %3834 = vmatmul.mubr.f32.gmra.mxu0 %v3667
      %v3835 = vpop.f32.mrf.mxu0
      %v3836 = vadd.f32 0.0, %v3835
      %v3837 = vpop.f32.mrf.mxu0
      %3838 = vmatprep.mubr.f32.mxu0 0.0
      %3839 = vmatmul.mubr.f32.gmra.mxu0 %v3670
      %v3840 = vpop.f32.mrf.mxu0
      %v3841 = vadd.f32 0.0, %v3840
      %v3842 = vpop.f32.mrf.mxu0
      %3843 = vmatprep.mubr.f32.mxu0 0.0
      %3844 = vmatmul.mubr.f32.gmra.mxu0 %v3673
      %v3845 = vpop.f32.mrf.mxu0
      %v3846 = vadd.f32 0.0, %v3845
      %v3847 = vpop.f32.mrf.mxu0
      %3848 = vmatprep.mubr.f32.mxu0 0.0
      %3849 = vmatmul.mubr.f32.gmra.mxu0 %v3676
      %v3850 = vpop.f32.mrf.mxu0
      %v3851 = vadd.f32 0.0, %v3850
      %v3852 = vpop.f32.mrf.mxu0
      %3853 = vmatprep.mubr.f32.mxu0 0.0
      %3854 = vmatmul.mubr.f32.gmra.mxu0 %v3679
      %v3855 = vpop.f32.mrf.mxu0
      %v3856 = vadd.f32 0.0, %v3855
      %v3857 = vpop.f32.mrf.mxu0
      %3858 = vmatprep.mubr.f32.mxu0 0.0
      %3859 = vmatmul.mubr.f32.gmra.mxu0 %v3682
      %v3860 = vpop.f32.mrf.mxu0
      %v3861 = vadd.f32 0.0, %v3860
      %v3862 = vpop.f32.mrf.mxu0
      %3863 = vmatprep.mubr.f32.mxu0 0.0
      %3864 = vmatmul.mubr.f32.gmra.mxu0 %v3685
      %v3865 = vpop.f32.mrf.mxu0
      %v3866 = vadd.f32 0.0, %v3865
      %v3867 = vpop.f32.mrf.mxu0
      %3868 = vmatprep.mubr.f32.mxu0 0.0
      %3869 = vmatmul.mubr.f32.gmra.mxu0 %v3688
      %v3870 = vpop.f32.mrf.mxu0
      %v3871 = vadd.f32 0.0, %v3870
      %v3872 = vpop.f32.mrf.mxu0
      %3873 = vmatprep.mubr.f32.mxu0 0.0
      %3874 = vmatmul.mubr.f32.gmra.mxu0 %v3691
      %v3875 = vpop.f32.mrf.mxu0
      %v3876 = vadd.f32 0.0, %v3875
      %v3877 = vpop.f32.mrf.mxu0
      %3878 = vmatprep.mubr.f32.mxu0 0.0
      %3879 = vmatmul.mubr.f32.gmra.mxu0 %v3694
      %v3880 = vpop.f32.mrf.mxu0
      %v3881 = vadd.f32 0.0, %v3880
      %v3882 = vpop.f32.mrf.mxu0
      %3883 = vmatprep.mubr.f32.mxu0 0.0
      %3884 = vmatmul.mubr.f32.gmra.mxu0 %v3697
      %v3885 = vpop.f32.mrf.mxu0
      %v3886 = vadd.f32 0.0, %v3885
      %v3887 = vpop.f32.mrf.mxu0
      %3888 = vmatprep.mubr.f32.mxu0 0.0
      %3889 = vmatmul.mubr.f32.gmra.mxu0 %v3700
      %v3890 = vpop.f32.mrf.mxu0
      %v3891 = vadd.f32 0.0, %v3890
      %v3892 = vpop.f32.mrf.mxu0
      %3893 = vmatprep.mubr.f32.mxu0 0.0
      %3894 = vmatmul.mubr.f32.gmra.mxu0 %v3703
      %v3895 = vpop.f32.mrf.mxu0
      %v3896 = vadd.f32 0.0, %v3895
      %v3897 = vpop.f32.mrf.mxu0
      %3898 = vmatprep.mubr.f32.mxu0 0.0
      %3899 = vmatmul.mubr.f32.gmra.mxu0 %v3706
      %v3900 = vpop.f32.mrf.mxu0
      %v3901 = vadd.f32 0.0, %v3900
      %v3902 = vpop.f32.mrf.mxu0
      %3903 = vmatprep.mubr.f32.mxu0 0.0
      %3904 = vmatmul.mubr.f32.gmra.mxu0 %v3709
      %v3905 = vpop.f32.mrf.mxu0
      %v3906 = vadd.f32 0.0, %v3905
      %v3907 = vpop.f32.mrf.mxu0
      %3908 = vmatprep.mubr.f32.mxu0 0.0
      %3909 = vmatmul.mubr.f32.gmra.mxu0 %v3712
      %v3910 = vpop.f32.mrf.mxu0
      %v3911 = vadd.f32 0.0, %v3910
      %v3912 = vpop.f32.mrf.mxu0
      %3913 = vmatprep.mubr.f32.mxu0 0.0
      %3914 = vmatmul.mubr.f32.gmra.mxu0 %v3715
      %v3915 = vpop.f32.mrf.mxu0
      %v3916 = vadd.f32 0.0, %v3915
      %v3917 = vpop.f32.mrf.mxu0
      %3918 = vmatprep.mubr.f32.mxu0 0.0
      %3919 = vmatmul.mubr.f32.gmra.mxu0 %v3718
      %v3920 = vpop.f32.mrf.mxu0
      %v3921 = vadd.f32 0.0, %v3920
      %v3922 = vpop.f32.mrf.mxu0
      %3923 = vmatprep.mubr.f32.mxu0 0.0
      %3924 = vmatmul.mubr.f32.gmra.mxu0 %v3721
      %v3925 = vpop.f32.mrf.mxu0
      %v3926 = vadd.f32 0.0, %v3925
      %v3927 = vpop.f32.mrf.mxu0
      %3928 = vmatprep.mubr.f32.mxu0 0.0
      %3929 = vmatmul.mubr.f32.gmra.mxu0 %v3724
      %v3930 = vpop.f32.mrf.mxu0
      %v3931 = vadd.f32 0.0, %v3930
      %v3932 = vpop.f32.mrf.mxu0
      %3933 = vmatprep.mubr.f32.mxu0 0.0
      %3934 = vmatmul.mubr.f32.gmra.mxu0 %v3727
      %v3935 = vpop.f32.mrf.mxu0
      %v3936 = vadd.f32 0.0, %v3935
      %v3937 = vpop.f32.mrf.mxu0
      %3938 = vmatprep.mubr.f32.mxu0 0.0
      %3939 = vmatmul.mubr.f32.gmra.mxu0 %v3730
      %v3940 = vpop.f32.mrf.mxu0
      %v3941 = vadd.f32 0.0, %v3940
      %v3942 = vpop.f32.mrf.mxu0
      %3943 = vmatprep.mubr.f32.mxu0 0.0
      %3944 = vmatmul.mubr.f32.gmra.mxu0 %v3733
      %v3945 = vpop.f32.mrf.mxu0
      %v3946 = vadd.f32 0.0, %v3945
      %v3947 = vpop.f32.mrf.mxu0
      %3948 = vmatprep.mubr.f32.mxu0 0.0
      %3949 = vmatmul.mubr.f32.gmra.mxu0 %v3736
      %v3950 = vpop.f32.mrf.mxu0
      %v3951 = vadd.f32 0.0, %v3950
      %v3952 = vpop.f32.mrf.mxu0
      %3953 = vmatprep.mubr.f32.mxu0 0.0
      %3954 = vmatmul.mubr.f32.gmra.mxu0 %v3739
      %v3955 = vpop.f32.mrf.mxu0
      %v3956 = vadd.f32 0.0, %v3955
      %v3957 = vpop.f32.mrf.mxu0
      %3958 = vmatprep.mubr.f32.mxu0 0.0
      %3959 = vmatmul.mubr.f32.gmra.mxu0 %v3742
      %v3960 = vpop.f32.mrf.mxu0
      %v3961 = vadd.f32 0.0, %v3960
      %v3962 = vpop.f32.mrf.mxu0
      %3963 = vmatprep.mubr.f32.mxu0 0.0
      %3964 = vmatmul.mubr.f32.gmra.mxu0 %v3745
      %v3965 = vpop.f32.mrf.mxu0
      %v3966 = vadd.f32 0.0, %v3965
      %v3967 = vpop.f32.mrf.mxu0
      %3968 = vmatprep.mubr.f32.mxu0 0.0
      %3969 = vmatmul.mubr.f32.gmra.mxu0 %v3748
      %v3970 = vpop.f32.mrf.mxu0
      %v3971 = vadd.f32 0.0, %v3970
      %v3972 = vpop.f32.mrf.mxu0
      %3973 = vmatprep.mubr.f32.mxu0 0.0
      %3974 = vmatmul.mubr.f32.gmra.mxu0 %v3751
      %v3975 = vpop.f32.mrf.mxu0
      %v3976 = vadd.f32 0.0, %v3975
      %v3977 = vpop.f32.mrf.mxu0
      %3978 = vmatprep.mubr.f32.mxu0 0.0
      %3979 = vmatmul.mubr.f32.gmra.mxu0 %v3754
      %v3980 = vpop.f32.mrf.mxu0
      %v3981 = vadd.f32 0.0, %v3980
      %v3982 = vpop.f32.mrf.mxu0
      %3983 = vdwg.mxu0
      %v3984 = vsel %vm211, %v3826, 0.0
      %v3985 = vsel %vm211, %v3831, 0.0
      %v3986 = vadd.f32 %v3984, %v3985
      %v3987 = vsel %vm211, %v3836, 0.0
      %v3988 = vadd.f32 %v3986, %v3987
      %v3989 = vsel %vm211, %v3841, 0.0
      %v3990 = vadd.f32 %v3988, %v3989
      %v3991 = vsel %vm211, %v3846, 0.0
      %v3992 = vadd.f32 %v3990, %v3991
      %v3993 = vsel %vm211, %v3851, 0.0
      %v3994 = vadd.f32 %v3992, %v3993
      %v3995 = vsel %vm211, %v3856, 0.0
      %v3996 = vadd.f32 %v3994, %v3995
      %v3997 = vsel %vm211, %v3861, 0.0
      %v3998 = vadd.f32 %v3996, %v3997
      %v3999 = vsel %vm211, %v3866, 0.0
      %v4000 = vadd.f32 %v3998, %v3999
      %v4001 = vsel %vm211, %v3871, 0.0
      %v4002 = vadd.f32 %v4000, %v4001
      %v4003 = vsel %vm211, %v3876, 0.0
      %v4004 = vadd.f32 %v4002, %v4003
      %v4005 = vsel %vm211, %v3881, 0.0
      %v4006 = vadd.f32 %v4004, %v4005
      %v4007 = vsel %vm211, %v3886, 0.0
      %v4008 = vadd.f32 %v4006, %v4007
      %v4009 = vsel %vm211, %v3891, 0.0
      %v4010 = vadd.f32 %v4008, %v4009
      %v4011 = vsel %vm211, %v3896, 0.0
      %v4012 = vadd.f32 %v4010, %v4011
      %v4013 = vsel %vm211, %v3901, 0.0
      %v4014 = vadd.f32 %v4012, %v4013
      %v4015 = vsel %vm211, %v3906, 0.0
      %v4016 = vadd.f32 %v4014, %v4015
      %v4017 = vsel %vm211, %v3911, 0.0
      %v4018 = vadd.f32 %v4016, %v4017
      %v4019 = vsel %vm211, %v3916, 0.0
      %v4020 = vadd.f32 %v4018, %v4019
      %v4021 = vsel %vm211, %v3921, 0.0
      %v4022 = vadd.f32 %v4020, %v4021
      %v4023 = vsel %vm211, %v3926, 0.0
      %v4024 = vadd.f32 %v4022, %v4023
      %v4025 = vsel %vm211, %v3931, 0.0
      %v4026 = vadd.f32 %v4024, %v4025
      %v4027 = vsel %vm211, %v3936, 0.0
      %v4028 = vadd.f32 %v4026, %v4027
      %v4029 = vsel %vm211, %v3941, 0.0
      %v4030 = vadd.f32 %v4028, %v4029
      %v4031 = vsel %vm211, %v3946, 0.0
      %v4032 = vadd.f32 %v4030, %v4031
      %v4033 = vsel %vm211, %v3951, 0.0
      %v4034 = vadd.f32 %v4032, %v4033
      %v4035 = vsel %vm211, %v3956, 0.0
      %v4036 = vadd.f32 %v4034, %v4035
      %v4037 = vsel %vm211, %v3961, 0.0
      %v4038 = vadd.f32 %v4036, %v4037
      %v4039 = vsel %vm211, %v3966, 0.0
      %v4040 = vadd.f32 %v4038, %v4039
      %v4041 = vsel %vm211, %v3971, 0.0
      %v4042 = vadd.f32 %v4040, %v4041
      %v4043 = vsel %vm211, %v3976, 0.0
      %v4044 = vadd.f32 %v4042, %v4043
      %v4045 = vsel %vm211, %v3981, 0.0
      %v4046 = vadd.f32 %v4044, %v4045
      %v4047 = vrot.slane %v4046, 4
      %v4048 = vadd.f32 %v4046, %v4047
      %v4049 = vrot.slane %v4048, 2
      %v4050 = vadd.f32 %v4048, %v4049
      %v4051 = vrot.slane %v4050, 1
      %v4052 = vadd.f32 %v4050, %v4051
      %v4053 = vmul.f32 %v3826, %v3826
      %v4054 = vmul.f32 %v3831, %v3831
      %v4055 = vmul.f32 %v3836, %v3836
      %v4056 = vmul.f32 %v3841, %v3841
      %v4057 = vmul.f32 %v3846, %v3846
      %v4058 = vmul.f32 %v3851, %v3851
      %v4059 = vmul.f32 %v3856, %v3856
      %v4060 = vmul.f32 %v3861, %v3861
      %v4061 = vmul.f32 %v3866, %v3866
      %v4062 = vmul.f32 %v3871, %v3871
      %v4063 = vmul.f32 %v3876, %v3876
      %v4064 = vmul.f32 %v3881, %v3881
      %v4065 = vmul.f32 %v3886, %v3886
      %v4066 = vmul.f32 %v3891, %v3891
      %v4067 = vmul.f32 %v3896, %v3896
      %v4068 = vmul.f32 %v3901, %v3901
      %v4069 = vmul.f32 %v3906, %v3906
      %v4070 = vmul.f32 %v3911, %v3911
      %v4071 = vmul.f32 %v3916, %v3916
      %v4072 = vmul.f32 %v3921, %v3921
      %v4073 = vmul.f32 %v3926, %v3926
      %v4074 = vmul.f32 %v3931, %v3931
      %v4075 = vmul.f32 %v3936, %v3936
      %v4076 = vmul.f32 %v3941, %v3941
      %v4077 = vmul.f32 %v3946, %v3946
      %v4078 = vmul.f32 %v3951, %v3951
      %v4079 = vmul.f32 %v3956, %v3956
      %v4080 = vmul.f32 %v3961, %v3961
      %v4081 = vmul.f32 %v3966, %v3966
      %v4082 = vmul.f32 %v3971, %v3971
      %v4083 = vmul.f32 %v3976, %v3976
      %v4084 = vmul.f32 %v3981, %v3981
      %v4085 = vsel %vm211, %v4053, 0.0
      %v4086 = vsel %vm211, %v4054, 0.0
      %v4087 = vadd.f32 %v4085, %v4086
      %v4088 = vsel %vm211, %v4055, 0.0
      %v4089 = vadd.f32 %v4087, %v4088
      %v4090 = vsel %vm211, %v4056, 0.0
      %v4091 = vadd.f32 %v4089, %v4090
      %v4092 = vsel %vm211, %v4057, 0.0
      %v4093 = vadd.f32 %v4091, %v4092
      %v4094 = vsel %vm211, %v4058, 0.0
      %v4095 = vadd.f32 %v4093, %v4094
      %v4096 = vsel %vm211, %v4059, 0.0
      %v4097 = vadd.f32 %v4095, %v4096
      %v4098 = vsel %vm211, %v4060, 0.0
      %v4099 = vadd.f32 %v4097, %v4098
      %v4100 = vsel %vm211, %v4061, 0.0
      %v4101 = vadd.f32 %v4099, %v4100
      %v4102 = vsel %vm211, %v4062, 0.0
      %v4103 = vadd.f32 %v4101, %v4102
      %v4104 = vsel %vm211, %v4063, 0.0
      %v4105 = vadd.f32 %v4103, %v4104
      %v4106 = vsel %vm211, %v4064, 0.0
      %v4107 = vadd.f32 %v4105, %v4106
      %v4108 = vsel %vm211, %v4065, 0.0
      %v4109 = vadd.f32 %v4107, %v4108
      %v4110 = vsel %vm211, %v4066, 0.0
      %v4111 = vadd.f32 %v4109, %v4110
      %v4112 = vsel %vm211, %v4067, 0.0
      %v4113 = vadd.f32 %v4111, %v4112
      %v4114 = vsel %vm211, %v4068, 0.0
      %v4115 = vadd.f32 %v4113, %v4114
      %v4116 = vsel %vm211, %v4069, 0.0
      %v4117 = vadd.f32 %v4115, %v4116
      %v4118 = vsel %vm211, %v4070, 0.0
      %v4119 = vadd.f32 %v4117, %v4118
      %v4120 = vsel %vm211, %v4071, 0.0
      %v4121 = vadd.f32 %v4119, %v4120
      %v4122 = vsel %vm211, %v4072, 0.0
      %v4123 = vadd.f32 %v4121, %v4122
      %v4124 = vsel %vm211, %v4073, 0.0
      %v4125 = vadd.f32 %v4123, %v4124
      %v4126 = vsel %vm211, %v4074, 0.0
      %v4127 = vadd.f32 %v4125, %v4126
      %v4128 = vsel %vm211, %v4075, 0.0
      %v4129 = vadd.f32 %v4127, %v4128
      %v4130 = vsel %vm211, %v4076, 0.0
      %v4131 = vadd.f32 %v4129, %v4130
      %v4132 = vsel %vm211, %v4077, 0.0
      %v4133 = vadd.f32 %v4131, %v4132
      %v4134 = vsel %vm211, %v4078, 0.0
      %v4135 = vadd.f32 %v4133, %v4134
      %v4136 = vsel %vm211, %v4079, 0.0
      %v4137 = vadd.f32 %v4135, %v4136
      %v4138 = vsel %vm211, %v4080, 0.0
      %v4139 = vadd.f32 %v4137, %v4138
      %v4140 = vsel %vm211, %v4081, 0.0
      %v4141 = vadd.f32 %v4139, %v4140
      %v4142 = vsel %vm211, %v4082, 0.0
      %v4143 = vadd.f32 %v4141, %v4142
      %v4144 = vsel %vm211, %v4083, 0.0
      %v4145 = vadd.f32 %v4143, %v4144
      %v4146 = vsel %vm211, %v4084, 0.0
      %v4147 = vadd.f32 %v4145, %v4146
      %v4148 = vrot.slane %v4147, 4
      %v4149 = vadd.f32 %v4147, %v4148
      %v4150 = vrot.slane %v4149, 2
      %v4151 = vadd.f32 %v4149, %v4150
      %v4152 = vrot.slane %v4151, 1
      %v4153 = vadd.f32 %v4151, %v4152
      %v4154 = vmul.f32 %v4052, 0.00390625
      %v4155 = vmul.f32 %v4153, 0.00390625
      %v4156 = vmul.f32 %v4154, %v4154
      %v4157 = vsub.f32 %v4155, %v4156
      %v4158 = vmax.f32 %v4157, 0.0
      %v4159 = vadd.f32 %v4158, 1e-05
      %v4160 = vrsqrt.pop %v4159
      %v4161 = vmul.f32 %v2248, %v4160
      %v4162 = vmul.f32 %v4154, %v4161
      %v4163 = vsub.f32 %v2249, %v4162
      %v4164 = vlaneseq
      %v4165 = vshrl.u32 %v4164, 7
      %v4166 = vsub.s32 0, %v4165
      %v4167 = vrot.slane %v4161, %v4166
      %v4168 = vmul.f32 %v3826, %v4167
      %v4169 = vmul.f32 %v3831, %v4167
      %v4170 = vmul.f32 %v3836, %v4167
      %v4171 = vmul.f32 %v3841, %v4167
      %v4172 = vmul.f32 %v3846, %v4167
      %v4173 = vmul.f32 %v3851, %v4167
      %v4174 = vmul.f32 %v3856, %v4167
      %v4175 = vmul.f32 %v3861, %v4167
      %v4176 = vmul.f32 %v3866, %v4167
      %v4177 = vmul.f32 %v3871, %v4167
      %v4178 = vmul.f32 %v3876, %v4167
      %v4179 = vmul.f32 %v3881, %v4167
      %v4180 = vmul.f32 %v3886, %v4167
      %v4181 = vmul.f32 %v3891, %v4167
      %v4182 = vmul.f32 %v3896, %v4167
      %v4183 = vmul.f32 %v3901, %v4167
      %v4184 = vmul.f32 %v3906, %v4167
      %v4185 = vmul.f32 %v3911, %v4167
      %v4186 = vmul.f32 %v3916, %v4167
      %v4187 = vmul.f32 %v3921, %v4167
      %v4188 = vmul.f32 %v3926, %v4167
      %v4189 = vmul.f32 %v3931, %v4167
      %v4190 = vmul.f32 %v3936, %v4167
      %v4191 = vmul.f32 %v3941, %v4167
      %v4192 = vmul.f32 %v3946, %v4167
      %v4193 = vmul.f32 %v3951, %v4167
      %v4194 = vmul.f32 %v3956, %v4167
      %v4195 = vmul.f32 %v3961, %v4167
      %v4196 = vmul.f32 %v3966, %v4167
      %v4197 = vmul.f32 %v3971, %v4167
      %v4198 = vmul.f32 %v3976, %v4167
      %v4199 = vmul.f32 %v3981, %v4167
      %v4200 = vlaneseq
      %v4201 = vshrl.u32 %v4200, 7
      %v4202 = vsub.s32 0, %v4201
      %v4203 = vrot.slane %v4163, %v4202
      %v4204 = vadd.f32 %v4168, %v4203
      %v4205 = vadd.f32 %v4169, %v4203
      %v4206 = vadd.f32 %v4170, %v4203
      %v4207 = vadd.f32 %v4171, %v4203
      %v4208 = vadd.f32 %v4172, %v4203
      %v4209 = vadd.f32 %v4173, %v4203
      %v4210 = vadd.f32 %v4174, %v4203
      %v4211 = vadd.f32 %v4175, %v4203
      %v4212 = vadd.f32 %v4176, %v4203
      %v4213 = vadd.f32 %v4177, %v4203
      %v4214 = vadd.f32 %v4178, %v4203
      %v4215 = vadd.f32 %v4179, %v4203
      %v4216 = vadd.f32 %v4180, %v4203
      %v4217 = vadd.f32 %v4181, %v4203
      %v4218 = vadd.f32 %v4182, %v4203
      %v4219 = vadd.f32 %v4183, %v4203
      %v4220 = vadd.f32 %v4184, %v4203
      %v4221 = vadd.f32 %v4185, %v4203
      %v4222 = vadd.f32 %v4186, %v4203
      %v4223 = vadd.f32 %v4187, %v4203
      %v4224 = vadd.f32 %v4188, %v4203
      %v4225 = vadd.f32 %v4189, %v4203
      %v4226 = vadd.f32 %v4190, %v4203
      %v4227 = vadd.f32 %v4191, %v4203
      %v4228 = vadd.f32 %v4192, %v4203
      %v4229 = vadd.f32 %v4193, %v4203
      %v4230 = vadd.f32 %v4194, %v4203
      %v4231 = vadd.f32 %v4195, %v4203
      %v4232 = vadd.f32 %v4196, %v4203
      %v4233 = vadd.f32 %v4197, %v4203
      %v4234 = vadd.f32 %v4198, %v4203
      %v4235 = vadd.f32 %v4199, %v4203
      %v4236 = vadd.f32 %v4204, %v171
      %v4237 = vadd.f32 %v4205, %v172
      %v4238 = vadd.f32 %v4206, %v173
      %v4239 = vadd.f32 %v4207, %v174
      %v4240 = vadd.f32 %v4208, %v175
      %v4241 = vadd.f32 %v4209, %v176
      %v4242 = vadd.f32 %v4210, %v177
      %v4243 = vadd.f32 %v4211, %v178
      %v4244 = vadd.f32 %v4212, %v179
      %v4245 = vadd.f32 %v4213, %v180
      %v4246 = vadd.f32 %v4214, %v181
      %v4247 = vadd.f32 %v4215, %v182
      %v4248 = vadd.f32 %v4216, %v183
      %v4249 = vadd.f32 %v4217, %v184
      %v4250 = vadd.f32 %v4218, %v185
      %v4251 = vadd.f32 %v4219, %v186
      %v4252 = vadd.f32 %v4220, %v187
      %v4253 = vadd.f32 %v4221, %v188
      %v4254 = vadd.f32 %v4222, %v189
      %v4255 = vadd.f32 %v4223, %v190
      %v4256 = vadd.f32 %v4224, %v191
      %v4257 = vadd.f32 %v4225, %v192
      %v4258 = vadd.f32 %v4226, %v193
      %v4259 = vadd.f32 %v4227, %v194
      %v4260 = vadd.f32 %v4228, %v195
      %v4261 = vadd.f32 %v4229, %v196
      %v4262 = vadd.f32 %v4230, %v197
      %v4263 = vadd.f32 %v4231, %v198
      %v4264 = vadd.f32 %v4232, %v199
      %v4265 = vadd.f32 %v4233, %v200
      %v4266 = vadd.f32 %v4234, %v201
      %v4267 = vadd.f32 %v4235, %v202
      %v4268 = vcombine.low %v4236, %v4240
      %v4269 = vcombine.high %v4236, %v4240
      %v4271 = vunpack.c.l.s4 1983009808
      %v4272 = vunpack.c.0.s8 %v4271
      %v4273 = vlaneseq
      %v4274 = vshrl.u32 %v4273, 7
      %v4275 = vsub.s32 %v4272, %v4274
      %v4276 = vrot.slane %v4268, %v4275
      %v4278 = vunpack.c.l.s4 1983009808
      %v4279 = vunpack.c.0.s8 %v4278
      %v4280 = vlaneseq
      %v4281 = vshrl.u32 %v4280, 7
      %v4282 = vsub.s32 %v4279, %v4281
      %v4283 = vrot.slane %v4269, %v4282
      %v4284 = vcombine.low %v4238, %v4242
      %v4285 = vcombine.high %v4238, %v4242
      %v4287 = vunpack.c.l.s4 1983009808
      %v4288 = vunpack.c.0.s8 %v4287
      %v4289 = vlaneseq
      %v4290 = vshrl.u32 %v4289, 7
      %v4291 = vsub.s32 %v4288, %v4290
      %v4292 = vrot.slane %v4284, %v4291
      %v4294 = vunpack.c.l.s4 1983009808
      %v4295 = vunpack.c.0.s8 %v4294
      %v4296 = vlaneseq
      %v4297 = vshrl.u32 %v4296, 7
      %v4298 = vsub.s32 %v4295, %v4297
      %v4299 = vrot.slane %v4285, %v4298
      %v4300 = vcombine.low %v4244, %v4248
      %v4301 = vcombine.high %v4244, %v4248
      %v4303 = vunpack.c.l.s4 1983009808
      %v4304 = vunpack.c.0.s8 %v4303
      %v4305 = vlaneseq
      %v4306 = vshrl.u32 %v4305, 7
      %v4307 = vsub.s32 %v4304, %v4306
      %v4308 = vrot.slane %v4300, %v4307
      %v4310 = vunpack.c.l.s4 1983009808
      %v4311 = vunpack.c.0.s8 %v4310
      %v4312 = vlaneseq
      %v4313 = vshrl.u32 %v4312, 7
      %v4314 = vsub.s32 %v4311, %v4313
      %v4315 = vrot.slane %v4301, %v4314
      %v4316 = vcombine.low %v4246, %v4250
      %v4317 = vcombine.high %v4246, %v4250
      %v4319 = vunpack.c.l.s4 1983009808
      %v4320 = vunpack.c.0.s8 %v4319
      %v4321 = vlaneseq
      %v4322 = vshrl.u32 %v4321, 7
      %v4323 = vsub.s32 %v4320, %v4322
      %v4324 = vrot.slane %v4316, %v4323
      %v4326 = vunpack.c.l.s4 1983009808
      %v4327 = vunpack.c.0.s8 %v4326
      %v4328 = vlaneseq
      %v4329 = vshrl.u32 %v4328, 7
      %v4330 = vsub.s32 %v4327, %v4329
      %v4331 = vrot.slane %v4317, %v4330
      %v4332 = vcombine.low %v4276, %v4292
      %v4333 = vcombine.high %v4276, %v4292
      %v4335 = vunpack.c.l.s4 1934713408
      %v4336 = vunpack.c.0.s8 %v4335
      %v4337 = vlaneseq
      %v4338 = vshrl.u32 %v4337, 7
      %v4339 = vsub.s32 %v4336, %v4338
      %v4340 = vrot.slane %v4332, %v4339
      %v4342 = vunpack.c.l.s4 1934713408
      %v4343 = vunpack.c.0.s8 %v4342
      %v4344 = vlaneseq
      %v4345 = vshrl.u32 %v4344, 7
      %v4346 = vsub.s32 %v4343, %v4345
      %v4347 = vrot.slane %v4333, %v4346
      %v4348 = vcombine.low %v4283, %v4299
      %v4349 = vcombine.high %v4283, %v4299
      %v4351 = vunpack.c.l.s4 1934713408
      %v4352 = vunpack.c.0.s8 %v4351
      %v4353 = vlaneseq
      %v4354 = vshrl.u32 %v4353, 7
      %v4355 = vsub.s32 %v4352, %v4354
      %v4356 = vrot.slane %v4348, %v4355
      %v4358 = vunpack.c.l.s4 1934713408
      %v4359 = vunpack.c.0.s8 %v4358
      %v4360 = vlaneseq
      %v4361 = vshrl.u32 %v4360, 7
      %v4362 = vsub.s32 %v4359, %v4361
      %v4363 = vrot.slane %v4349, %v4362
      %v4364 = vcombine.low %v4308, %v4324
      %v4365 = vcombine.high %v4308, %v4324
      %v4367 = vunpack.c.l.s4 1934713408
      %v4368 = vunpack.c.0.s8 %v4367
      %v4369 = vlaneseq
      %v4370 = vshrl.u32 %v4369, 7
      %v4371 = vsub.s32 %v4368, %v4370
      %v4372 = vrot.slane %v4364, %v4371
      %v4374 = vunpack.c.l.s4 1934713408
      %v4375 = vunpack.c.0.s8 %v4374
      %v4376 = vlaneseq
      %v4377 = vshrl.u32 %v4376, 7
      %v4378 = vsub.s32 %v4375, %v4377
      %v4379 = vrot.slane %v4365, %v4378
      %v4380 = vcombine.low %v4315, %v4331
      %v4381 = vcombine.high %v4315, %v4331
      %v4383 = vunpack.c.l.s4 1934713408
      %v4384 = vunpack.c.0.s8 %v4383
      %v4385 = vlaneseq
      %v4386 = vshrl.u32 %v4385, 7
      %v4387 = vsub.s32 %v4384, %v4386
      %v4388 = vrot.slane %v4380, %v4387
      %v4390 = vunpack.c.l.s4 1934713408
      %v4391 = vunpack.c.0.s8 %v4390
      %v4392 = vlaneseq
      %v4393 = vshrl.u32 %v4392, 7
      %v4394 = vsub.s32 %v4391, %v4393
      %v4395 = vrot.slane %v4381, %v4394
      %v4396 = vcombine.low %v4340, %v4372
      %v4397 = vcombine.high %v4340, %v4372
      %v4398 = vcombine.low %v4347, %v4379
      %v4399 = vcombine.high %v4347, %v4379
      %v4400 = vcombine.low %v4356, %v4388
      %v4401 = vcombine.high %v4356, %v4388
      %v4402 = vcombine.low %v4363, %v4395
      %v4403 = vcombine.high %v4363, %v4395
      %v4404 = vcombine.low %v4252, %v4256
      %v4405 = vcombine.high %v4252, %v4256
      %v4407 = vunpack.c.l.s4 1983009808
      %v4408 = vunpack.c.0.s8 %v4407
      %v4409 = vlaneseq
      %v4410 = vshrl.u32 %v4409, 7
      %v4411 = vsub.s32 %v4408, %v4410
      %v4412 = vrot.slane %v4404, %v4411
      %v4414 = vunpack.c.l.s4 1983009808
      %v4415 = vunpack.c.0.s8 %v4414
      %v4416 = vlaneseq
      %v4417 = vshrl.u32 %v4416, 7
      %v4418 = vsub.s32 %v4415, %v4417
      %v4419 = vrot.slane %v4405, %v4418
      %v4420 = vcombine.low %v4254, %v4258
      %v4421 = vcombine.high %v4254, %v4258
      %v4423 = vunpack.c.l.s4 1983009808
      %v4424 = vunpack.c.0.s8 %v4423
      %v4425 = vlaneseq
      %v4426 = vshrl.u32 %v4425, 7
      %v4427 = vsub.s32 %v4424, %v4426
      %v4428 = vrot.slane %v4420, %v4427
      %v4430 = vunpack.c.l.s4 1983009808
      %v4431 = vunpack.c.0.s8 %v4430
      %v4432 = vlaneseq
      %v4433 = vshrl.u32 %v4432, 7
      %v4434 = vsub.s32 %v4431, %v4433
      %v4435 = vrot.slane %v4421, %v4434
      %v4436 = vcombine.low %v4260, %v4264
      %v4437 = vcombine.high %v4260, %v4264
      %v4439 = vunpack.c.l.s4 1983009808
      %v4440 = vunpack.c.0.s8 %v4439
      %v4441 = vlaneseq
      %v4442 = vshrl.u32 %v4441, 7
      %v4443 = vsub.s32 %v4440, %v4442
      %v4444 = vrot.slane %v4436, %v4443
      %v4446 = vunpack.c.l.s4 1983009808
      %v4447 = vunpack.c.0.s8 %v4446
      %v4448 = vlaneseq
      %v4449 = vshrl.u32 %v4448, 7
      %v4450 = vsub.s32 %v4447, %v4449
      %v4451 = vrot.slane %v4437, %v4450
      %v4452 = vcombine.low %v4262, %v4266
      %v4453 = vcombine.high %v4262, %v4266
      %v4455 = vunpack.c.l.s4 1983009808
      %v4456 = vunpack.c.0.s8 %v4455
      %v4457 = vlaneseq
      %v4458 = vshrl.u32 %v4457, 7
      %v4459 = vsub.s32 %v4456, %v4458
      %v4460 = vrot.slane %v4452, %v4459
      %v4462 = vunpack.c.l.s4 1983009808
      %v4463 = vunpack.c.0.s8 %v4462
      %v4464 = vlaneseq
      %v4465 = vshrl.u32 %v4464, 7
      %v4466 = vsub.s32 %v4463, %v4465
      %v4467 = vrot.slane %v4453, %v4466
      %v4468 = vcombine.low %v4412, %v4428
      %v4469 = vcombine.high %v4412, %v4428
      %v4471 = vunpack.c.l.s4 1934713408
      %v4472 = vunpack.c.0.s8 %v4471
      %v4473 = vlaneseq
      %v4474 = vshrl.u32 %v4473, 7
      %v4475 = vsub.s32 %v4472, %v4474
      %v4476 = vrot.slane %v4468, %v4475
      %v4478 = vunpack.c.l.s4 1934713408
      %v4479 = vunpack.c.0.s8 %v4478
      %v4480 = vlaneseq
      %v4481 = vshrl.u32 %v4480, 7
      %v4482 = vsub.s32 %v4479, %v4481
      %v4483 = vrot.slane %v4469, %v4482
      %v4484 = vcombine.low %v4419, %v4435
      %v4485 = vcombine.high %v4419, %v4435
      %v4487 = vunpack.c.l.s4 1934713408
      %v4488 = vunpack.c.0.s8 %v4487
      %v4489 = vlaneseq
      %v4490 = vshrl.u32 %v4489, 7
      %v4491 = vsub.s32 %v4488, %v4490
      %v4492 = vrot.slane %v4484, %v4491
      %v4494 = vunpack.c.l.s4 1934713408
      %v4495 = vunpack.c.0.s8 %v4494
      %v4496 = vlaneseq
      %v4497 = vshrl.u32 %v4496, 7
      %v4498 = vsub.s32 %v4495, %v4497
      %v4499 = vrot.slane %v4485, %v4498
      %v4500 = vcombine.low %v4444, %v4460
      %v4501 = vcombine.high %v4444, %v4460
      %v4503 = vunpack.c.l.s4 1934713408
      %v4504 = vunpack.c.0.s8 %v4503
      %v4505 = vlaneseq
      %v4506 = vshrl.u32 %v4505, 7
      %v4507 = vsub.s32 %v4504, %v4506
      %v4508 = vrot.slane %v4500, %v4507
      %v4510 = vunpack.c.l.s4 1934713408
      %v4511 = vunpack.c.0.s8 %v4510
      %v4512 = vlaneseq
      %v4513 = vshrl.u32 %v4512, 7
      %v4514 = vsub.s32 %v4511, %v4513
      %v4515 = vrot.slane %v4501, %v4514
      %v4516 = vcombine.low %v4451, %v4467
      %v4517 = vcombine.high %v4451, %v4467
      %v4519 = vunpack.c.l.s4 1934713408
      %v4520 = vunpack.c.0.s8 %v4519
      %v4521 = vlaneseq
      %v4522 = vshrl.u32 %v4521, 7
      %v4523 = vsub.s32 %v4520, %v4522
      %v4524 = vrot.slane %v4516, %v4523
      %v4526 = vunpack.c.l.s4 1934713408
      %v4527 = vunpack.c.0.s8 %v4526
      %v4528 = vlaneseq
      %v4529 = vshrl.u32 %v4528, 7
      %v4530 = vsub.s32 %v4527, %v4529
      %v4531 = vrot.slane %v4517, %v4530
      %v4532 = vcombine.low %v4476, %v4508
      %v4533 = vcombine.high %v4476, %v4508
      %v4534 = vcombine.low %v4483, %v4515
      %v4535 = vcombine.high %v4483, %v4515
      %v4536 = vcombine.low %v4492, %v4524
      %v4537 = vcombine.high %v4492, %v4524
      %v4538 = vcombine.low %v4499, %v4531
      %v4539 = vcombine.high %v4499, %v4531
      %v4540 = vcombine.low %v4237, %v4241
      %v4541 = vcombine.high %v4237, %v4241
      %v4543 = vunpack.c.l.s4 1983009808
      %v4544 = vunpack.c.0.s8 %v4543
      %v4545 = vlaneseq
      %v4546 = vshrl.u32 %v4545, 7
      %v4547 = vsub.s32 %v4544, %v4546
      %v4548 = vrot.slane %v4540, %v4547
      %v4550 = vunpack.c.l.s4 1983009808
      %v4551 = vunpack.c.0.s8 %v4550
      %v4552 = vlaneseq
      %v4553 = vshrl.u32 %v4552, 7
      %v4554 = vsub.s32 %v4551, %v4553
      %v4555 = vrot.slane %v4541, %v4554
      %v4556 = vcombine.low %v4239, %v4243
      %v4557 = vcombine.high %v4239, %v4243
      %v4559 = vunpack.c.l.s4 1983009808
      %v4560 = vunpack.c.0.s8 %v4559
      %v4561 = vlaneseq
      %v4562 = vshrl.u32 %v4561, 7
      %v4563 = vsub.s32 %v4560, %v4562
      %v4564 = vrot.slane %v4556, %v4563
      %v4566 = vunpack.c.l.s4 1983009808
      %v4567 = vunpack.c.0.s8 %v4566
      %v4568 = vlaneseq
      %v4569 = vshrl.u32 %v4568, 7
      %v4570 = vsub.s32 %v4567, %v4569
      %v4571 = vrot.slane %v4557, %v4570
      %v4572 = vcombine.low %v4245, %v4249
      %v4573 = vcombine.high %v4245, %v4249
      %v4575 = vunpack.c.l.s4 1983009808
      %v4576 = vunpack.c.0.s8 %v4575
      %v4577 = vlaneseq
      %v4578 = vshrl.u32 %v4577, 7
      %v4579 = vsub.s32 %v4576, %v4578
      %v4580 = vrot.slane %v4572, %v4579
      %v4582 = vunpack.c.l.s4 1983009808
      %v4583 = vunpack.c.0.s8 %v4582
      %v4584 = vlaneseq
      %v4585 = vshrl.u32 %v4584, 7
      %v4586 = vsub.s32 %v4583, %v4585
      %v4587 = vrot.slane %v4573, %v4586
      %v4588 = vcombine.low %v4247, %v4251
      %v4589 = vcombine.high %v4247, %v4251
      %v4591 = vunpack.c.l.s4 1983009808
      %v4592 = vunpack.c.0.s8 %v4591
      %v4593 = vlaneseq
      %v4594 = vshrl.u32 %v4593, 7
      %v4595 = vsub.s32 %v4592, %v4594
      %v4596 = vrot.slane %v4588, %v4595
      %v4598 = vunpack.c.l.s4 1983009808
      %v4599 = vunpack.c.0.s8 %v4598
      %v4600 = vlaneseq
      %v4601 = vshrl.u32 %v4600, 7
      %v4602 = vsub.s32 %v4599, %v4601
      %v4603 = vrot.slane %v4589, %v4602
      %v4604 = vcombine.low %v4548, %v4564
      %v4605 = vcombine.high %v4548, %v4564
      %v4607 = vunpack.c.l.s4 1934713408
      %v4608 = vunpack.c.0.s8 %v4607
      %v4609 = vlaneseq
      %v4610 = vshrl.u32 %v4609, 7
      %v4611 = vsub.s32 %v4608, %v4610
      %v4612 = vrot.slane %v4604, %v4611
      %v4614 = vunpack.c.l.s4 1934713408
      %v4615 = vunpack.c.0.s8 %v4614
      %v4616 = vlaneseq
      %v4617 = vshrl.u32 %v4616, 7
      %v4618 = vsub.s32 %v4615, %v4617
      %v4619 = vrot.slane %v4605, %v4618
      %v4620 = vcombine.low %v4555, %v4571
      %v4621 = vcombine.high %v4555, %v4571
      %v4623 = vunpack.c.l.s4 1934713408
      %v4624 = vunpack.c.0.s8 %v4623
      %v4625 = vlaneseq
      %v4626 = vshrl.u32 %v4625, 7
      %v4627 = vsub.s32 %v4624, %v4626
      %v4628 = vrot.slane %v4620, %v4627
      %v4630 = vunpack.c.l.s4 1934713408
      %v4631 = vunpack.c.0.s8 %v4630
      %v4632 = vlaneseq
      %v4633 = vshrl.u32 %v4632, 7
      %v4634 = vsub.s32 %v4631, %v4633
      %v4635 = vrot.slane %v4621, %v4634
      %v4636 = vcombine.low %v4580, %v4596
      %v4637 = vcombine.high %v4580, %v4596
      %v4639 = vunpack.c.l.s4 1934713408
      %v4640 = vunpack.c.0.s8 %v4639
      %v4641 = vlaneseq
      %v4642 = vshrl.u32 %v4641, 7
      %v4643 = vsub.s32 %v4640, %v4642
      %v4644 = vrot.slane %v4636, %v4643
      %v4646 = vunpack.c.l.s4 1934713408
      %v4647 = vunpack.c.0.s8 %v4646
      %v4648 = vlaneseq
      %v4649 = vshrl.u32 %v4648, 7
      %v4650 = vsub.s32 %v4647, %v4649
      %v4651 = vrot.slane %v4637, %v4650
      %v4652 = vcombine.low %v4587, %v4603
      %v4653 = vcombine.high %v4587, %v4603
      %v4655 = vunpack.c.l.s4 1934713408
      %v4656 = vunpack.c.0.s8 %v4655
      %v4657 = vlaneseq
      %v4658 = vshrl.u32 %v4657, 7
      %v4659 = vsub.s32 %v4656, %v4658
      %v4660 = vrot.slane %v4652, %v4659
      %v4662 = vunpack.c.l.s4 1934713408
      %v4663 = vunpack.c.0.s8 %v4662
      %v4664 = vlaneseq
      %v4665 = vshrl.u32 %v4664, 7
      %v4666 = vsub.s32 %v4663, %v4665
      %v4667 = vrot.slane %v4653, %v4666
      %v4668 = vcombine.low %v4612, %v4644
      %v4669 = vcombine.high %v4612, %v4644
      %v4670 = vcombine.low %v4619, %v4651
      %v4671 = vcombine.high %v4619, %v4651
      %v4672 = vcombine.low %v4628, %v4660
      %v4673 = vcombine.high %v4628, %v4660
      %v4674 = vcombine.low %v4635, %v4667
      %v4675 = vcombine.high %v4635, %v4667
      %v4676 = vcombine.low %v4253, %v4257
      %v4677 = vcombine.high %v4253, %v4257
      %v4679 = vunpack.c.l.s4 1983009808
      %v4680 = vunpack.c.0.s8 %v4679
      %v4681 = vlaneseq
      %v4682 = vshrl.u32 %v4681, 7
      %v4683 = vsub.s32 %v4680, %v4682
      %v4684 = vrot.slane %v4676, %v4683
      %v4686 = vunpack.c.l.s4 1983009808
      %v4687 = vunpack.c.0.s8 %v4686
      %v4688 = vlaneseq
      %v4689 = vshrl.u32 %v4688, 7
      %v4690 = vsub.s32 %v4687, %v4689
      %v4691 = vrot.slane %v4677, %v4690
      %v4692 = vcombine.low %v4255, %v4259
      %v4693 = vcombine.high %v4255, %v4259
      %v4695 = vunpack.c.l.s4 1983009808
      %v4696 = vunpack.c.0.s8 %v4695
      %v4697 = vlaneseq
      %v4698 = vshrl.u32 %v4697, 7
      %v4699 = vsub.s32 %v4696, %v4698
      %v4700 = vrot.slane %v4692, %v4699
      %v4702 = vunpack.c.l.s4 1983009808
      %v4703 = vunpack.c.0.s8 %v4702
      %v4704 = vlaneseq
      %v4705 = vshrl.u32 %v4704, 7
      %v4706 = vsub.s32 %v4703, %v4705
      %v4707 = vrot.slane %v4693, %v4706
      %v4708 = vcombine.low %v4261, %v4265
      %v4709 = vcombine.high %v4261, %v4265
      %v4711 = vunpack.c.l.s4 1983009808
      %v4712 = vunpack.c.0.s8 %v4711
      %v4713 = vlaneseq
      %v4714 = vshrl.u32 %v4713, 7
      %v4715 = vsub.s32 %v4712, %v4714
      %v4716 = vrot.slane %v4708, %v4715
      %v4718 = vunpack.c.l.s4 1983009808
      %v4719 = vunpack.c.0.s8 %v4718
      %v4720 = vlaneseq
      %v4721 = vshrl.u32 %v4720, 7
      %v4722 = vsub.s32 %v4719, %v4721
      %v4723 = vrot.slane %v4709, %v4722
      %v4724 = vcombine.low %v4263, %v4267
      %v4725 = vcombine.high %v4263, %v4267
      %v4727 = vunpack.c.l.s4 1983009808
      %v4728 = vunpack.c.0.s8 %v4727
      %v4729 = vlaneseq
      %v4730 = vshrl.u32 %v4729, 7
      %v4731 = vsub.s32 %v4728, %v4730
      %v4732 = vrot.slane %v4724, %v4731
      %v4734 = vunpack.c.l.s4 1983009808
      %v4735 = vunpack.c.0.s8 %v4734
      %v4736 = vlaneseq
      %v4737 = vshrl.u32 %v4736, 7
      %v4738 = vsub.s32 %v4735, %v4737
      %v4739 = vrot.slane %v4725, %v4738
      %v4740 = vcombine.low %v4684, %v4700
      %v4741 = vcombine.high %v4684, %v4700
      %v4743 = vunpack.c.l.s4 1934713408
      %v4744 = vunpack.c.0.s8 %v4743
      %v4745 = vlaneseq
      %v4746 = vshrl.u32 %v4745, 7
      %v4747 = vsub.s32 %v4744, %v4746
      %v4748 = vrot.slane %v4740, %v4747
      %v4750 = vunpack.c.l.s4 1934713408
      %v4751 = vunpack.c.0.s8 %v4750
      %v4752 = vlaneseq
      %v4753 = vshrl.u32 %v4752, 7
      %v4754 = vsub.s32 %v4751, %v4753
      %v4755 = vrot.slane %v4741, %v4754
      %v4756 = vcombine.low %v4691, %v4707
      %v4757 = vcombine.high %v4691, %v4707
      %v4759 = vunpack.c.l.s4 1934713408
      %v4760 = vunpack.c.0.s8 %v4759
      %v4761 = vlaneseq
      %v4762 = vshrl.u32 %v4761, 7
      %v4763 = vsub.s32 %v4760, %v4762
      %v4764 = vrot.slane %v4756, %v4763
      %v4766 = vunpack.c.l.s4 1934713408
      %v4767 = vunpack.c.0.s8 %v4766
      %v4768 = vlaneseq
      %v4769 = vshrl.u32 %v4768, 7
      %v4770 = vsub.s32 %v4767, %v4769
      %v4771 = vrot.slane %v4757, %v4770
      %v4772 = vcombine.low %v4716, %v4732
      %v4773 = vcombine.high %v4716, %v4732
      %v4775 = vunpack.c.l.s4 1934713408
      %v4776 = vunpack.c.0.s8 %v4775
      %v4777 = vlaneseq
      %v4778 = vshrl.u32 %v4777, 7
      %v4779 = vsub.s32 %v4776, %v4778
      %v4780 = vrot.slane %v4772, %v4779
      %v4782 = vunpack.c.l.s4 1934713408
      %v4783 = vunpack.c.0.s8 %v4782
      %v4784 = vlaneseq
      %v4785 = vshrl.u32 %v4784, 7
      %v4786 = vsub.s32 %v4783, %v4785
      %v4787 = vrot.slane %v4773, %v4786
      %v4788 = vcombine.low %v4723, %v4739
      %v4789 = vcombine.high %v4723, %v4739
      %v4791 = vunpack.c.l.s4 1934713408
      %v4792 = vunpack.c.0.s8 %v4791
      %v4793 = vlaneseq
      %v4794 = vshrl.u32 %v4793, 7
      %v4795 = vsub.s32 %v4792, %v4794
      %v4796 = vrot.slane %v4788, %v4795
      %v4798 = vunpack.c.l.s4 1934713408
      %v4799 = vunpack.c.0.s8 %v4798
      %v4800 = vlaneseq
      %v4801 = vshrl.u32 %v4800, 7
      %v4802 = vsub.s32 %v4799, %v4801
      %v4803 = vrot.slane %v4789, %v4802
      %v4804 = vcombine.low %v4748, %v4780
      %v4805 = vcombine.high %v4748, %v4780
      %v4806 = vcombine.low %v4755, %v4787
      %v4807 = vcombine.high %v4755, %v4787
      %v4808 = vcombine.low %v4764, %v4796
      %v4809 = vcombine.high %v4764, %v4796
      %v4810 = vcombine.low %v4771, %v4803
      %v4811 = vcombine.high %v4771, %v4803
      %4814 = vrot.lane.b32.xlu0 %v4397, 4
      %v4815 = vpop.permute.xlu0 %4814
      %4816 = vrot.lane.b32.xlu0 %v4533, 4
      %v4817 = vpop.permute.xlu0 %4816
      %4822 = vrot.lane.b32.xlu0 %v4398, 8
      %v4823 = vpop.permute.xlu0 %4822
      %4824 = vrot.lane.b32.xlu0 %v4534, 8
      %v4825 = vpop.permute.xlu0 %4824
      %4830 = vrot.lane.b32.xlu0 %v4399, 12
      %v4831 = vpop.permute.xlu0 %4830
      %4832 = vrot.lane.b32.xlu0 %v4535, 12
      %v4833 = vpop.permute.xlu0 %4832
      %4838 = vrot.lane.b32.xlu0 %v4400, 16
      %v4839 = vpop.permute.xlu0 %4838
      %4840 = vrot.lane.b32.xlu0 %v4536, 16
      %v4841 = vpop.permute.xlu0 %4840
      %4846 = vrot.lane.b32.xlu0 %v4401, 20
      %v4847 = vpop.permute.xlu0 %4846
      %4848 = vrot.lane.b32.xlu0 %v4537, 20
      %v4849 = vpop.permute.xlu0 %4848
      %4854 = vrot.lane.b32.xlu0 %v4402, 24
      %v4855 = vpop.permute.xlu0 %4854
      %4856 = vrot.lane.b32.xlu0 %v4538, 24
      %v4857 = vpop.permute.xlu0 %4856
      %4862 = vrot.lane.b32.xlu0 %v4403, 28
      %v4863 = vpop.permute.xlu0 %4862
      %4864 = vrot.lane.b32.xlu0 %v4539, 28
      %v4865 = vpop.permute.xlu0 %4864
      %4870 = vrot.lane.b32.xlu0 %v4668, 32
      %v4871 = vpop.permute.xlu0 %4870
      %4872 = vrot.lane.b32.xlu0 %v4804, 32
      %v4873 = vpop.permute.xlu0 %4872
      %4878 = vrot.lane.b32.xlu0 %v4669, 36
      %v4879 = vpop.permute.xlu0 %4878
      %4880 = vrot.lane.b32.xlu0 %v4805, 36
      %v4881 = vpop.permute.xlu0 %4880
      %4886 = vrot.lane.b32.xlu0 %v4670, 40
      %v4887 = vpop.permute.xlu0 %4886
      %4888 = vrot.lane.b32.xlu0 %v4806, 40
      %v4889 = vpop.permute.xlu0 %4888
      %4894 = vrot.lane.b32.xlu0 %v4671, 44
      %v4895 = vpop.permute.xlu0 %4894
      %4896 = vrot.lane.b32.xlu0 %v4807, 44
      %v4897 = vpop.permute.xlu0 %4896
      %4902 = vrot.lane.b32.xlu0 %v4672, 48
      %v4903 = vpop.permute.xlu0 %4902
      %4904 = vrot.lane.b32.xlu0 %v4808, 48
      %v4905 = vpop.permute.xlu0 %4904
      %4910 = vrot.lane.b32.xlu0 %v4673, 52
      %v4911 = vpop.permute.xlu0 %4910
      %4912 = vrot.lane.b32.xlu0 %v4809, 52
      %v4913 = vpop.permute.xlu0 %4912
      %4918 = vrot.lane.b32.xlu0 %v4674, 56
      %v4919 = vpop.permute.xlu0 %4918
      %4920 = vrot.lane.b32.xlu0 %v4810, 56
      %v4921 = vpop.permute.xlu0 %4920
      %4926 = vrot.lane.b32.xlu0 %v4675, 60
      %v4927 = vpop.permute.xlu0 %4926
      %4928 = vrot.lane.b32.xlu0 %v4811, 60
      %v4929 = vpop.permute.xlu0 %4928
      %v4932 = vsel %vm211, %v4396, %v4815
      %v4933 = vsel %vm211, %v4532, %v4817
      %vm4934 = vcmask 64512
      %v4935 = vsel %vm4934, %v4932, %v4823
      %v4936 = vsel %vm4934, %v4933, %v4825
      %vm4937 = vcmask 97280
      %v4938 = vsel %vm4937, %v4935, %v4831
      %v4939 = vsel %vm4937, %v4936, %v4833
      %vm4940 = vcmask 130048
      %v4941 = vsel %vm4940, %v4938, %v4839
      %v4942 = vsel %vm4940, %v4939, %v4841
      %vm4943 = vcmask 162816
      %v4944 = vsel %vm4943, %v4941, %v4847
      %v4945 = vsel %vm4943, %v4942, %v4849
      %vm4946 = vcmask 195584
      %v4947 = vsel %vm4946, %v4944, %v4855
      %v4948 = vsel %vm4946, %v4945, %v4857
      %vm4949 = vcmask 228352
      %v4950 = vsel %vm4949, %v4947, %v4863
      %v4951 = vsel %vm4949, %v4948, %v4865
      %vm4952 = vcmask 261120
      %v4953 = vsel %vm4952, %v4950, %v4871
      %v4954 = vsel %vm4952, %v4951, %v4873
      %v4955 = vsel %vm1632, %v4953, %v4879
      %v4956 = vsel %vm1632, %v4954, %v4881
      %vm4957 = vcmask 326656
      %v4958 = vsel %vm4957, %v4955, %v4887
      %v4959 = vsel %vm4957, %v4956, %v4889
      %vm4960 = vcmask 359424
      %v4961 = vsel %vm4960, %v4958, %v4895
      %v4962 = vsel %vm4960, %v4959, %v4897
      %vm4963 = vcmask 392192
      %v4964 = vsel %vm4963, %v4961, %v4903
      %v4965 = vsel %vm4963, %v4962, %v4905
      %vm4966 = vcmask 424960
      %v4967 = vsel %vm4966, %v4964, %v4911
      %v4968 = vsel %vm4966, %v4965, %v4913
      %vm4969 = vcmask 457728
      %v4970 = vsel %vm4969, %v4967, %v4919
      %v4971 = vsel %vm4969, %v4968, %v4921
      %vm4972 = vcmask 490496
      %v4973 = vsel %vm4972, %v4970, %v4927
      %v4974 = vsel %vm4972, %v4971, %v4929
      %vm4975 = vcmask 523264
      %4976 = vst.msk [vmem:[%s170] sm:$0xff] %vm4975, %v4973
      %4977 = vst.msk [vmem:[%s170 + $0x8] sm:$0xff] %vm4975, %v4974
      %p4978 = scmp.lt.s32.totalorder %s14, 1
      %s4979 = scalar_select %p4978, %s14, 1
      %s4980 = smul.addr %s4979, 2
      %s4981 = smul.addr %s4980, 8
      %s4982 = scalar_lea.vmem %s3, %s4981
      // Predicated region
      $region33: #{residual_block_pallas.1} parent=31 // pred_check
        %p4983 = pneg %p100
      $region34: #{residual_block_pallas.1} parent=31 // pred_check_branch
        %4985 = sbr.rel (%p4983) target = $region36
      $region35: #{residual_block_pallas.1} parent=31 // pred_region
        _
      $region36: #{residual_block_pallas.1} parent=31 // pred_fallthru
        _
    $region32: #{residual_block_pallas.1} parent=5 // pred_fallthru
      _
    %p4986 = scmp.le.s32.totalorder 2, %s9
    // Predicated region
    $region37: #{residual_block_pallas.1} parent=5 // pred_check
      %p4987 = pneg %p4986
    $region38: #{residual_block_pallas.1} parent=5 // pred_check_branch
      %4989 = sbr.rel (%p4987) target = $region40
    $region39: #{residual_block_pallas.1} parent=5 // pred_region
      %s4990 = ssub.s32 %s9, 2
      // Predicated region
      $region41: #{residual_block_pallas.1} parent=39 // pred_check
        %p4991 = pneg %p106
      $region42: #{residual_block_pallas.1} parent=39 // pred_check_branch
        %4993 = sbr.rel (%p4991) target = $region44
      $region43: #{residual_block_pallas.1} parent=39 // pred_region
        %p4994 = scmp.lt.s32.totalorder %s15, 1
        %s4995 = scalar_select %p4994, %s15, 1
        %s4996 = smul.addr %s4995, 2
        %s4997 = smul.addr %s4996, 8
        %s4998 = scalar_lea.vmem %s3, %s4997
      $region44: #{residual_block_pallas.1} parent=39 // pred_fallthru
        _
    $region40: #{residual_block_pallas.1} parent=5 // pred_fallthru
      _
  $region6: #{residual_block_pallas.1} parent=0 // loop_footer
    %s13 = sadd.s32 1, %s9
  $region7: #{residual_block_pallas.1} parent=0 // loop_footer_branch
    %8 = sbr.rel target = $region3
  $region8: #{residual_block_pallas.1} parent=0 // loop_exit
    _

</llo_original>
